<compile_context>
chip_gen: v6e
topology: v6e:2x2x1
jax: 0.10.0
libtpu: 0.0.40
codegen_flags: <defaults>
</compile_context>

<pallas_src>
import functools

import jax
import jax.numpy as jnp
from jax import lax
from jax.experimental import pallas as pl
from jax.experimental.pallas import tpu as pltpu

_VMEM = pl.BlockSpec(memory_space=pltpu.MemorySpace.VMEM)


# ----------------------------------------------------------------------------
# Fused forward kernel
# ----------------------------------------------------------------------------
def _stmcfn_kernel(
    # inputs
    x_ref, sadj_ref, fadj_ref,
    g1w1_ref, g1b1_ref, g1w2_ref, g1b2_ref,
    g2w1_ref, g2b1_ref, g2w2_ref, g2b2_ref,
    wkv_rows_ref, wq_h_ref, wu_h_ref, bu_ref,
    dw1_ref, db1_ref, dw2_ref, db2_ref,
    # outputs
    embs_ref,   # (3n, nhid2) = [emb1; emb2; emb]
    decs_ref,   # (3n, nfeat) = [H1;   H2;   H  ]
    *, heads):

    f32 = jnp.float32

    def dot(a, b):
        return jnp.dot(a, b, preferred_element_type=f32)

    x = x_ref[...]

    # ---- two 2-layer GCNs:  adj @ relu(adj @ (x @ W1) + b1) @ W2 + b2 ------
    def gcn(adj, w1, b1, w2, b2):
        h = dot(adj, dot(x, w1)) + b1
        h = jnp.maximum(h, 0.0)
        # dropout between the two graph convolutions: eval mode -> identity
        return dot(adj, dot(h, w2)) + b2

    emb1 = gcn(sadj_ref[...], g1w1_ref[...], g1b1_ref[...],
               g1w2_ref[...], g1b2_ref[...])
    emb2 = gcn(fadj_ref[...], g2w1_ref[...], g2b1_ref[...],
               g2w2_ref[...], g2b2_ref[...])

    t, e = emb1.shape          # e == nhid2

    # ---- AttentionWide(emb1, emb2) + residual emb1 --------------------------
    # K|V fused into one matmul in rows form (contract feature dims):
    #   kv_rows[h*e + j, q] = <W_k/v row (h, j), emb1[q, :]>
    kv_rows = lax.dot_general(wkv_rows_ref[...], emb1,
                              (((1,), (1,)), ((), ())),
                              preferred_element_type=f32)      # (2*heads*e, t)
    kv3 = kv_rows.reshape(2 * heads, e, t)                     # sublane-only split
    k3t = kv3[:heads]                                          # (heads, e, t)
    v3t = kv3[heads:]                                          # (heads, e, t)

    # Q from emb2 as a heads-batched matmul, landing directly in (heads, t, e)
    # layout (no lane slicing, no transposes).  The 1/e**(1/4) scaling of both
    # Q and K is applied once here as 1/sqrt(e).  Query dropout: eval -> id.
    emb2_b = jnp.broadcast_to(emb2[None, :, :], (heads, t, e))
    q3 = jnp.einsum('hte,hef->htf', emb2_b, wq_h_ref[...],
                    preferred_element_type=f32) * (1.0 / (float(e) ** 0.5))

    # scores / softmax / attention, all heads-batched, standard MXU patterns.
    s = jnp.einsum('hqd,hdk->hqk', q3, k3t, preferred_element_type=f32)
    s = s - jnp.max(s, axis=-1, keepdims=True)
    p = jnp.exp(s)
    # denominator >= 1 after max subtraction -> approx reciprocal (EUP) safe.
    p = p * pl.reciprocal(jnp.sum(p, axis=-1, keepdims=True), approx=True)
    o3 = jnp.einsum('hqk,hdk->hqd', p, v3t, preferred_element_type=f32)

    # unify heads: per-head (e -> nhid2) matmul, then sum over heads.
    u3 = jnp.einsum('hte,hef->htf', o3, wu_h_ref[...],
                    preferred_element_type=f32)                # (heads, t, nhid2)
    emb = jnp.sum(u3, axis=0) + bu_ref[...] + emb1

    # ---- stack [emb1; emb2; emb] into the output slab (no concatenate) ------
    embs_ref[0:t, :] = emb1
    embs_ref[t:2 * t, :] = emb2
    embs_ref[2 * t:3 * t, :] = emb

    # ---- shared decoder over the slab (BatchNorm folded into dw1/db1) -------
    # Linear -> BatchNorm1d(eval, folded) -> ReLU -> Linear -> ReLU
    z = embs_ref[...]                                          # (3t, nhid2)
    hdec = jnp.maximum(dot(z, dw1_ref[...]) + db1_ref[...], 0.0)
    decs_ref[...] = jnp.maximum(dot(hdec, dw2_ref[...]) + db2_ref[...], 0.0)


def _cost_estimate(n, nfeat, nhid1, nhid2, heads):
    gcn_flops = (2 * n * nfeat * nhid1 + 2 * n * n * nhid1
                 + 2 * n * nhid1 * nhid2 + 2 * n * n * nhid2)
    attn_flops = (2 * (2 * heads * nhid2) * nhid2 * n          # fused K|V
                  + 2 * n * nhid2 * heads * nhid2              # Q
                  + heads * (4 * n * n * nhid2)                # scores + p@v
                  + 2 * n * heads * nhid2 * nhid2)             # unify heads
    dec_flops = 2 * (3 * n) * nhid2 * nhid1 + 2 * (3 * n) * nhid1 * nfeat
    flops = 2 * gcn_flops + attn_flops + dec_flops
    transcendentals = heads * n * n + heads * n                # exp + rcp
    bytes_accessed = 4 * (
        n * nfeat + 2 * n * n                                  # x, adjacencies
        + 2 * (nfeat * nhid1 + nhid1 + nhid1 * nhid2 + nhid2)  # gcn weights
        + 3 * heads * nhid2 * nhid2 + nhid2                    # attn weights
        + nhid2 * nhid1 + nhid1 + nhid1 * nfeat + nfeat        # decoder
        + 3 * n * nhid2 + 3 * n * nfeat)                       # outputs
    return pl.CostEstimate(flops=flops, transcendentals=transcendentals,
                           bytes_accessed=bytes_accessed)


# ----------------------------------------------------------------------------
# stMCFN forward (single fused pallas_call, splits done in the wrapper)
# ----------------------------------------------------------------------------
def stmcfn_forward(x, sadj, fadj, params, heads):
    n, nfeat = x.shape
    g1, g2 = params["gcn1"], params["gcn2"]
    a, d = params["attn"], params["dec"]
    nhid1 = g1["w1"].shape[1]
    nhid2 = g1["w2"].shape[1]
    e = nhid2

    # ---- wrapper-side weight prep (XLA ops outside the kernel) --------------
    # fused K|V projection weight in "rows" form: (2*heads*e, nhid2)
    wkv_rows = jnp.concatenate([a["wk"].T, a["wv"].T], axis=0)
    # per-head query / unify weights
    wq_h = a["wq"].reshape(nhid2, heads, e).transpose(1, 0, 2)  # (heads, nhid2, e)
    wu_h = a["wu"].reshape(heads, e, nhid2)                     # (heads, e, nhid2)
    # fold eval-mode BatchNorm1d into the decoder's first Linear (exact).
    inv = d["gamma"] * lax.rsqrt(d["var"] + 1e-5)               # (1, nhid1)
    dw1f = d["w1"] * inv
    db1f = (d["b1"] - d["mean"]) * inv + d["beta"]

    kern = functools.partial(_stmcfn_kernel, heads=heads)
    out_shape = (
        jax.ShapeDtypeStruct((3 * n, nhid2), jnp.float32),      # [emb1;emb2;emb]
        jax.ShapeDtypeStruct((3 * n, nfeat), jnp.float32),      # [H1;H2;H]
    )
    embs, decs = pl.pallas_call(
        kern,
        out_shape=out_shape,
        in_specs=[_VMEM] * 19,
        out_specs=(_VMEM, _VMEM),
        compiler_params=pltpu.CompilerParams(
            vmem_limit_bytes=32 * 1024 * 1024),
        cost_estimate=_cost_estimate(n, nfeat, nhid1, nhid2, heads),
    )(x, sadj, fadj,
      g1["w1"], g1["b1"], g1["w2"], g1["b2"],
      g2["w1"], g2["b1"], g2["w2"], g2["b2"],
      wkv_rows, wq_h, wu_h, a["bu"],
      dw1f, db1f, d["w2"], d["b2"])

    emb1, emb2, emb = embs[:n], embs[n:2 * n], embs[2 * n:]
    h1, h2, h = decs[:n], decs[n:2 * n], decs[2 * n:]
    return emb1, emb2, emb, h1, h2, h


# ----------------------------------------------------------------------------
# deterministic parameter construction
# ----------------------------------------------------------------------------
def make_params(key, nfeat, nhid1, nhid2, heads):
    ks = jax.random.split(key, 16)

    def w(k, shape, scale=0.1):
        return (scale * jax.random.normal(k, shape)).astype(jnp.float32)

    gcn1 = dict(w1=w(ks[0], (nfeat, nhid1)), b1=w(ks[1], (1, nhid1)),
                w2=w(ks[2], (nhid1, nhid2)), b2=w(ks[3], (1, nhid2)))
    gcn2 = dict(w1=w(ks[4], (nfeat, nhid1)), b1=w(ks[5], (1, nhid1)),
                w2=w(ks[6], (nhid1, nhid2)), b2=w(ks[7], (1, nhid2)))
    attn = dict(wk=w(ks[8], (nhid2, nhid2 * heads)),
                wq=w(ks[9], (nhid2, nhid2 * heads)),
                wv=w(ks[10], (nhid2, nhid2 * heads)),
                wu=w(ks[11], (nhid2 * heads, nhid2)),
                bu=w(ks[12], (1, nhid2)))
    dec = dict(w1=w(ks[13], (nhid2, nhid1)), b1=w(ks[14], (1, nhid1)),
               gamma=jnp.ones((1, nhid1), jnp.float32),
               beta=jnp.zeros((1, nhid1), jnp.float32),
               mean=jnp.zeros((1, nhid1), jnp.float32),
               var=jnp.ones((1, nhid1), jnp.float32),
               w2=w(ks[15], (nhid1, nfeat)),
               b2=jnp.zeros((1, nfeat), jnp.float32))
    return dict(gcn1=gcn1, gcn2=gcn2, attn=attn, dec=dec)


if __name__ == "__main__":
    N, NFEAT, NHID1, NHID2, HEADS = 16, 32, 32, 16, 8

    key = jax.random.PRNGKey(0)
    kx, ks, kf, kp = jax.random.split(key, 4)

    x = jax.random.normal(kx, (N, NFEAT), dtype=jnp.float32)

    def make_adj(k):
        a = jax.random.uniform(k, (N, N), dtype=jnp.float32)
        a = (a + a.T) * 0.5 + jnp.eye(N, dtype=jnp.float32)
        return a / jnp.sum(a, axis=1, keepdims=True)   # row-normalized

    sadj = make_adj(ks)
    fadj = make_adj(kf)
    params = make_params(kp, NFEAT, NHID1, NHID2, HEADS)

    outs = stmcfn_forward(x, sadj, fadj, params, HEADS)
    outs = jax.block_until_ready(outs)

    emb1, emb2, emb, H1, H2, H = outs
    assert emb1.shape == (N, NHID2) and emb2.shape == (N, NHID2)
    assert emb.shape == (N, NHID2)
    assert H1.shape == (N, NFEAT) and H2.shape == (N, NFEAT) and H.shape == (N, NFEAT)
    assert all(bool(jnp.all(jnp.isfinite(o))) for o in outs)

    print("KERNEL_OK")
</pallas_src>

<mosaic_0001>
module attributes {stable_mosaic.version = 11 : i64} {
  func.func @_stmcfn_kernel(%arg0: memref<16x32xf32, #tpu.memory_space<vmem>>, %arg1: memref<16x16xf32, #tpu.memory_space<vmem>>, %arg2: memref<16x16xf32, #tpu.memory_space<vmem>>, %arg3: memref<32x32xf32, #tpu.memory_space<vmem>>, %arg4: memref<1x32xf32, #tpu.memory_space<vmem>>, %arg5: memref<32x16xf32, #tpu.memory_space<vmem>>, %arg6: memref<1x16xf32, #tpu.memory_space<vmem>>, %arg7: memref<32x32xf32, #tpu.memory_space<vmem>>, %arg8: memref<1x32xf32, #tpu.memory_space<vmem>>, %arg9: memref<32x16xf32, #tpu.memory_space<vmem>>, %arg10: memref<1x16xf32, #tpu.memory_space<vmem>>, %arg11: memref<256x16xf32, #tpu.memory_space<vmem>>, %arg12: memref<8x16x16xf32, #tpu.memory_space<vmem>>, %arg13: memref<8x16x16xf32, #tpu.memory_space<vmem>>, %arg14: memref<1x16xf32, #tpu.memory_space<vmem>>, %arg15: memref<16x32xf32, #tpu.memory_space<vmem>>, %arg16: memref<1x32xf32, #tpu.memory_space<vmem>>, %arg17: memref<32x32xf32, #tpu.memory_space<vmem>>, %arg18: memref<1x32xf32, #tpu.memory_space<vmem>>, %arg19: memref<48x16xf32, #tpu.memory_space<vmem>>, %arg20: memref<48x32xf32, #tpu.memory_space<vmem>>) attributes {dimension_semantics = [], scalar_prefetch = 0 : i64, scratch_operands = 0 : i64, tpu.core_type = #tpu.core_type<tc>} {
    %c0 = arith.constant 0 : index
    %c0_0 = arith.constant 0 : index
    %0 = vector.load %arg0[%c0, %c0_0] : memref<16x32xf32, #tpu.memory_space<vmem>>, vector<16x32xf32>
    %c0_1 = arith.constant 0 : index
    %c0_2 = arith.constant 0 : index
    %1 = vector.load %arg1[%c0_1, %c0_2] : memref<16x16xf32, #tpu.memory_space<vmem>>, vector<16x16xf32>
    %c0_3 = arith.constant 0 : index
    %c0_4 = arith.constant 0 : index
    %2 = vector.load %arg3[%c0_3, %c0_4] : memref<32x32xf32, #tpu.memory_space<vmem>>, vector<32x32xf32>
    %c0_5 = arith.constant 0 : index
    %c0_6 = arith.constant 0 : index
    %3 = vector.load %arg4[%c0_5, %c0_6] : memref<1x32xf32, #tpu.memory_space<vmem>>, vector<1x32xf32>
    %c0_7 = arith.constant 0 : index
    %c0_8 = arith.constant 0 : index
    %4 = vector.load %arg5[%c0_7, %c0_8] : memref<32x16xf32, #tpu.memory_space<vmem>>, vector<32x16xf32>
    %c0_9 = arith.constant 0 : index
    %c0_10 = arith.constant 0 : index
    %5 = vector.load %arg6[%c0_9, %c0_10] : memref<1x16xf32, #tpu.memory_space<vmem>>, vector<1x16xf32>
    %cst = arith.constant dense<0.000000e+00> : vector<16x32xf32>
    %6 = tpu.matmul %0, %2, %cst {dimension_numbers = #tpu.dot_dimension_numbers<[1], [0], [0], [1], [0, 0, 1, 1], [], []>} : vector<16x32xf32>, vector<32x32xf32>, vector<16x32xf32> -> vector<16x32xf32>
    %cst_11 = arith.constant dense<0.000000e+00> : vector<16x32xf32>
    %7 = tpu.matmul %1, %6, %cst_11 {dimension_numbers = #tpu.dot_dimension_numbers<[1], [0], [0], [1], [0, 0, 1, 1], [], []>} : vector<16x16xf32>, vector<16x32xf32>, vector<16x32xf32> -> vector<16x32xf32>
    %8 = vector.broadcast %3 : vector<1x32xf32> to vector<16x32xf32>
    %9 = arith.addf %7, %8 : vector<16x32xf32>
    %cst_12 = arith.constant 0.000000e+00 : f32
    %10 = vector.broadcast %cst_12 : f32 to vector<16x32xf32>
    %11 = arith.maximumf %9, %10 : vector<16x32xf32>
    %cst_13 = arith.constant dense<0.000000e+00> : vector<16x16xf32>
    %12 = tpu.matmul %11, %4, %cst_13 {dimension_numbers = #tpu.dot_dimension_numbers<[1], [0], [0], [1], [0, 0, 1, 1], [], []>} : vector<16x32xf32>, vector<32x16xf32>, vector<16x16xf32> -> vector<16x16xf32>
    %cst_14 = arith.constant dense<0.000000e+00> : vector<16x16xf32>
    %13 = tpu.matmul %1, %12, %cst_14 {dimension_numbers = #tpu.dot_dimension_numbers<[1], [0], [0], [1], [0, 0, 1, 1], [], []>} : vector<16x16xf32>, vector<16x16xf32>, vector<16x16xf32> -> vector<16x16xf32>
    %14 = vector.broadcast %5 : vector<1x16xf32> to vector<16x16xf32>
    %15 = arith.addf %13, %14 : vector<16x16xf32>
    %c0_15 = arith.constant 0 : index
    %c0_16 = arith.constant 0 : index
    %16 = vector.load %arg2[%c0_15, %c0_16] : memref<16x16xf32, #tpu.memory_space<vmem>>, vector<16x16xf32>
    %c0_17 = arith.constant 0 : index
    %c0_18 = arith.constant 0 : index
    %17 = vector.load %arg7[%c0_17, %c0_18] : memref<32x32xf32, #tpu.memory_space<vmem>>, vector<32x32xf32>
    %c0_19 = arith.constant 0 : index
    %c0_20 = arith.constant 0 : index
    %18 = vector.load %arg8[%c0_19, %c0_20] : memref<1x32xf32, #tpu.memory_space<vmem>>, vector<1x32xf32>
    %c0_21 = arith.constant 0 : index
    %c0_22 = arith.constant 0 : index
    %19 = vector.load %arg9[%c0_21, %c0_22] : memref<32x16xf32, #tpu.memory_space<vmem>>, vector<32x16xf32>
    %c0_23 = arith.constant 0 : index
    %c0_24 = arith.constant 0 : index
    %20 = vector.load %arg10[%c0_23, %c0_24] : memref<1x16xf32, #tpu.memory_space<vmem>>, vector<1x16xf32>
    %cst_25 = arith.constant dense<0.000000e+00> : vector<16x32xf32>
    %21 = tpu.matmul %0, %17, %cst_25 {dimension_numbers = #tpu.dot_dimension_numbers<[1], [0], [0], [1], [0, 0, 1, 1], [], []>} : vector<16x32xf32>, vector<32x32xf32>, vector<16x32xf32> -> vector<16x32xf32>
    %cst_26 = arith.constant dense<0.000000e+00> : vector<16x32xf32>
    %22 = tpu.matmul %16, %21, %cst_26 {dimension_numbers = #tpu.dot_dimension_numbers<[1], [0], [0], [1], [0, 0, 1, 1], [], []>} : vector<16x16xf32>, vector<16x32xf32>, vector<16x32xf32> -> vector<16x32xf32>
    %23 = vector.broadcast %18 : vector<1x32xf32> to vector<16x32xf32>
    %24 = arith.addf %22, %23 : vector<16x32xf32>
    %cst_27 = arith.constant 0.000000e+00 : f32
    %25 = vector.broadcast %cst_27 : f32 to vector<16x32xf32>
    %26 = arith.maximumf %24, %25 : vector<16x32xf32>
    %cst_28 = arith.constant dense<0.000000e+00> : vector<16x16xf32>
    %27 = tpu.matmul %26, %19, %cst_28 {dimension_numbers = #tpu.dot_dimension_numbers<[1], [0], [0], [1], [0, 0, 1, 1], [], []>} : vector<16x32xf32>, vector<32x16xf32>, vector<16x16xf32> -> vector<16x16xf32>
    %cst_29 = arith.constant dense<0.000000e+00> : vector<16x16xf32>
    %28 = tpu.matmul %16, %27, %cst_29 {dimension_numbers = #tpu.dot_dimension_numbers<[1], [0], [0], [1], [0, 0, 1, 1], [], []>} : vector<16x16xf32>, vector<16x16xf32>, vector<16x16xf32> -> vector<16x16xf32>
    %29 = vector.broadcast %20 : vector<1x16xf32> to vector<16x16xf32>
    %30 = arith.addf %28, %29 : vector<16x16xf32>
    %c0_30 = arith.constant 0 : index
    %c0_31 = arith.constant 0 : index
    %31 = vector.load %arg11[%c0_30, %c0_31] : memref<256x16xf32, #tpu.memory_space<vmem>>, vector<256x16xf32>
    %cst_32 = arith.constant dense<0.000000e+00> : vector<256x16xf32>
    %32 = tpu.matmul %31, %15, %cst_32 {dimension_numbers = #tpu.dot_dimension_numbers<[1], [1], [0], [0], [0, 0, 1, 0], [], []>} : vector<256x16xf32>, vector<16x16xf32>, vector<256x16xf32> -> vector<256x16xf32>
    %33 = vector.shape_cast %32 : vector<256x16xf32> to vector<16x16x16xf32>
    %34 = vector.extract_strided_slice %33 {offsets = [0, 0, 0], sizes = [8, 16, 16], strides = [1, 1, 1]} : vector<16x16x16xf32> to vector<8x16x16xf32>
    %35 = vector.extract_strided_slice %33 {offsets = [8, 0, 0], sizes = [8, 16, 16], strides = [1, 1, 1]} : vector<16x16x16xf32> to vector<8x16x16xf32>
    %36 = vector.shape_cast %30 : vector<16x16xf32> to vector<1x16x16xf32>
    %37 = vector.shape_cast %36 : vector<1x16x16xf32> to vector<1x16x16xf32>
    %38 = vector.broadcast %37 : vector<1x16x16xf32> to vector<8x16x16xf32>
    %c0_33 = arith.constant 0 : index
    %c0_34 = arith.constant 0 : index
    %c0_35 = arith.constant 0 : index
    %39 = vector.load %arg12[%c0_33, %c0_34, %c0_35] : memref<8x16x16xf32, #tpu.memory_space<vmem>>, vector<8x16x16xf32>
    "tpu.trace_start"() <{level = 10 : i32, message = "hte,hef->htf"}> : () -> ()
    %cst_36 = arith.constant dense<0.000000e+00> : vector<8x16x16xf32>
    %40 = tpu.matmul %38, %39, %cst_36 {dimension_numbers = #tpu.dot_dimension_numbers<[2], [1], [1], [2], [0, 0, 0, 1, 1, 2], [0], [0]>} : vector<8x16x16xf32>, vector<8x16x16xf32>, vector<8x16x16xf32> -> vector<8x16x16xf32>
    "tpu.trace_stop"() : () -> ()
    %cst_37 = arith.constant 2.500000e-01 : f32
    %41 = vector.broadcast %cst_37 : f32 to vector<8x16x16xf32>
    %42 = arith.mulf %40, %41 : vector<8x16x16xf32>
    "tpu.trace_start"() <{level = 10 : i32, message = "hqd,hdk->hqk"}> : () -> ()
    %cst_38 = arith.constant dense<0.000000e+00> : vector<8x16x16xf32>
    %43 = tpu.matmul %42, %34, %cst_38 {dimension_numbers = #tpu.dot_dimension_numbers<[2], [1], [1], [2], [0, 0, 0, 1, 1, 2], [0], [0]>} : vector<8x16x16xf32>, vector<8x16x16xf32>, vector<8x16x16xf32> -> vector<8x16x16xf32>
    "tpu.trace_stop"() : () -> ()
    %cst_39 = arith.constant dense<0xFF800000> : vector<8x16xf32>
    %44 = vector.multi_reduction <maximumf>, %43, %cst_39 [2] : vector<8x16x16xf32> to vector<8x16xf32>
    %45 = vector.shape_cast %44 : vector<8x16xf32> to vector<8x16x1xf32>
    %46 = vector.broadcast %45 : vector<8x16x1xf32> to vector<8x16x16xf32>
    %47 = arith.subf %43, %46 : vector<8x16x16xf32>
    %48 = math.exp %47 : vector<8x16x16xf32>
    %cst_40 = arith.constant dense<0.000000e+00> : vector<8x16xf32>
    %49 = vector.multi_reduction <add>, %48, %cst_40 [2] : vector<8x16x16xf32> to vector<8x16xf32>
    %50 = vector.shape_cast %49 : vector<8x16xf32> to vector<8x16x1xf32>
    %51 = tpu.reciprocal %50 {approx = true} : vector<8x16x1xf32> -> vector<8x16x1xf32>
    %52 = vector.broadcast %51 : vector<8x16x1xf32> to vector<8x16x16xf32>
    %53 = arith.mulf %48, %52 : vector<8x16x16xf32>
    "tpu.trace_start"() <{level = 10 : i32, message = "hqk,hdk->hqd"}> : () -> ()
    %cst_41 = arith.constant dense<0.000000e+00> : vector<8x16x16xf32>
    %54 = tpu.matmul %53, %35, %cst_41 {dimension_numbers = #tpu.dot_dimension_numbers<[2], [2], [1], [1], [0, 0, 0, 1, 1, 1], [0], [0]>} : vector<8x16x16xf32>, vector<8x16x16xf32>, vector<8x16x16xf32> -> vector<8x16x16xf32>
    "tpu.trace_stop"() : () -> ()
    %c0_42 = arith.constant 0 : index
    %c0_43 = arith.constant 0 : index
    %c0_44 = arith.constant 0 : index
    %55 = vector.load %arg13[%c0_42, %c0_43, %c0_44] : memref<8x16x16xf32, #tpu.memory_space<vmem>>, vector<8x16x16xf32>
    "tpu.trace_start"() <{level = 10 : i32, message = "hte,hef->htf"}> : () -> ()
    %cst_45 = arith.constant dense<0.000000e+00> : vector<8x16x16xf32>
    %56 = tpu.matmul %54, %55, %cst_45 {dimension_numbers = #tpu.dot_dimension_numbers<[2], [1], [1], [2], [0, 0, 0, 1, 1, 2], [0], [0]>} : vector<8x16x16xf32>, vector<8x16x16xf32>, vector<8x16x16xf32> -> vector<8x16x16xf32>
    "tpu.trace_stop"() : () -> ()
    %cst_46 = arith.constant dense<0.000000e+00> : vector<16x16xf32>
    %57 = vector.multi_reduction <add>, %56, %cst_46 [0] : vector<8x16x16xf32> to vector<16x16xf32>
    %c0_47 = arith.constant 0 : index
    %c0_48 = arith.constant 0 : index
    %58 = vector.load %arg14[%c0_47, %c0_48] : memref<1x16xf32, #tpu.memory_space<vmem>>, vector<1x16xf32>
    %59 = vector.broadcast %58 : vector<1x16xf32> to vector<16x16xf32>
    %60 = arith.addf %57, %59 : vector<16x16xf32>
    %61 = arith.addf %60, %15 : vector<16x16xf32>
    %c0_49 = arith.constant 0 : index
    %c0_50 = arith.constant 0 : index
    %62 = vector.load %arg19[%c0_49, %c0_50] : memref<48x16xf32, #tpu.memory_space<vmem>>, vector<16x16xf32>
    tpu.vector_store %arg19[%c0_49, %c0_50], %15 {strides = array<i32>} : memref<48x16xf32, #tpu.memory_space<vmem>>, vector<16x16xf32>,
    %c16 = arith.constant 16 : index
    %c0_51 = arith.constant 0 : index
    %63 = vector.load %arg19[%c16, %c0_51] : memref<48x16xf32, #tpu.memory_space<vmem>>, vector<16x16xf32>
    tpu.vector_store %arg19[%c16, %c0_51], %30 {strides = array<i32>} : memref<48x16xf32, #tpu.memory_space<vmem>>, vector<16x16xf32>,
    %c32 = arith.constant 32 : index
    %c0_52 = arith.constant 0 : index
    %64 = vector.load %arg19[%c32, %c0_52] : memref<48x16xf32, #tpu.memory_space<vmem>>, vector<16x16xf32>
    tpu.vector_store %arg19[%c32, %c0_52], %61 {strides = array<i32>} : memref<48x16xf32, #tpu.memory_space<vmem>>, vector<16x16xf32>,
    %c0_53 = arith.constant 0 : index
    %c0_54 = arith.constant 0 : index
    %65 = vector.load %arg19[%c0_53, %c0_54] : memref<48x16xf32, #tpu.memory_space<vmem>>, vector<48x16xf32>
    %c0_55 = arith.constant 0 : index
    %c0_56 = arith.constant 0 : index
    %66 = vector.load %arg15[%c0_55, %c0_56] : memref<16x32xf32, #tpu.memory_space<vmem>>, vector<16x32xf32>
    %cst_57 = arith.constant dense<0.000000e+00> : vector<48x32xf32>
    %67 = tpu.matmul %65, %66, %cst_57 {dimension_numbers = #tpu.dot_dimension_numbers<[1], [0], [0], [1], [0, 0, 1, 1], [], []>} : vector<48x16xf32>, vector<16x32xf32>, vector<48x32xf32> -> vector<48x32xf32>
    %c0_58 = arith.constant 0 : index
    %c0_59 = arith.constant 0 : index
    %68 = vector.load %arg16[%c0_58, %c0_59] : memref<1x32xf32, #tpu.memory_space<vmem>>, vector<1x32xf32>
    %69 = vector.broadcast %68 : vector<1x32xf32> to vector<48x32xf32>
    %70 = arith.addf %67, %69 : vector<48x32xf32>
    %cst_60 = arith.constant 0.000000e+00 : f32
    %71 = vector.broadcast %cst_60 : f32 to vector<48x32xf32>
    %72 = arith.maximumf %70, %71 : vector<48x32xf32>
    %c0_61 = arith.constant 0 : index
    %c0_62 = arith.constant 0 : index
    %73 = vector.load %arg17[%c0_61, %c0_62] : memref<32x32xf32, #tpu.memory_space<vmem>>, vector<32x32xf32>
    %cst_63 = arith.constant dense<0.000000e+00> : vector<48x32xf32>
    %74 = tpu.matmul %72, %73, %cst_63 {dimension_numbers = #tpu.dot_dimension_numbers<[1], [0], [0], [1], [0, 0, 1, 1], [], []>} : vector<48x32xf32>, vector<32x32xf32>, vector<48x32xf32> -> vector<48x32xf32>
    %c0_64 = arith.constant 0 : index
    %c0_65 = arith.constant 0 : index
    %75 = vector.load %arg18[%c0_64, %c0_65] : memref<1x32xf32, #tpu.memory_space<vmem>>, vector<1x32xf32>
    %76 = vector.broadcast %75 : vector<1x32xf32> to vector<48x32xf32>
    %77 = arith.addf %74, %76 : vector<48x32xf32>
    %cst_66 = arith.constant 0.000000e+00 : f32
    %78 = vector.broadcast %cst_66 : f32 to vector<48x32xf32>
    %79 = arith.maximumf %77, %78 : vector<48x32xf32>
    %c0_67 = arith.constant 0 : index
    %c0_68 = arith.constant 0 : index
    %80 = vector.load %arg20[%c0_67, %c0_68] : memref<48x32xf32, #tpu.memory_space<vmem>>, vector<48x32xf32>
    tpu.vector_store %arg20[%c0_67, %c0_68], %79 {strides = array<i32>} : memref<48x32xf32, #tpu.memory_space<vmem>>, vector<48x32xf32>,
    return
  }
}

</mosaic_0001>

<llo_original>
// kernel: tpu_custom_call.1
$region0: #{tpu_custom_call.1}
  #allocation0 [shape = 'u32[]', space=smem, size = 0x4, offset = 0x4, fixed_abs, tag = 'smem constant byte address 0x4 - core index']
  #allocation1 [shape = 'u32[144,128]{1,0:T(1,128)}', space=vmem, size = 0x12000, scoped, tag = 'internal scratch']
  %s0 = inlined_call_operand.hbm [shape: f32[16,32], index: 0, kind: input, shape index: {}]
  %s1 = inlined_call_operand.hbm [shape: f32[16,16], index: 1, kind: input, shape index: {}]
  %s2 = inlined_call_operand.hbm [shape: f32[16,16], index: 2, kind: input, shape index: {}]
  %s3 = inlined_call_operand.vmem [shape: f32[32,32], index: 3, kind: input, shape index: {}]
  %s4 = inlined_call_operand.hbm [shape: f32[1,32], index: 4, kind: input, shape index: {}]
  %s5 = inlined_call_operand.vmem [shape: f32[32,16], index: 5, kind: input, shape index: {}]
  %s6 = inlined_call_operand.hbm [shape: f32[1,16], index: 6, kind: input, shape index: {}]
  %s7 = inlined_call_operand.vmem [shape: f32[32,32], index: 7, kind: input, shape index: {}]
  %s8 = inlined_call_operand.hbm [shape: f32[1,32], index: 8, kind: input, shape index: {}]
  %s9 = inlined_call_operand.vmem [shape: f32[32,16], index: 9, kind: input, shape index: {}]
  %s10 = inlined_call_operand.hbm [shape: f32[1,16], index: 10, kind: input, shape index: {}]
  %s11 = inlined_call_operand.vmem [shape: f32[256,16], index: 11, kind: input, shape index: {}]
  %s12 = inlined_call_operand.vmem [shape: f32[8,16,16], index: 12, kind: input, shape index: {}]
  %s13 = inlined_call_operand.vmem [shape: f32[8,16,16], index: 13, kind: input, shape index: {}]
  %s14 = inlined_call_operand.vmem [shape: f32[1,16], index: 14, kind: input, shape index: {}]
  %s15 = inlined_call_operand.hbm [shape: f32[16,32], index: 15, kind: input, shape index: {}]
  %s16 = inlined_call_operand.vmem [shape: f32[1,32], index: 16, kind: input, shape index: {}]
  %s17 = inlined_call_operand.vmem [shape: f32[32,32], index: 17, kind: input, shape index: {}]
  %s18 = inlined_call_operand.vmem [shape: f32[1,32], index: 18, kind: input, shape index: {}]
  %s19 = inlined_call_operand.vmem [shape: f32[48,16], index: 19, kind: output, shape index: {0}]
  %s20 = inlined_call_operand.vmem [shape: f32[48,32], index: 20, kind: output, shape index: {1}]
  %21 = xla_tuple %s19, %s20
  %s22 = sld [smem:[#allocation0]]
  $region126: #{tpu_custom_call.1} parent=0
    _
  %s24 = ssub.s32 1, %s22
  %s25 = scalar_select 0, %s24, %s22
  $region1: #{tpu_custom_call.1} parent=0
    #allocation2 [shape = 'u8[8192]{0}', space=vmem, size = 0x2000, scoped, tag = 'input window, operand 0, single buffered']
    #allocation3 [shape = 's32[1]{0}', space=sflag, size = 0x4, scoped, tag = 'scoped memory for tpu_custom_call.1']
    #allocation4 [shape = 'u8[8192]{0}', space=vmem, size = 0x2000, scoped, tag = 'input window, operand 1, single buffered']
    #allocation5 [shape = 's32[1]{0}', space=sflag, size = 0x4, scoped, tag = 'scoped memory for tpu_custom_call.1']
    #allocation6 [shape = 'u8[8192]{0}', space=vmem, size = 0x2000, scoped, tag = 'input window, operand 2, single buffered']
    #allocation7 [shape = 'u8[512]{0}', space=vmem, size = 0x400, scoped, tag = 'input window, operand 4, single buffered']
    #allocation8 [shape = 's32[1]{0}', space=sflag, size = 0x4, scoped, tag = 'scoped memory for tpu_custom_call.1']
    #allocation9 [shape = 'u8[512]{0}', space=vmem, size = 0x400, scoped, tag = 'input window, operand 6, single buffered']
    #allocation10 [shape = 'u8[512]{0}', space=vmem, size = 0x400, scoped, tag = 'input window, operand 8, single buffered']
    #allocation11 [shape = 's32[1]{0}', space=sflag, size = 0x4, scoped, tag = 'scoped memory for tpu_custom_call.1']
    #allocation12 [shape = 'u8[512]{0}', space=vmem, size = 0x400, scoped, tag = 'input window, operand 10, single buffered']
    #allocation13 [shape = 'u8[8192]{0}', space=vmem, size = 0x2000, scoped, tag = 'input window, operand 15, single buffered']
    #allocation14 [shape = 's32[1]{0}', space=sflag, size = 0x4, scoped, tag = 'scoped memory for tpu_custom_call.1']
    %26 = vsyncpa [#allocation3], 0
    %27 = vsyncpa [#allocation5], 0
    %28 = vsyncpa [#allocation8], 0
    %29 = vsyncpa [#allocation11], 0
    %30 = vsyncpa [#allocation14], 0
    // Predicated region
    $region2: #{tpu_custom_call.1} parent=1 // pred_check
      _
    $region3: #{tpu_custom_call.1} parent=1 // pred_check_branch
      %32 = sbr.rel (0) target = $region5
    $region4: #{tpu_custom_call.1} parent=1 // pred_region
      %s34 = ssub.s32 256, 256
      %35 = vsyncadd [#allocation3], %s34
      %s36 = sshll.u32 [#allocation2], 4
      %s37 = int_to_ptr.vmem [resolvable:$true] %s36
      %42 = dma.hbm_to_vmem [thread:$0]  %s0, 256, %s37, [#allocation3], 128, 128, 8
    $region5: #{tpu_custom_call.1} parent=1 // pred_fallthru
      _
    // Predicated region
    $region6: #{tpu_custom_call.1} parent=1 // pred_check
      _
    $region7: #{tpu_custom_call.1} parent=1 // pred_check_branch
      %44 = sbr.rel (0) target = $region9
    $region8: #{tpu_custom_call.1} parent=1 // pred_region
      %s46 = ssub.s32 256, 256
      %47 = vsyncadd [#allocation5], %s46
      %s48 = sshll.u32 [#allocation4], 4
      %s49 = int_to_ptr.vmem [resolvable:$true] %s48
      %54 = dma.hbm_to_vmem [thread:$0]  %s1, 256, %s49, [#allocation5], 128, 128, 8
    $region9: #{tpu_custom_call.1} parent=1 // pred_fallthru
      _
    // Predicated region
    $region10: #{tpu_custom_call.1} parent=1 // pred_check
      _
    $region11: #{tpu_custom_call.1} parent=1 // pred_check_branch
      %56 = sbr.rel (0) target = $region13
    $region12: #{tpu_custom_call.1} parent=1 // pred_region
      %s58 = ssub.s32 256, 256
      %59 = vsyncadd [#allocation5], %s58
      %s60 = sshll.u32 [#allocation6], 4
      %s61 = int_to_ptr.vmem [resolvable:$true] %s60
      %66 = dma.hbm_to_vmem [thread:$0]  %s2, 256, %s61, [#allocation5], 128, 128, 8
    $region13: #{tpu_custom_call.1} parent=1 // pred_fallthru
      _
    // Predicated region
    $region14: #{tpu_custom_call.1} parent=1 // pred_check
      _
    $region15: #{tpu_custom_call.1} parent=1 // pred_check_branch
      %68 = sbr.rel (0) target = $region17
    $region16: #{tpu_custom_call.1} parent=1 // pred_region
      _
    $region17: #{tpu_custom_call.1} parent=1 // pred_fallthru
      _
    // Predicated region
    $region18: #{tpu_custom_call.1} parent=1 // pred_check
      _
    $region19: #{tpu_custom_call.1} parent=1 // pred_check_branch
      %70 = sbr.rel (0) target = $region21
    $region20: #{tpu_custom_call.1} parent=1 // pred_region
      %s72 = ssub.s32 16, 16
      %73 = vsyncadd [#allocation8], %s72
      %s75 = sshll.u32 [#allocation7], 4
      %s76 = int_to_ptr.vmem [resolvable:$true] %s75
      %78 = dma.hbm_to_vmem [thread:$0]  %s4, 16, %s76, [#allocation8]
    $region21: #{tpu_custom_call.1} parent=1 // pred_fallthru
      _
    // Predicated region
    $region22: #{tpu_custom_call.1} parent=1 // pred_check
      _
    $region23: #{tpu_custom_call.1} parent=1 // pred_check_branch
      %80 = sbr.rel (0) target = $region25
    $region24: #{tpu_custom_call.1} parent=1 // pred_region
      _
    $region25: #{tpu_custom_call.1} parent=1 // pred_fallthru
      _
    // Predicated region
    $region26: #{tpu_custom_call.1} parent=1 // pred_check
      _
    $region27: #{tpu_custom_call.1} parent=1 // pred_check_branch
      %82 = sbr.rel (0) target = $region29
    $region28: #{tpu_custom_call.1} parent=1 // pred_region
      %s84 = ssub.s32 16, 16
      %85 = vsyncadd [#allocation8], %s84
      %s87 = sshll.u32 [#allocation9], 4
      %s88 = int_to_ptr.vmem [resolvable:$true] %s87
      %90 = dma.hbm_to_vmem [thread:$0]  %s6, 16, %s88, [#allocation8]
    $region29: #{tpu_custom_call.1} parent=1 // pred_fallthru
      _
    // Predicated region
    $region30: #{tpu_custom_call.1} parent=1 // pred_check
      _
    $region31: #{tpu_custom_call.1} parent=1 // pred_check_branch
      %92 = sbr.rel (0) target = $region33
    $region32: #{tpu_custom_call.1} parent=1 // pred_region
      _
    $region33: #{tpu_custom_call.1} parent=1 // pred_fallthru
      _
    // Predicated region
    $region34: #{tpu_custom_call.1} parent=1 // pred_check
      _
    $region35: #{tpu_custom_call.1} parent=1 // pred_check_branch
      %94 = sbr.rel (0) target = $region37
    $region36: #{tpu_custom_call.1} parent=1 // pred_region
      %s96 = ssub.s32 16, 16
      %97 = vsyncadd [#allocation11], %s96
      %s99 = sshll.u32 [#allocation10], 4
      %s100 = int_to_ptr.vmem [resolvable:$true] %s99
      %102 = dma.hbm_to_vmem [thread:$0]  %s8, 16, %s100, [#allocation11]
    $region37: #{tpu_custom_call.1} parent=1 // pred_fallthru
      _
    // Predicated region
    $region38: #{tpu_custom_call.1} parent=1 // pred_check
      _
    $region39: #{tpu_custom_call.1} parent=1 // pred_check_branch
      %104 = sbr.rel (0) target = $region41
    $region40: #{tpu_custom_call.1} parent=1 // pred_region
      _
    $region41: #{tpu_custom_call.1} parent=1 // pred_fallthru
      _
    // Predicated region
    $region42: #{tpu_custom_call.1} parent=1 // pred_check
      _
    $region43: #{tpu_custom_call.1} parent=1 // pred_check_branch
      %106 = sbr.rel (0) target = $region45
    $region44: #{tpu_custom_call.1} parent=1 // pred_region
      %s108 = ssub.s32 16, 16
      %109 = vsyncadd [#allocation11], %s108
      %s111 = sshll.u32 [#allocation12], 4
      %s112 = int_to_ptr.vmem [resolvable:$true] %s111
      %114 = dma.hbm_to_vmem [thread:$0]  %s10, 16, %s112, [#allocation11]
    $region45: #{tpu_custom_call.1} parent=1 // pred_fallthru
      _
    // Predicated region
    $region46: #{tpu_custom_call.1} parent=1 // pred_check
      _
    $region47: #{tpu_custom_call.1} parent=1 // pred_check_branch
      %116 = sbr.rel (0) target = $region49
    $region48: #{tpu_custom_call.1} parent=1 // pred_region
      _
    $region49: #{tpu_custom_call.1} parent=1 // pred_fallthru
      _
    // Predicated region
    $region50: #{tpu_custom_call.1} parent=1 // pred_check
      _
    $region51: #{tpu_custom_call.1} parent=1 // pred_check_branch
      %118 = sbr.rel (0) target = $region53
    $region52: #{tpu_custom_call.1} parent=1 // pred_region
      _
    $region53: #{tpu_custom_call.1} parent=1 // pred_fallthru
      _
    // Predicated region
    $region54: #{tpu_custom_call.1} parent=1 // pred_check
      _
    $region55: #{tpu_custom_call.1} parent=1 // pred_check_branch
      %120 = sbr.rel (0) target = $region57
    $region56: #{tpu_custom_call.1} parent=1 // pred_region
      _
    $region57: #{tpu_custom_call.1} parent=1 // pred_fallthru
      _
    // Predicated region
    $region58: #{tpu_custom_call.1} parent=1 // pred_check
      _
    $region59: #{tpu_custom_call.1} parent=1 // pred_check_branch
      %122 = sbr.rel (0) target = $region61
    $region60: #{tpu_custom_call.1} parent=1 // pred_region
      _
    $region61: #{tpu_custom_call.1} parent=1 // pred_fallthru
      _
    // Predicated region
    $region62: #{tpu_custom_call.1} parent=1 // pred_check
      _
    $region63: #{tpu_custom_call.1} parent=1 // pred_check_branch
      %124 = sbr.rel (0) target = $region65
    $region64: #{tpu_custom_call.1} parent=1 // pred_region
      %s126 = ssub.s32 256, 256
      %127 = vsyncadd [#allocation14], %s126
      %s128 = sshll.u32 [#allocation13], 4
      %s129 = int_to_ptr.vmem [resolvable:$true] %s128
      %134 = dma.hbm_to_vmem [thread:$0]  %s15, 256, %s129, [#allocation14], 128, 128, 8
    $region65: #{tpu_custom_call.1} parent=1 // pred_fallthru
      _
    // Predicated region
    $region66: #{tpu_custom_call.1} parent=1 // pred_check
      _
    $region67: #{tpu_custom_call.1} parent=1 // pred_check_branch
      %136 = sbr.rel (0) target = $region69
    $region68: #{tpu_custom_call.1} parent=1 // pred_region
      _
    $region69: #{tpu_custom_call.1} parent=1 // pred_fallthru
      _
    // Predicated region
    $region70: #{tpu_custom_call.1} parent=1 // pred_check
      _
    $region71: #{tpu_custom_call.1} parent=1 // pred_check_branch
      %138 = sbr.rel (0) target = $region73
    $region72: #{tpu_custom_call.1} parent=1 // pred_region
      _
    $region73: #{tpu_custom_call.1} parent=1 // pred_fallthru
      _
    // Predicated region
    $region74: #{tpu_custom_call.1} parent=1 // pred_check
      _
    $region75: #{tpu_custom_call.1} parent=1 // pred_check_branch
      %140 = sbr.rel (0) target = $region77
    $region76: #{tpu_custom_call.1} parent=1 // pred_region
      _
    $region77: #{tpu_custom_call.1} parent=1 // pred_fallthru
      _
    // Predicated region
    $region78: #{tpu_custom_call.1} parent=1 // pred_check
      _
    $region79: #{tpu_custom_call.1} parent=1 // pred_check_branch
      %142 = sbr.rel (0) target = $region81
    $region80: #{tpu_custom_call.1} parent=1 // pred_region
      %143 = dma.done [#allocation3], 256
    $region81: #{tpu_custom_call.1} parent=1 // pred_fallthru
      _
    // Predicated region
    $region82: #{tpu_custom_call.1} parent=1 // pred_check
      _
    $region83: #{tpu_custom_call.1} parent=1 // pred_check_branch
      %145 = sbr.rel (0) target = $region85
    $region84: #{tpu_custom_call.1} parent=1 // pred_region
      %146 = dma.done [#allocation5], 256
    $region85: #{tpu_custom_call.1} parent=1 // pred_fallthru
      _
    // Predicated region
    $region86: #{tpu_custom_call.1} parent=1 // pred_check
      _
    $region87: #{tpu_custom_call.1} parent=1 // pred_check_branch
      %148 = sbr.rel (0) target = $region89
    $region88: #{tpu_custom_call.1} parent=1 // pred_region
      %149 = dma.done [#allocation5], 256
    $region89: #{tpu_custom_call.1} parent=1 // pred_fallthru
      _
    // Predicated region
    $region90: #{tpu_custom_call.1} parent=1 // pred_check
      _
    $region91: #{tpu_custom_call.1} parent=1 // pred_check_branch
      %151 = sbr.rel (0) target = $region93
    $region92: #{tpu_custom_call.1} parent=1 // pred_region
      %152 = dma.done [#allocation8], 16
    $region93: #{tpu_custom_call.1} parent=1 // pred_fallthru
      _
    // Predicated region
    $region94: #{tpu_custom_call.1} parent=1 // pred_check
      _
    $region95: #{tpu_custom_call.1} parent=1 // pred_check_branch
      %154 = sbr.rel (0) target = $region97
    $region96: #{tpu_custom_call.1} parent=1 // pred_region
      %155 = dma.done [#allocation8], 16
    $region97: #{tpu_custom_call.1} parent=1 // pred_fallthru
      _
    // Predicated region
    $region98: #{tpu_custom_call.1} parent=1 // pred_check
      _
    $region99: #{tpu_custom_call.1} parent=1 // pred_check_branch
      %157 = sbr.rel (0) target = $region101
    $region100: #{tpu_custom_call.1} parent=1 // pred_region
      %158 = dma.done [#allocation11], 16
    $region101: #{tpu_custom_call.1} parent=1 // pred_fallthru
      _
    // Predicated region
    $region102: #{tpu_custom_call.1} parent=1 // pred_check
      _
    $region103: #{tpu_custom_call.1} parent=1 // pred_check_branch
      %160 = sbr.rel (0) target = $region105
    $region104: #{tpu_custom_call.1} parent=1 // pred_region
      %161 = dma.done [#allocation11], 16
    $region105: #{tpu_custom_call.1} parent=1 // pred_fallthru
      _
    // Predicated region
    $region106: #{tpu_custom_call.1} parent=1 // pred_check
      _
    $region107: #{tpu_custom_call.1} parent=1 // pred_check_branch
      %163 = sbr.rel (0) target = $region109
    $region108: #{tpu_custom_call.1} parent=1 // pred_region
      %164 = dma.done [#allocation14], 256
    $region109: #{tpu_custom_call.1} parent=1 // pred_fallthru
      _
    %v165 = vld [vmem:[#allocation2] sm:$0xff]
    %v166 = vld [vmem:[#allocation2 + $0x8] sm:$0xff]
    %v167 = vld [vmem:[#allocation4] sm:$0xff]
    %v168 = vld [vmem:[#allocation4 + $0x8] sm:$0xff]
    %v169 = vld [vmem:[%s3] sm:$0xff]
    %v170 = vld [vmem:[%s3 + $0x8] sm:$0xff]
    %v171 = vld [vmem:[%s3 + $0x10] sm:$0xff]
    %v172 = vld [vmem:[%s3 + $0x18] sm:$0xff]
    %v173 = vld [vmem:[#allocation7] sm:$0x1]
    %v174 = vld [vmem:[%s5] sm:$0xff]
    %v175 = vld [vmem:[%s5 + $0x8] sm:$0xff]
    %v176 = vld [vmem:[%s5 + $0x10] sm:$0xff]
    %v177 = vld [vmem:[%s5 + $0x18] sm:$0xff]
    %v178 = vld [vmem:[#allocation9] sm:$0x1]
    %vm179 = vcmask 261120
    %v181 = vsel %vm179, %v165, 0
    %v184 = vsel %vm179, %v166, 0
    %186 = vmatprep.subr.mxu0 0.0
    %187 = vmatpush1.msra.mxu0 0.0
    %188 = vmatprep.subr.mxu0 0.0
    %189 = vmatpush1.msra.mxu0 0.0
    %190 = vmatprep.subr.mxu0 0.0
    %191 = vmatpush1.msra.mxu0 0.0
    %192 = vmatprep.subr.mxu0 0.0
    %193 = vmatpush1.msra.mxu0 0.0
    %194 = vmatprep.subr.mxu0 0.0
    %195 = vmatpush1.msra.mxu0 0.0
    %196 = vmatprep.subr.mxu0 0.0
    %197 = vmatpush1.msra.mxu0 0.0
    %198 = vmatprep.subr.mxu0 0.0
    %199 = vmatpush1.msra.mxu0 0.0
    %200 = vmatprep.subr.mxu0 0.0
    %201 = vmatpush1.msra.mxu0 0.0
    %202 = vmatprep.subr.mxu0 0.0
    %203 = vmatpush1.msra.mxu0 0.0
    %204 = vmatprep.subr.mxu0 0.0
    %205 = vmatpush1.msra.mxu0 0.0
    %206 = vmatprep.subr.mxu0 0.0
    %207 = vmatpush1.msra.mxu0 0.0
    %208 = vmatprep.subr.mxu0 0.0
    %209 = vmatpush1.msra.mxu0 0.0
    %210 = vmatprep.subr.mxu0 0.0
    %211 = vmatpush1.msra.mxu0 %v172
    %212 = vmatprep.subr.mxu0 0.0
    %213 = vmatpush1.msra.mxu0 %v171
    %214 = vmatprep.subr.mxu0 0.0
    %215 = vmatpush1.msra.mxu0 %v170
    %216 = vmatprep.subr.mxu0 0.0
    %217 = vmatpush1.msra.mxu0 %v169
    %218 = vmatprep.subr.mxu0 0.0
    %219 = vmatpush2.msra.mxu0 0.0
    %220 = vmatprep.subr.mxu0 0.0
    %221 = vmatpush2.msra.mxu0 0.0
    %222 = vmatprep.subr.mxu0 0.0
    %223 = vmatpush2.msra.mxu0 0.0
    %224 = vmatprep.subr.mxu0 0.0
    %225 = vmatpush2.msra.mxu0 0.0
    %226 = vmatprep.subr.mxu0 0.0
    %227 = vmatpush2.msra.mxu0 0.0
    %228 = vmatprep.subr.mxu0 0.0
    %229 = vmatpush2.msra.mxu0 0.0
    %230 = vmatprep.subr.mxu0 0.0
    %231 = vmatpush2.msra.mxu0 0.0
    %232 = vmatprep.subr.mxu0 0.0
    %233 = vmatpush2.msra.mxu0 0.0
    %234 = vmatprep.subr.mxu0 0.0
    %235 = vmatpush2.msra.mxu0 0.0
    %236 = vmatprep.subr.mxu0 0.0
    %237 = vmatpush2.msra.mxu0 0.0
    %238 = vmatprep.subr.mxu0 0.0
    %239 = vmatpush2.msra.mxu0 0.0
    %240 = vmatprep.subr.mxu0 0.0
    %241 = vmatpush2.msra.mxu0 0.0
    %242 = vmatprep.subr.mxu0 0.0
    %243 = vmatpush2.msra.mxu0 0.0
    %244 = vmatprep.subr.mxu0 0.0
    %245 = vmatpush2.msra.mxu0 0.0
    %246 = vmatprep.subr.mxu0 0.0
    %247 = vmatpush2.msra.mxu0 0.0
    %248 = vmatprep.subr.mxu0 0.0
    %249 = vmatpush2.msra.mxu0 0.0
    %250 = vmatprep.mubr.f32.mxu0 0.0
    %251 = vmatmul.mubr.f32.gmra.mxu0 %v181
    %v252 = vpop.f32.mrf.mxu0
    %v253 = vadd.f32 0.0, %v252
    %v254 = vpop.f32.mrf.mxu0
    %255 = vmatprep.mubr.f32.mxu0 0.0
    %256 = vmatmul.mubr.f32.gmra.mxu0 %v184
    %v257 = vpop.f32.mrf.mxu0
    %v258 = vadd.f32 0.0, %v257
    %v259 = vpop.f32.mrf.mxu0
    %260 = vdwg.mxu0
    %v262 = vlaneseq
    %v263 = vshrl.u32 %v262, 7
    %v264 = vsub.s32 0, %v263
    %v265 = vrot.slane %v173, %v264
    %vm267 = vcmask 130048
    %v269 = vsel %vm267, %v167, 0
    %v272 = vsel %vm267, %v168, 0
    %274 = vmatprep.subr.mxu0 0.0
    %275 = vmatpush1.msra.mxu0 0.0
    %276 = vmatprep.subr.mxu0 0.0
    %277 = vmatpush1.msra.mxu0 0.0
    %278 = vmatprep.subr.mxu0 0.0
    %279 = vmatpush1.msra.mxu0 0.0
    %280 = vmatprep.subr.mxu0 0.0
    %281 = vmatpush1.msra.mxu0 0.0
    %282 = vmatprep.subr.mxu0 0.0
    %283 = vmatpush1.msra.mxu0 0.0
    %284 = vmatprep.subr.mxu0 0.0
    %285 = vmatpush1.msra.mxu0 0.0
    %286 = vmatprep.subr.mxu0 0.0
    %287 = vmatpush1.msra.mxu0 0.0
    %288 = vmatprep.subr.mxu0 0.0
    %289 = vmatpush1.msra.mxu0 0.0
    %290 = vmatprep.subr.mxu0 0.0
    %291 = vmatpush1.msra.mxu0 0.0
    %292 = vmatprep.subr.mxu0 0.0
    %293 = vmatpush1.msra.mxu0 0.0
    %294 = vmatprep.subr.mxu0 0.0
    %295 = vmatpush1.msra.mxu0 0.0
    %296 = vmatprep.subr.mxu0 0.0
    %297 = vmatpush1.msra.mxu0 0.0
    %298 = vmatprep.subr.mxu0 0.0
    %299 = vmatpush1.msra.mxu0 0.0
    %300 = vmatprep.subr.mxu0 0.0
    %301 = vmatpush1.msra.mxu0 0.0
    %302 = vmatprep.subr.mxu0 0.0
    %303 = vmatpush1.msra.mxu0 %v258
    %304 = vmatprep.subr.mxu0 0.0
    %305 = vmatpush1.msra.mxu0 %v253
    %306 = vmatprep.subr.mxu0 0.0
    %307 = vmatpush2.msra.mxu0 0.0
    %308 = vmatprep.subr.mxu0 0.0
    %309 = vmatpush2.msra.mxu0 0.0
    %310 = vmatprep.subr.mxu0 0.0
    %311 = vmatpush2.msra.mxu0 0.0
    %312 = vmatprep.subr.mxu0 0.0
    %313 = vmatpush2.msra.mxu0 0.0
    %314 = vmatprep.subr.mxu0 0.0
    %315 = vmatpush2.msra.mxu0 0.0
    %316 = vmatprep.subr.mxu0 0.0
    %317 = vmatpush2.msra.mxu0 0.0
    %318 = vmatprep.subr.mxu0 0.0
    %319 = vmatpush2.msra.mxu0 0.0
    %320 = vmatprep.subr.mxu0 0.0
    %321 = vmatpush2.msra.mxu0 0.0
    %322 = vmatprep.subr.mxu0 0.0
    %323 = vmatpush2.msra.mxu0 0.0
    %324 = vmatprep.subr.mxu0 0.0
    %325 = vmatpush2.msra.mxu0 0.0
    %326 = vmatprep.subr.mxu0 0.0
    %327 = vmatpush2.msra.mxu0 0.0
    %328 = vmatprep.subr.mxu0 0.0
    %329 = vmatpush2.msra.mxu0 0.0
    %330 = vmatprep.subr.mxu0 0.0
    %331 = vmatpush2.msra.mxu0 0.0
    %332 = vmatprep.subr.mxu0 0.0
    %333 = vmatpush2.msra.mxu0 0.0
    %334 = vmatprep.subr.mxu0 0.0
    %335 = vmatpush2.msra.mxu0 0.0
    %336 = vmatprep.subr.mxu0 0.0
    %337 = vmatpush2.msra.mxu0 0.0
    %338 = vmatprep.mubr.f32.mxu0 0.0
    %339 = vmatmul.mubr.f32.gmra.mxu0 %v269
    %v340 = vpop.f32.mrf.mxu0
    %v341 = vadd.f32 %v265, %v340
    %v342 = vpop.f32.mrf.mxu0
    %343 = vmatprep.mubr.f32.mxu0 0.0
    %344 = vmatmul.mubr.f32.gmra.mxu0 %v272
    %v345 = vpop.f32.mrf.mxu0
    %v346 = vadd.f32 %v265, %v345
    %v347 = vpop.f32.mrf.mxu0
    %348 = vdwg.mxu0
    %v349 = vmax.f32 %v341, 0.0
    %v350 = vmax.f32 %v346, 0.0
    %v352 = vsel %vm179, %v349, 0
    %v355 = vsel %vm179, %v350, 0
    %357 = vmatprep.subr.mxu0 0.0
    %358 = vmatpush1.msra.mxu0 0.0
    %359 = vmatprep.subr.mxu0 0.0
    %360 = vmatpush1.msra.mxu0 0.0
    %361 = vmatprep.subr.mxu0 0.0
    %362 = vmatpush1.msra.mxu0 0.0
    %363 = vmatprep.subr.mxu0 0.0
    %364 = vmatpush1.msra.mxu0 0.0
    %365 = vmatprep.subr.mxu0 0.0
    %366 = vmatpush1.msra.mxu0 0.0
    %367 = vmatprep.subr.mxu0 0.0
    %368 = vmatpush1.msra.mxu0 0.0
    %369 = vmatprep.subr.mxu0 0.0
    %370 = vmatpush1.msra.mxu0 0.0
    %371 = vmatprep.subr.mxu0 0.0
    %372 = vmatpush1.msra.mxu0 0.0
    %373 = vmatprep.subr.mxu0 0.0
    %374 = vmatpush1.msra.mxu0 0.0
    %375 = vmatprep.subr.mxu0 0.0
    %376 = vmatpush1.msra.mxu0 0.0
    %377 = vmatprep.subr.mxu0 0.0
    %378 = vmatpush1.msra.mxu0 0.0
    %379 = vmatprep.subr.mxu0 0.0
    %380 = vmatpush1.msra.mxu0 0.0
    %381 = vmatprep.subr.mxu0 0.0
    %382 = vmatpush1.msra.mxu0 %v177
    %383 = vmatprep.subr.mxu0 0.0
    %384 = vmatpush1.msra.mxu0 %v176
    %385 = vmatprep.subr.mxu0 0.0
    %386 = vmatpush1.msra.mxu0 %v175
    %387 = vmatprep.subr.mxu0 0.0
    %388 = vmatpush1.msra.mxu0 %v174
    %389 = vmatprep.subr.mxu0 0.0
    %390 = vmatpush2.msra.mxu0 0.0
    %391 = vmatprep.subr.mxu0 0.0
    %392 = vmatpush2.msra.mxu0 0.0
    %393 = vmatprep.subr.mxu0 0.0
    %394 = vmatpush2.msra.mxu0 0.0
    %395 = vmatprep.subr.mxu0 0.0
    %396 = vmatpush2.msra.mxu0 0.0
    %397 = vmatprep.subr.mxu0 0.0
    %398 = vmatpush2.msra.mxu0 0.0
    %399 = vmatprep.subr.mxu0 0.0
    %400 = vmatpush2.msra.mxu0 0.0
    %401 = vmatprep.subr.mxu0 0.0
    %402 = vmatpush2.msra.mxu0 0.0
    %403 = vmatprep.subr.mxu0 0.0
    %404 = vmatpush2.msra.mxu0 0.0
    %405 = vmatprep.subr.mxu0 0.0
    %406 = vmatpush2.msra.mxu0 0.0
    %407 = vmatprep.subr.mxu0 0.0
    %408 = vmatpush2.msra.mxu0 0.0
    %409 = vmatprep.subr.mxu0 0.0
    %410 = vmatpush2.msra.mxu0 0.0
    %411 = vmatprep.subr.mxu0 0.0
    %412 = vmatpush2.msra.mxu0 0.0
    %413 = vmatprep.subr.mxu0 0.0
    %414 = vmatpush2.msra.mxu0 0.0
    %415 = vmatprep.subr.mxu0 0.0
    %416 = vmatpush2.msra.mxu0 0.0
    %417 = vmatprep.subr.mxu0 0.0
    %418 = vmatpush2.msra.mxu0 0.0
    %419 = vmatprep.subr.mxu0 0.0
    %420 = vmatpush2.msra.mxu0 0.0
    %421 = vmatprep.mubr.f32.mxu0 0.0
    %422 = vmatmul.mubr.f32.gmra.mxu0 %v352
    %v423 = vpop.f32.mrf.mxu0
    %v424 = vadd.f32 0.0, %v423
    %v425 = vpop.f32.mrf.mxu0
    %426 = vmatprep.mubr.f32.mxu0 0.0
    %427 = vmatmul.mubr.f32.gmra.mxu0 %v355
    %v428 = vpop.f32.mrf.mxu0
    %v429 = vadd.f32 0.0, %v428
    %v430 = vpop.f32.mrf.mxu0
    %431 = vdwg.mxu0
    %v433 = vlaneseq
    %v434 = vshrl.u32 %v433, 7
    %v435 = vsub.s32 0, %v434
    %v436 = vrot.slane %v178, %v435
    %438 = vmatprep.subr.mxu0 0.0
    %439 = vmatpush1.msra.mxu0 0.0
    %440 = vmatprep.subr.mxu0 0.0
    %441 = vmatpush1.msra.mxu0 0.0
    %442 = vmatprep.subr.mxu0 0.0
    %443 = vmatpush1.msra.mxu0 0.0
    %444 = vmatprep.subr.mxu0 0.0
    %445 = vmatpush1.msra.mxu0 0.0
    %446 = vmatprep.subr.mxu0 0.0
    %447 = vmatpush1.msra.mxu0 0.0
    %448 = vmatprep.subr.mxu0 0.0
    %449 = vmatpush1.msra.mxu0 0.0
    %450 = vmatprep.subr.mxu0 0.0
    %451 = vmatpush1.msra.mxu0 0.0
    %452 = vmatprep.subr.mxu0 0.0
    %453 = vmatpush1.msra.mxu0 0.0
    %454 = vmatprep.subr.mxu0 0.0
    %455 = vmatpush1.msra.mxu0 0.0
    %456 = vmatprep.subr.mxu0 0.0
    %457 = vmatpush1.msra.mxu0 0.0
    %458 = vmatprep.subr.mxu0 0.0
    %459 = vmatpush1.msra.mxu0 0.0
    %460 = vmatprep.subr.mxu0 0.0
    %461 = vmatpush1.msra.mxu0 0.0
    %462 = vmatprep.subr.mxu0 0.0
    %463 = vmatpush1.msra.mxu0 0.0
    %464 = vmatprep.subr.mxu0 0.0
    %465 = vmatpush1.msra.mxu0 0.0
    %466 = vmatprep.subr.mxu0 0.0
    %467 = vmatpush1.msra.mxu0 %v429
    %468 = vmatprep.subr.mxu0 0.0
    %469 = vmatpush1.msra.mxu0 %v424
    %470 = vmatprep.subr.mxu0 0.0
    %471 = vmatpush2.msra.mxu0 0.0
    %472 = vmatprep.subr.mxu0 0.0
    %473 = vmatpush2.msra.mxu0 0.0
    %474 = vmatprep.subr.mxu0 0.0
    %475 = vmatpush2.msra.mxu0 0.0
    %476 = vmatprep.subr.mxu0 0.0
    %477 = vmatpush2.msra.mxu0 0.0
    %478 = vmatprep.subr.mxu0 0.0
    %479 = vmatpush2.msra.mxu0 0.0
    %480 = vmatprep.subr.mxu0 0.0
    %481 = vmatpush2.msra.mxu0 0.0
    %482 = vmatprep.subr.mxu0 0.0
    %483 = vmatpush2.msra.mxu0 0.0
    %484 = vmatprep.subr.mxu0 0.0
    %485 = vmatpush2.msra.mxu0 0.0
    %486 = vmatprep.subr.mxu0 0.0
    %487 = vmatpush2.msra.mxu0 0.0
    %488 = vmatprep.subr.mxu0 0.0
    %489 = vmatpush2.msra.mxu0 0.0
    %490 = vmatprep.subr.mxu0 0.0
    %491 = vmatpush2.msra.mxu0 0.0
    %492 = vmatprep.subr.mxu0 0.0
    %493 = vmatpush2.msra.mxu0 0.0
    %494 = vmatprep.subr.mxu0 0.0
    %495 = vmatpush2.msra.mxu0 0.0
    %496 = vmatprep.subr.mxu0 0.0
    %497 = vmatpush2.msra.mxu0 0.0
    %498 = vmatprep.subr.mxu0 0.0
    %499 = vmatpush2.msra.mxu0 0.0
    %500 = vmatprep.subr.mxu0 0.0
    %501 = vmatpush2.msra.mxu0 0.0
    %502 = vmatprep.mubr.f32.mxu0 0.0
    %503 = vmatmul.mubr.f32.gmra.mxu0 %v269
    %v504 = vpop.f32.mrf.mxu0
    %v505 = vadd.f32 %v436, %v504
    %v506 = vpop.f32.mrf.mxu0
    %507 = vmatprep.mubr.f32.mxu0 0.0
    %508 = vmatmul.mubr.f32.gmra.mxu0 %v272
    %v509 = vpop.f32.mrf.mxu0
    %v510 = vadd.f32 %v436, %v509
    %v511 = vpop.f32.mrf.mxu0
    %512 = vdwg.mxu0
    %v513 = vld [vmem:[#allocation6] sm:$0xff]
    %v514 = vld [vmem:[#allocation6 + $0x8] sm:$0xff]
    %v515 = vld [vmem:[%s7] sm:$0xff]
    %v516 = vld [vmem:[%s7 + $0x8] sm:$0xff]
    %v517 = vld [vmem:[%s7 + $0x10] sm:$0xff]
    %v518 = vld [vmem:[%s7 + $0x18] sm:$0xff]
    %v519 = vld [vmem:[#allocation10] sm:$0x1]
    %v520 = vld [vmem:[%s9] sm:$0xff]
    %v521 = vld [vmem:[%s9 + $0x8] sm:$0xff]
    %v522 = vld [vmem:[%s9 + $0x10] sm:$0xff]
    %v523 = vld [vmem:[%s9 + $0x18] sm:$0xff]
    %v524 = vld [vmem:[#allocation12] sm:$0x1]
    %525 = vmatprep.subr.mxu0 0.0
    %526 = vmatpush1.msra.mxu0 0.0
    %527 = vmatprep.subr.mxu0 0.0
    %528 = vmatpush1.msra.mxu0 0.0
    %529 = vmatprep.subr.mxu0 0.0
    %530 = vmatpush1.msra.mxu0 0.0
    %531 = vmatprep.subr.mxu0 0.0
    %532 = vmatpush1.msra.mxu0 0.0
    %533 = vmatprep.subr.mxu0 0.0
    %534 = vmatpush1.msra.mxu0 0.0
    %535 = vmatprep.subr.mxu0 0.0
    %536 = vmatpush1.msra.mxu0 0.0
    %537 = vmatprep.subr.mxu0 0.0
    %538 = vmatpush1.msra.mxu0 0.0
    %539 = vmatprep.subr.mxu0 0.0
    %540 = vmatpush1.msra.mxu0 0.0
    %541 = vmatprep.subr.mxu0 0.0
    %542 = vmatpush1.msra.mxu0 0.0
    %543 = vmatprep.subr.mxu0 0.0
    %544 = vmatpush1.msra.mxu0 0.0
    %545 = vmatprep.subr.mxu0 0.0
    %546 = vmatpush1.msra.mxu0 0.0
    %547 = vmatprep.subr.mxu0 0.0
    %548 = vmatpush1.msra.mxu0 0.0
    %549 = vmatprep.subr.mxu0 0.0
    %550 = vmatpush1.msra.mxu0 %v518
    %551 = vmatprep.subr.mxu0 0.0
    %552 = vmatpush1.msra.mxu0 %v517
    %553 = vmatprep.subr.mxu0 0.0
    %554 = vmatpush1.msra.mxu0 %v516
    %555 = vmatprep.subr.mxu0 0.0
    %556 = vmatpush1.msra.mxu0 %v515
    %557 = vmatprep.subr.mxu0 0.0
    %558 = vmatpush2.msra.mxu0 0.0
    %559 = vmatprep.subr.mxu0 0.0
    %560 = vmatpush2.msra.mxu0 0.0
    %561 = vmatprep.subr.mxu0 0.0
    %562 = vmatpush2.msra.mxu0 0.0
    %563 = vmatprep.subr.mxu0 0.0
    %564 = vmatpush2.msra.mxu0 0.0
    %565 = vmatprep.subr.mxu0 0.0
    %566 = vmatpush2.msra.mxu0 0.0
    %567 = vmatprep.subr.mxu0 0.0
    %568 = vmatpush2.msra.mxu0 0.0
    %569 = vmatprep.subr.mxu0 0.0
    %570 = vmatpush2.msra.mxu0 0.0
    %571 = vmatprep.subr.mxu0 0.0
    %572 = vmatpush2.msra.mxu0 0.0
    %573 = vmatprep.subr.mxu0 0.0
    %574 = vmatpush2.msra.mxu0 0.0
    %575 = vmatprep.subr.mxu0 0.0
    %576 = vmatpush2.msra.mxu0 0.0
    %577 = vmatprep.subr.mxu0 0.0
    %578 = vmatpush2.msra.mxu0 0.0
    %579 = vmatprep.subr.mxu0 0.0
    %580 = vmatpush2.msra.mxu0 0.0
    %581 = vmatprep.subr.mxu0 0.0
    %582 = vmatpush2.msra.mxu0 0.0
    %583 = vmatprep.subr.mxu0 0.0
    %584 = vmatpush2.msra.mxu0 0.0
    %585 = vmatprep.subr.mxu0 0.0
    %586 = vmatpush2.msra.mxu0 0.0
    %587 = vmatprep.subr.mxu0 0.0
    %588 = vmatpush2.msra.mxu0 0.0
    %589 = vmatprep.mubr.f32.mxu0 0.0
    %590 = vmatmul.mubr.f32.gmra.mxu0 %v181
    %v591 = vpop.f32.mrf.mxu0
    %v592 = vadd.f32 0.0, %v591
    %v593 = vpop.f32.mrf.mxu0
    %594 = vmatprep.mubr.f32.mxu0 0.0
    %595 = vmatmul.mubr.f32.gmra.mxu0 %v184
    %v596 = vpop.f32.mrf.mxu0
    %v597 = vadd.f32 0.0, %v596
    %v598 = vpop.f32.mrf.mxu0
    %599 = vdwg.mxu0
    %v601 = vlaneseq
    %v602 = vshrl.u32 %v601, 7
    %v603 = vsub.s32 0, %v602
    %v604 = vrot.slane %v519, %v603
    %v607 = vsel %vm267, %v513, 0
    %v610 = vsel %vm267, %v514, 0
    %612 = vmatprep.subr.mxu0 0.0
    %613 = vmatpush1.msra.mxu0 0.0
    %614 = vmatprep.subr.mxu0 0.0
    %615 = vmatpush1.msra.mxu0 0.0
    %616 = vmatprep.subr.mxu0 0.0
    %617 = vmatpush1.msra.mxu0 0.0
    %618 = vmatprep.subr.mxu0 0.0
    %619 = vmatpush1.msra.mxu0 0.0
    %620 = vmatprep.subr.mxu0 0.0
    %621 = vmatpush1.msra.mxu0 0.0
    %622 = vmatprep.subr.mxu0 0.0
    %623 = vmatpush1.msra.mxu0 0.0
    %624 = vmatprep.subr.mxu0 0.0
    %625 = vmatpush1.msra.mxu0 0.0
    %626 = vmatprep.subr.mxu0 0.0
    %627 = vmatpush1.msra.mxu0 0.0
    %628 = vmatprep.subr.mxu0 0.0
    %629 = vmatpush1.msra.mxu0 0.0
    %630 = vmatprep.subr.mxu0 0.0
    %631 = vmatpush1.msra.mxu0 0.0
    %632 = vmatprep.subr.mxu0 0.0
    %633 = vmatpush1.msra.mxu0 0.0
    %634 = vmatprep.subr.mxu0 0.0
    %635 = vmatpush1.msra.mxu0 0.0
    %636 = vmatprep.subr.mxu0 0.0
    %637 = vmatpush1.msra.mxu0 0.0
    %638 = vmatprep.subr.mxu0 0.0
    %639 = vmatpush1.msra.mxu0 0.0
    %640 = vmatprep.subr.mxu0 0.0
    %641 = vmatpush1.msra.mxu0 %v597
    %642 = vmatprep.subr.mxu0 0.0
    %643 = vmatpush1.msra.mxu0 %v592
    %644 = vmatprep.subr.mxu0 0.0
    %645 = vmatpush2.msra.mxu0 0.0
    %646 = vmatprep.subr.mxu0 0.0
    %647 = vmatpush2.msra.mxu0 0.0
    %648 = vmatprep.subr.mxu0 0.0
    %649 = vmatpush2.msra.mxu0 0.0
    %650 = vmatprep.subr.mxu0 0.0
    %651 = vmatpush2.msra.mxu0 0.0
    %652 = vmatprep.subr.mxu0 0.0
    %653 = vmatpush2.msra.mxu0 0.0
    %654 = vmatprep.subr.mxu0 0.0
    %655 = vmatpush2.msra.mxu0 0.0
    %656 = vmatprep.subr.mxu0 0.0
    %657 = vmatpush2.msra.mxu0 0.0
    %658 = vmatprep.subr.mxu0 0.0
    %659 = vmatpush2.msra.mxu0 0.0
    %660 = vmatprep.subr.mxu0 0.0
    %661 = vmatpush2.msra.mxu0 0.0
    %662 = vmatprep.subr.mxu0 0.0
    %663 = vmatpush2.msra.mxu0 0.0
    %664 = vmatprep.subr.mxu0 0.0
    %665 = vmatpush2.msra.mxu0 0.0
    %666 = vmatprep.subr.mxu0 0.0
    %667 = vmatpush2.msra.mxu0 0.0
    %668 = vmatprep.subr.mxu0 0.0
    %669 = vmatpush2.msra.mxu0 0.0
    %670 = vmatprep.subr.mxu0 0.0
    %671 = vmatpush2.msra.mxu0 0.0
    %672 = vmatprep.subr.mxu0 0.0
    %673 = vmatpush2.msra.mxu0 0.0
    %674 = vmatprep.subr.mxu0 0.0
    %675 = vmatpush2.msra.mxu0 0.0
    %676 = vmatprep.mubr.f32.mxu0 0.0
    %677 = vmatmul.mubr.f32.gmra.mxu0 %v607
    %v678 = vpop.f32.mrf.mxu0
    %v679 = vadd.f32 %v604, %v678
    %v680 = vpop.f32.mrf.mxu0
    %681 = vmatprep.mubr.f32.mxu0 0.0
    %682 = vmatmul.mubr.f32.gmra.mxu0 %v610
    %v683 = vpop.f32.mrf.mxu0
    %v684 = vadd.f32 %v604, %v683
    %v685 = vpop.f32.mrf.mxu0
    %686 = vdwg.mxu0
    %v687 = vmax.f32 %v679, 0.0
    %v688 = vmax.f32 %v684, 0.0
    %v690 = vsel %vm179, %v687, 0
    %v693 = vsel %vm179, %v688, 0
    %695 = vmatprep.subr.mxu0 0.0
    %696 = vmatpush1.msra.mxu0 0.0
    %697 = vmatprep.subr.mxu0 0.0
    %698 = vmatpush1.msra.mxu0 0.0
    %699 = vmatprep.subr.mxu0 0.0
    %700 = vmatpush1.msra.mxu0 0.0
    %701 = vmatprep.subr.mxu0 0.0
    %702 = vmatpush1.msra.mxu0 0.0
    %703 = vmatprep.subr.mxu0 0.0
    %704 = vmatpush1.msra.mxu0 0.0
    %705 = vmatprep.subr.mxu0 0.0
    %706 = vmatpush1.msra.mxu0 0.0
    %707 = vmatprep.subr.mxu0 0.0
    %708 = vmatpush1.msra.mxu0 0.0
    %709 = vmatprep.subr.mxu0 0.0
    %710 = vmatpush1.msra.mxu0 0.0
    %711 = vmatprep.subr.mxu0 0.0
    %712 = vmatpush1.msra.mxu0 0.0
    %713 = vmatprep.subr.mxu0 0.0
    %714 = vmatpush1.msra.mxu0 0.0
    %715 = vmatprep.subr.mxu0 0.0
    %716 = vmatpush1.msra.mxu0 0.0
    %717 = vmatprep.subr.mxu0 0.0
    %718 = vmatpush1.msra.mxu0 0.0
    %719 = vmatprep.subr.mxu0 0.0
    %720 = vmatpush1.msra.mxu0 %v523
    %721 = vmatprep.subr.mxu0 0.0
    %722 = vmatpush1.msra.mxu0 %v522
    %723 = vmatprep.subr.mxu0 0.0
    %724 = vmatpush1.msra.mxu0 %v521
    %725 = vmatprep.subr.mxu0 0.0
    %726 = vmatpush1.msra.mxu0 %v520
    %727 = vmatprep.subr.mxu0 0.0
    %728 = vmatpush2.msra.mxu0 0.0
    %729 = vmatprep.subr.mxu0 0.0
    %730 = vmatpush2.msra.mxu0 0.0
    %731 = vmatprep.subr.mxu0 0.0
    %732 = vmatpush2.msra.mxu0 0.0
    %733 = vmatprep.subr.mxu0 0.0
    %734 = vmatpush2.msra.mxu0 0.0
    %735 = vmatprep.subr.mxu0 0.0
    %736 = vmatpush2.msra.mxu0 0.0
    %737 = vmatprep.subr.mxu0 0.0
    %738 = vmatpush2.msra.mxu0 0.0
    %739 = vmatprep.subr.mxu0 0.0
    %740 = vmatpush2.msra.mxu0 0.0
    %741 = vmatprep.subr.mxu0 0.0
    %742 = vmatpush2.msra.mxu0 0.0
    %743 = vmatprep.subr.mxu0 0.0
    %744 = vmatpush2.msra.mxu0 0.0
    %745 = vmatprep.subr.mxu0 0.0
    %746 = vmatpush2.msra.mxu0 0.0
    %747 = vmatprep.subr.mxu0 0.0
    %748 = vmatpush2.msra.mxu0 0.0
    %749 = vmatprep.subr.mxu0 0.0
    %750 = vmatpush2.msra.mxu0 0.0
    %751 = vmatprep.subr.mxu0 0.0
    %752 = vmatpush2.msra.mxu0 0.0
    %753 = vmatprep.subr.mxu0 0.0
    %754 = vmatpush2.msra.mxu0 0.0
    %755 = vmatprep.subr.mxu0 0.0
    %756 = vmatpush2.msra.mxu0 0.0
    %757 = vmatprep.subr.mxu0 0.0
    %758 = vmatpush2.msra.mxu0 0.0
    %759 = vmatprep.mubr.f32.mxu0 0.0
    %760 = vmatmul.mubr.f32.gmra.mxu0 %v690
    %v761 = vpop.f32.mrf.mxu0
    %v762 = vadd.f32 0.0, %v761
    %v763 = vpop.f32.mrf.mxu0
    %764 = vmatprep.mubr.f32.mxu0 0.0
    %765 = vmatmul.mubr.f32.gmra.mxu0 %v693
    %v766 = vpop.f32.mrf.mxu0
    %v767 = vadd.f32 0.0, %v766
    %v768 = vpop.f32.mrf.mxu0
    %769 = vdwg.mxu0
    %v771 = vlaneseq
    %v772 = vshrl.u32 %v771, 7
    %v773 = vsub.s32 0, %v772
    %v774 = vrot.slane %v524, %v773
    %776 = vmatprep.subr.mxu0 0.0
    %777 = vmatpush1.msra.mxu0 0.0
    %778 = vmatprep.subr.mxu0 0.0
    %779 = vmatpush1.msra.mxu0 0.0
    %780 = vmatprep.subr.mxu0 0.0
    %781 = vmatpush1.msra.mxu0 0.0
    %782 = vmatprep.subr.mxu0 0.0
    %783 = vmatpush1.msra.mxu0 0.0
    %784 = vmatprep.subr.mxu0 0.0
    %785 = vmatpush1.msra.mxu0 0.0
    %786 = vmatprep.subr.mxu0 0.0
    %787 = vmatpush1.msra.mxu0 0.0
    %788 = vmatprep.subr.mxu0 0.0
    %789 = vmatpush1.msra.mxu0 0.0
    %790 = vmatprep.subr.mxu0 0.0
    %791 = vmatpush1.msra.mxu0 0.0
    %792 = vmatprep.subr.mxu0 0.0
    %793 = vmatpush1.msra.mxu0 0.0
    %794 = vmatprep.subr.mxu0 0.0
    %795 = vmatpush1.msra.mxu0 0.0
    %796 = vmatprep.subr.mxu0 0.0
    %797 = vmatpush1.msra.mxu0 0.0
    %798 = vmatprep.subr.mxu0 0.0
    %799 = vmatpush1.msra.mxu0 0.0
    %800 = vmatprep.subr.mxu0 0.0
    %801 = vmatpush1.msra.mxu0 0.0
    %802 = vmatprep.subr.mxu0 0.0
    %803 = vmatpush1.msra.mxu0 0.0
    %804 = vmatprep.subr.mxu0 0.0
    %805 = vmatpush1.msra.mxu0 %v767
    %806 = vmatprep.subr.mxu0 0.0
    %807 = vmatpush1.msra.mxu0 %v762
    %808 = vmatprep.subr.mxu0 0.0
    %809 = vmatpush2.msra.mxu0 0.0
    %810 = vmatprep.subr.mxu0 0.0
    %811 = vmatpush2.msra.mxu0 0.0
    %812 = vmatprep.subr.mxu0 0.0
    %813 = vmatpush2.msra.mxu0 0.0
    %814 = vmatprep.subr.mxu0 0.0
    %815 = vmatpush2.msra.mxu0 0.0
    %816 = vmatprep.subr.mxu0 0.0
    %817 = vmatpush2.msra.mxu0 0.0
    %818 = vmatprep.subr.mxu0 0.0
    %819 = vmatpush2.msra.mxu0 0.0
    %820 = vmatprep.subr.mxu0 0.0
    %821 = vmatpush2.msra.mxu0 0.0
    %822 = vmatprep.subr.mxu0 0.0
    %823 = vmatpush2.msra.mxu0 0.0
    %824 = vmatprep.subr.mxu0 0.0
    %825 = vmatpush2.msra.mxu0 0.0
    %826 = vmatprep.subr.mxu0 0.0
    %827 = vmatpush2.msra.mxu0 0.0
    %828 = vmatprep.subr.mxu0 0.0
    %829 = vmatpush2.msra.mxu0 0.0
    %830 = vmatprep.subr.mxu0 0.0
    %831 = vmatpush2.msra.mxu0 0.0
    %832 = vmatprep.subr.mxu0 0.0
    %833 = vmatpush2.msra.mxu0 0.0
    %834 = vmatprep.subr.mxu0 0.0
    %835 = vmatpush2.msra.mxu0 0.0
    %836 = vmatprep.subr.mxu0 0.0
    %837 = vmatpush2.msra.mxu0 0.0
    %838 = vmatprep.subr.mxu0 0.0
    %839 = vmatpush2.msra.mxu0 0.0
    %840 = vmatprep.mubr.f32.mxu0 0.0
    %841 = vmatmul.mubr.f32.gmra.mxu0 %v607
    %v842 = vpop.f32.mrf.mxu0
    %v843 = vadd.f32 %v774, %v842
    %v844 = vpop.f32.mrf.mxu0
    %845 = vmatprep.mubr.f32.mxu0 0.0
    %846 = vmatmul.mubr.f32.gmra.mxu0 %v610
    %v847 = vpop.f32.mrf.mxu0
    %v848 = vadd.f32 %v774, %v847
    %v849 = vpop.f32.mrf.mxu0
    %850 = vdwg.mxu0
    %v851 = vld [vmem:[%s11] sm:$0xff]
    %v852 = vld [vmem:[%s11 + $0x8] sm:$0xff]
    %v853 = vld [vmem:[%s11 + $0x10] sm:$0xff]
    %v854 = vld [vmem:[%s11 + $0x18] sm:$0xff]
    %v855 = vld [vmem:[%s11 + $0x20] sm:$0xff]
    %v856 = vld [vmem:[%s11 + $0x28] sm:$0xff]
    %v857 = vld [vmem:[%s11 + $0x30] sm:$0xff]
    %v858 = vld [vmem:[%s11 + $0x38] sm:$0xff]
    %v859 = vld [vmem:[%s11 + $0x40] sm:$0xff]
    %v860 = vld [vmem:[%s11 + $0x48] sm:$0xff]
    %v861 = vld [vmem:[%s11 + $0x50] sm:$0xff]
    %v862 = vld [vmem:[%s11 + $0x58] sm:$0xff]
    %v863 = vld [vmem:[%s11 + $0x60] sm:$0xff]
    %v864 = vld [vmem:[%s11 + $0x68] sm:$0xff]
    %v865 = vld [vmem:[%s11 + $0x70] sm:$0xff]
    %v866 = vld [vmem:[%s11 + $0x78] sm:$0xff]
    %v867 = vld [vmem:[%s11 + $0x80] sm:$0xff]
    %v868 = vld [vmem:[%s11 + $0x88] sm:$0xff]
    %v869 = vld [vmem:[%s11 + $0x90] sm:$0xff]
    %v870 = vld [vmem:[%s11 + $0x98] sm:$0xff]
    %v871 = vld [vmem:[%s11 + $0xa0] sm:$0xff]
    %v872 = vld [vmem:[%s11 + $0xa8] sm:$0xff]
    %v873 = vld [vmem:[%s11 + $0xb0] sm:$0xff]
    %v874 = vld [vmem:[%s11 + $0xb8] sm:$0xff]
    %v875 = vld [vmem:[%s11 + $0xc0] sm:$0xff]
    %v876 = vld [vmem:[%s11 + $0xc8] sm:$0xff]
    %v877 = vld [vmem:[%s11 + $0xd0] sm:$0xff]
    %v878 = vld [vmem:[%s11 + $0xd8] sm:$0xff]
    %v879 = vld [vmem:[%s11 + $0xe0] sm:$0xff]
    %v880 = vld [vmem:[%s11 + $0xe8] sm:$0xff]
    %v881 = vld [vmem:[%s11 + $0xf0] sm:$0xff]
    %v882 = vld [vmem:[%s11 + $0xf8] sm:$0xff]
    %v884 = vsel %vm267, %v851, 0
    %v887 = vsel %vm267, %v852, 0
    %v890 = vsel %vm267, %v853, 0
    %v893 = vsel %vm267, %v854, 0
    %v896 = vsel %vm267, %v855, 0
    %v899 = vsel %vm267, %v856, 0
    %v902 = vsel %vm267, %v857, 0
    %v905 = vsel %vm267, %v858, 0
    %v908 = vsel %vm267, %v859, 0
    %v911 = vsel %vm267, %v860, 0
    %v914 = vsel %vm267, %v861, 0
    %v917 = vsel %vm267, %v862, 0
    %v920 = vsel %vm267, %v863, 0
    %v923 = vsel %vm267, %v864, 0
    %v926 = vsel %vm267, %v865, 0
    %v929 = vsel %vm267, %v866, 0
    %v932 = vsel %vm267, %v867, 0
    %v935 = vsel %vm267, %v868, 0
    %v938 = vsel %vm267, %v869, 0
    %v941 = vsel %vm267, %v870, 0
    %v944 = vsel %vm267, %v871, 0
    %v947 = vsel %vm267, %v872, 0
    %v950 = vsel %vm267, %v873, 0
    %v953 = vsel %vm267, %v874, 0
    %v956 = vsel %vm267, %v875, 0
    %v959 = vsel %vm267, %v876, 0
    %v962 = vsel %vm267, %v877, 0
    %v965 = vsel %vm267, %v878, 0
    %v968 = vsel %vm267, %v879, 0
    %v971 = vsel %vm267, %v880, 0
    %v974 = vsel %vm267, %v881, 0
    %v977 = vsel %vm267, %v882, 0
    %v980 = vsel %vm267, %v505, 0
    %v983 = vsel %vm267, %v510, 0
    %985 = vmatprep.subr.mxu0 0.0
    %986 = vmatpush1.xpose.msra.mxu0 0.0
    %987 = vmatprep.subr.mxu0 0.0
    %988 = vmatpush1.xpose.msra.mxu0 0.0
    %989 = vmatprep.subr.mxu0 0.0
    %990 = vmatpush1.xpose.msra.mxu0 0.0
    %991 = vmatprep.subr.mxu0 0.0
    %992 = vmatpush1.xpose.msra.mxu0 0.0
    %993 = vmatprep.subr.mxu0 0.0
    %994 = vmatpush1.xpose.msra.mxu0 0.0
    %995 = vmatprep.subr.mxu0 0.0
    %996 = vmatpush1.xpose.msra.mxu0 0.0
    %997 = vmatprep.subr.mxu0 0.0
    %998 = vmatpush1.xpose.msra.mxu0 0.0
    %999 = vmatprep.subr.mxu0 0.0
    %1000 = vmatpush1.xpose.msra.mxu0 0.0
    %1001 = vmatprep.subr.mxu0 0.0
    %1002 = vmatpush1.xpose.msra.mxu0 0.0
    %1003 = vmatprep.subr.mxu0 0.0
    %1004 = vmatpush1.xpose.msra.mxu0 0.0
    %1005 = vmatprep.subr.mxu0 0.0
    %1006 = vmatpush1.xpose.msra.mxu0 0.0
    %1007 = vmatprep.subr.mxu0 0.0
    %1008 = vmatpush1.xpose.msra.mxu0 0.0
    %1009 = vmatprep.subr.mxu0 0.0
    %1010 = vmatpush1.xpose.msra.mxu0 0.0
    %1011 = vmatprep.subr.mxu0 0.0
    %1012 = vmatpush1.xpose.msra.mxu0 0.0
    %1013 = vmatprep.subr.mxu0 0.0
    %1014 = vmatpush1.xpose.msra.mxu0 %v983
    %1015 = vmatprep.subr.mxu0 0.0
    %1016 = vmatpush1.xpose.msra.mxu0 %v980
    %1017 = vmatprep.subr.mxu0 0.0
    %1018 = vmatpush2.xpose.msra.mxu0 0.0
    %1019 = vmatprep.subr.mxu0 0.0
    %1020 = vmatpush2.xpose.msra.mxu0 0.0
    %1021 = vmatprep.subr.mxu0 0.0
    %1022 = vmatpush2.xpose.msra.mxu0 0.0
    %1023 = vmatprep.subr.mxu0 0.0
    %1024 = vmatpush2.xpose.msra.mxu0 0.0
    %1025 = vmatprep.subr.mxu0 0.0
    %1026 = vmatpush2.xpose.msra.mxu0 0.0
    %1027 = vmatprep.subr.mxu0 0.0
    %1028 = vmatpush2.xpose.msra.mxu0 0.0
    %1029 = vmatprep.subr.mxu0 0.0
    %1030 = vmatpush2.xpose.msra.mxu0 0.0
    %1031 = vmatprep.subr.mxu0 0.0
    %1032 = vmatpush2.xpose.msra.mxu0 0.0
    %1033 = vmatprep.subr.mxu0 0.0
    %1034 = vmatpush2.xpose.msra.mxu0 0.0
    %1035 = vmatprep.subr.mxu0 0.0
    %1036 = vmatpush2.xpose.msra.mxu0 0.0
    %1037 = vmatprep.subr.mxu0 0.0
    %1038 = vmatpush2.xpose.msra.mxu0 0.0
    %1039 = vmatprep.subr.mxu0 0.0
    %1040 = vmatpush2.xpose.msra.mxu0 0.0
    %1041 = vmatprep.subr.mxu0 0.0
    %1042 = vmatpush2.xpose.msra.mxu0 0.0
    %1043 = vmatprep.subr.mxu0 0.0
    %1044 = vmatpush2.xpose.msra.mxu0 0.0
    %1045 = vmatprep.subr.mxu0 0.0
    %1046 = vmatpush2.xpose.msra.mxu0 0.0
    %1047 = vmatprep.subr.mxu0 0.0
    %1048 = vmatpush2.xpose.msra.mxu0 0.0
    %1049 = vmatprep.mubr.f32.mxu0 0.0
    %1050 = vmatmul.mubr.f32.gmra.mxu0 %v884
    %v1051 = vpop.f32.mrf.mxu0
    %v1052 = vadd.f32 0.0, %v1051
    %v1053 = vpop.f32.mrf.mxu0
    %1054 = vmatprep.mubr.f32.mxu0 0.0
    %1055 = vmatmul.mubr.f32.gmra.mxu0 %v887
    %v1056 = vpop.f32.mrf.mxu0
    %v1057 = vadd.f32 0.0, %v1056
    %v1058 = vpop.f32.mrf.mxu0
    %1059 = vmatprep.mubr.f32.mxu0 0.0
    %1060 = vmatmul.mubr.f32.gmra.mxu0 %v890
    %v1061 = vpop.f32.mrf.mxu0
    %v1062 = vadd.f32 0.0, %v1061
    %v1063 = vpop.f32.mrf.mxu0
    %1064 = vmatprep.mubr.f32.mxu0 0.0
    %1065 = vmatmul.mubr.f32.gmra.mxu0 %v893
    %v1066 = vpop.f32.mrf.mxu0
    %v1067 = vadd.f32 0.0, %v1066
    %v1068 = vpop.f32.mrf.mxu0
    %1069 = vmatprep.mubr.f32.mxu0 0.0
    %1070 = vmatmul.mubr.f32.gmra.mxu0 %v896
    %v1071 = vpop.f32.mrf.mxu0
    %v1072 = vadd.f32 0.0, %v1071
    %v1073 = vpop.f32.mrf.mxu0
    %1074 = vmatprep.mubr.f32.mxu0 0.0
    %1075 = vmatmul.mubr.f32.gmra.mxu0 %v899
    %v1076 = vpop.f32.mrf.mxu0
    %v1077 = vadd.f32 0.0, %v1076
    %v1078 = vpop.f32.mrf.mxu0
    %1079 = vmatprep.mubr.f32.mxu0 0.0
    %1080 = vmatmul.mubr.f32.gmra.mxu0 %v902
    %v1081 = vpop.f32.mrf.mxu0
    %v1082 = vadd.f32 0.0, %v1081
    %v1083 = vpop.f32.mrf.mxu0
    %1084 = vmatprep.mubr.f32.mxu0 0.0
    %1085 = vmatmul.mubr.f32.gmra.mxu0 %v905
    %v1086 = vpop.f32.mrf.mxu0
    %v1087 = vadd.f32 0.0, %v1086
    %v1088 = vpop.f32.mrf.mxu0
    %1089 = vmatprep.mubr.f32.mxu0 0.0
    %1090 = vmatmul.mubr.f32.gmra.mxu0 %v908
    %v1091 = vpop.f32.mrf.mxu0
    %v1092 = vadd.f32 0.0, %v1091
    %v1093 = vpop.f32.mrf.mxu0
    %1094 = vmatprep.mubr.f32.mxu0 0.0
    %1095 = vmatmul.mubr.f32.gmra.mxu0 %v911
    %v1096 = vpop.f32.mrf.mxu0
    %v1097 = vadd.f32 0.0, %v1096
    %v1098 = vpop.f32.mrf.mxu0
    %1099 = vmatprep.mubr.f32.mxu0 0.0
    %1100 = vmatmul.mubr.f32.gmra.mxu0 %v914
    %v1101 = vpop.f32.mrf.mxu0
    %v1102 = vadd.f32 0.0, %v1101
    %v1103 = vpop.f32.mrf.mxu0
    %1104 = vmatprep.mubr.f32.mxu0 0.0
    %1105 = vmatmul.mubr.f32.gmra.mxu0 %v917
    %v1106 = vpop.f32.mrf.mxu0
    %v1107 = vadd.f32 0.0, %v1106
    %v1108 = vpop.f32.mrf.mxu0
    %1109 = vmatprep.mubr.f32.mxu0 0.0
    %1110 = vmatmul.mubr.f32.gmra.mxu0 %v920
    %v1111 = vpop.f32.mrf.mxu0
    %v1112 = vadd.f32 0.0, %v1111
    %v1113 = vpop.f32.mrf.mxu0
    %1114 = vmatprep.mubr.f32.mxu0 0.0
    %1115 = vmatmul.mubr.f32.gmra.mxu0 %v923
    %v1116 = vpop.f32.mrf.mxu0
    %v1117 = vadd.f32 0.0, %v1116
    %v1118 = vpop.f32.mrf.mxu0
    %1119 = vmatprep.mubr.f32.mxu0 0.0
    %1120 = vmatmul.mubr.f32.gmra.mxu0 %v926
    %v1121 = vpop.f32.mrf.mxu0
    %v1122 = vadd.f32 0.0, %v1121
    %v1123 = vpop.f32.mrf.mxu0
    %1124 = vmatprep.mubr.f32.mxu0 0.0
    %1125 = vmatmul.mubr.f32.gmra.mxu0 %v929
    %v1126 = vpop.f32.mrf.mxu0
    %v1127 = vadd.f32 0.0, %v1126
    %v1128 = vpop.f32.mrf.mxu0
    %1129 = vmatprep.mubr.f32.mxu0 0.0
    %1130 = vmatmul.mubr.f32.gmra.mxu0 %v932
    %v1131 = vpop.f32.mrf.mxu0
    %v1132 = vadd.f32 0.0, %v1131
    %v1133 = vpop.f32.mrf.mxu0
    %1134 = vmatprep.mubr.f32.mxu0 0.0
    %1135 = vmatmul.mubr.f32.gmra.mxu0 %v935
    %v1136 = vpop.f32.mrf.mxu0
    %v1137 = vadd.f32 0.0, %v1136
    %v1138 = vpop.f32.mrf.mxu0
    %1139 = vmatprep.mubr.f32.mxu0 0.0
    %1140 = vmatmul.mubr.f32.gmra.mxu0 %v938
    %v1141 = vpop.f32.mrf.mxu0
    %v1142 = vadd.f32 0.0, %v1141
    %v1143 = vpop.f32.mrf.mxu0
    %1144 = vmatprep.mubr.f32.mxu0 0.0
    %1145 = vmatmul.mubr.f32.gmra.mxu0 %v941
    %v1146 = vpop.f32.mrf.mxu0
    %v1147 = vadd.f32 0.0, %v1146
    %v1148 = vpop.f32.mrf.mxu0
    %1149 = vmatprep.mubr.f32.mxu0 0.0
    %1150 = vmatmul.mubr.f32.gmra.mxu0 %v944
    %v1151 = vpop.f32.mrf.mxu0
    %v1152 = vadd.f32 0.0, %v1151
    %v1153 = vpop.f32.mrf.mxu0
    %1154 = vmatprep.mubr.f32.mxu0 0.0
    %1155 = vmatmul.mubr.f32.gmra.mxu0 %v947
    %v1156 = vpop.f32.mrf.mxu0
    %v1157 = vadd.f32 0.0, %v1156
    %v1158 = vpop.f32.mrf.mxu0
    %1159 = vmatprep.mubr.f32.mxu0 0.0
    %1160 = vmatmul.mubr.f32.gmra.mxu0 %v950
    %v1161 = vpop.f32.mrf.mxu0
    %v1162 = vadd.f32 0.0, %v1161
    %v1163 = vpop.f32.mrf.mxu0
    %1164 = vmatprep.mubr.f32.mxu0 0.0
    %1165 = vmatmul.mubr.f32.gmra.mxu0 %v953
    %v1166 = vpop.f32.mrf.mxu0
    %v1167 = vadd.f32 0.0, %v1166
    %v1168 = vpop.f32.mrf.mxu0
    %1169 = vmatprep.mubr.f32.mxu0 0.0
    %1170 = vmatmul.mubr.f32.gmra.mxu0 %v956
    %v1171 = vpop.f32.mrf.mxu0
    %v1172 = vadd.f32 0.0, %v1171
    %v1173 = vpop.f32.mrf.mxu0
    %1174 = vmatprep.mubr.f32.mxu0 0.0
    %1175 = vmatmul.mubr.f32.gmra.mxu0 %v959
    %v1176 = vpop.f32.mrf.mxu0
    %v1177 = vadd.f32 0.0, %v1176
    %v1178 = vpop.f32.mrf.mxu0
    %1179 = vmatprep.mubr.f32.mxu0 0.0
    %1180 = vmatmul.mubr.f32.gmra.mxu0 %v962
    %v1181 = vpop.f32.mrf.mxu0
    %v1182 = vadd.f32 0.0, %v1181
    %v1183 = vpop.f32.mrf.mxu0
    %1184 = vmatprep.mubr.f32.mxu0 0.0
    %1185 = vmatmul.mubr.f32.gmra.mxu0 %v965
    %v1186 = vpop.f32.mrf.mxu0
    %v1187 = vadd.f32 0.0, %v1186
    %v1188 = vpop.f32.mrf.mxu0
    %1189 = vmatprep.mubr.f32.mxu0 0.0
    %1190 = vmatmul.mubr.f32.gmra.mxu0 %v968
    %v1191 = vpop.f32.mrf.mxu0
    %v1192 = vadd.f32 0.0, %v1191
    %v1193 = vpop.f32.mrf.mxu0
    %1194 = vmatprep.mubr.f32.mxu0 0.0
    %1195 = vmatmul.mubr.f32.gmra.mxu0 %v971
    %v1196 = vpop.f32.mrf.mxu0
    %v1197 = vadd.f32 0.0, %v1196
    %v1198 = vpop.f32.mrf.mxu0
    %1199 = vmatprep.mubr.f32.mxu0 0.0
    %1200 = vmatmul.mubr.f32.gmra.mxu0 %v974
    %v1201 = vpop.f32.mrf.mxu0
    %v1202 = vadd.f32 0.0, %v1201
    %v1203 = vpop.f32.mrf.mxu0
    %1204 = vmatprep.mubr.f32.mxu0 0.0
    %1205 = vmatmul.mubr.f32.gmra.mxu0 %v977
    %v1206 = vpop.f32.mrf.mxu0
    %v1207 = vadd.f32 0.0, %v1206
    %v1208 = vpop.f32.mrf.mxu0
    %1209 = vdwg.mxu0
    %v1210 = vld [vmem:[%s12] sm:$0xff]
    %v1211 = vld [vmem:[%s12 + $0x8] sm:$0xff]
    %v1212 = vld [vmem:[%s12 + $0x10] sm:$0xff]
    %v1213 = vld [vmem:[%s12 + $0x18] sm:$0xff]
    %v1214 = vld [vmem:[%s12 + $0x20] sm:$0xff]
    %v1215 = vld [vmem:[%s12 + $0x28] sm:$0xff]
    %v1216 = vld [vmem:[%s12 + $0x30] sm:$0xff]
    %v1217 = vld [vmem:[%s12 + $0x38] sm:$0xff]
    %v1218 = vld [vmem:[%s12 + $0x40] sm:$0xff]
    %v1219 = vld [vmem:[%s12 + $0x48] sm:$0xff]
    %v1220 = vld [vmem:[%s12 + $0x50] sm:$0xff]
    %v1221 = vld [vmem:[%s12 + $0x58] sm:$0xff]
    %v1222 = vld [vmem:[%s12 + $0x60] sm:$0xff]
    %v1223 = vld [vmem:[%s12 + $0x68] sm:$0xff]
    %v1224 = vld [vmem:[%s12 + $0x70] sm:$0xff]
    %v1225 = vld [vmem:[%s12 + $0x78] sm:$0xff]
    %v1227 = vsel %vm267, %v843, 0
    %v1230 = vsel %vm267, %v848, 0
    %1232 = vmatprep.subr.mxu0 0.0
    %1233 = vmatpush1.msra.mxu0 0.0
    %1234 = vmatprep.subr.mxu0 0.0
    %1235 = vmatpush1.msra.mxu0 0.0
    %1236 = vmatprep.subr.mxu0 0.0
    %1237 = vmatpush1.msra.mxu0 0.0
    %1238 = vmatprep.subr.mxu0 0.0
    %1239 = vmatpush1.msra.mxu0 0.0
    %1240 = vmatprep.subr.mxu0 0.0
    %1241 = vmatpush1.msra.mxu0 0.0
    %1242 = vmatprep.subr.mxu0 0.0
    %1243 = vmatpush1.msra.mxu0 0.0
    %1244 = vmatprep.subr.mxu0 0.0
    %1245 = vmatpush1.msra.mxu0 0.0
    %1246 = vmatprep.subr.mxu0 0.0
    %1247 = vmatpush1.msra.mxu0 0.0
    %1248 = vmatprep.subr.mxu0 0.0
    %1249 = vmatpush1.msra.mxu0 0.0
    %1250 = vmatprep.subr.mxu0 0.0
    %1251 = vmatpush1.msra.mxu0 0.0
    %1252 = vmatprep.subr.mxu0 0.0
    %1253 = vmatpush1.msra.mxu0 0.0
    %1254 = vmatprep.subr.mxu0 0.0
    %1255 = vmatpush1.msra.mxu0 0.0
    %1256 = vmatprep.subr.mxu0 0.0
    %1257 = vmatpush1.msra.mxu0 0.0
    %1258 = vmatprep.subr.mxu0 0.0
    %1259 = vmatpush1.msra.mxu0 0.0
    %1260 = vmatprep.subr.mxu0 0.0
    %1261 = vmatpush1.msra.mxu0 %v1211
    %1262 = vmatprep.subr.mxu0 0.0
    %1263 = vmatpush1.msra.mxu0 %v1210
    %1264 = vmatprep.subr.mxu0 0.0
    %1265 = vmatpush2.msra.mxu0 0.0
    %1266 = vmatprep.subr.mxu0 0.0
    %1267 = vmatpush2.msra.mxu0 0.0
    %1268 = vmatprep.subr.mxu0 0.0
    %1269 = vmatpush2.msra.mxu0 0.0
    %1270 = vmatprep.subr.mxu0 0.0
    %1271 = vmatpush2.msra.mxu0 0.0
    %1272 = vmatprep.subr.mxu0 0.0
    %1273 = vmatpush2.msra.mxu0 0.0
    %1274 = vmatprep.subr.mxu0 0.0
    %1275 = vmatpush2.msra.mxu0 0.0
    %1276 = vmatprep.subr.mxu0 0.0
    %1277 = vmatpush2.msra.mxu0 0.0
    %1278 = vmatprep.subr.mxu0 0.0
    %1279 = vmatpush2.msra.mxu0 0.0
    %1280 = vmatprep.subr.mxu0 0.0
    %1281 = vmatpush2.msra.mxu0 0.0
    %1282 = vmatprep.subr.mxu0 0.0
    %1283 = vmatpush2.msra.mxu0 0.0
    %1284 = vmatprep.subr.mxu0 0.0
    %1285 = vmatpush2.msra.mxu0 0.0
    %1286 = vmatprep.subr.mxu0 0.0
    %1287 = vmatpush2.msra.mxu0 0.0
    %1288 = vmatprep.subr.mxu0 0.0
    %1289 = vmatpush2.msra.mxu0 0.0
    %1290 = vmatprep.subr.mxu0 0.0
    %1291 = vmatpush2.msra.mxu0 0.0
    %1292 = vmatprep.subr.mxu0 0.0
    %1293 = vmatpush2.msra.mxu0 0.0
    %1294 = vmatprep.subr.mxu0 0.0
    %1295 = vmatpush2.msra.mxu0 0.0
    %1296 = vmatprep.mubr.f32.mxu0 0.0
    %1297 = vmatmul.mubr.f32.gmra.mxu0 %v1227
    %v1298 = vpop.f32.mrf.mxu0
    %v1299 = vadd.f32 0.0, %v1298
    %v1300 = vpop.f32.mrf.mxu0
    %1301 = vmatprep.mubr.f32.mxu0 0.0
    %1302 = vmatmul.mubr.f32.gmra.mxu0 %v1230
    %v1303 = vpop.f32.mrf.mxu0
    %v1304 = vadd.f32 0.0, %v1303
    %v1305 = vpop.f32.mrf.mxu0
    %1306 = vdwg.mxu0
    %1307 = vmatprep.subr.mxu0 0.0
    %1308 = vmatpush1.msra.mxu0 0.0
    %1309 = vmatprep.subr.mxu0 0.0
    %1310 = vmatpush1.msra.mxu0 0.0
    %1311 = vmatprep.subr.mxu0 0.0
    %1312 = vmatpush1.msra.mxu0 0.0
    %1313 = vmatprep.subr.mxu0 0.0
    %1314 = vmatpush1.msra.mxu0 0.0
    %1315 = vmatprep.subr.mxu0 0.0
    %1316 = vmatpush1.msra.mxu0 0.0
    %1317 = vmatprep.subr.mxu0 0.0
    %1318 = vmatpush1.msra.mxu0 0.0
    %1319 = vmatprep.subr.mxu0 0.0
    %1320 = vmatpush1.msra.mxu0 0.0
    %1321 = vmatprep.subr.mxu0 0.0
    %1322 = vmatpush1.msra.mxu0 0.0
    %1323 = vmatprep.subr.mxu0 0.0
    %1324 = vmatpush1.msra.mxu0 0.0
    %1325 = vmatprep.subr.mxu0 0.0
    %1326 = vmatpush1.msra.mxu0 0.0
    %1327 = vmatprep.subr.mxu0 0.0
    %1328 = vmatpush1.msra.mxu0 0.0
    %1329 = vmatprep.subr.mxu0 0.0
    %1330 = vmatpush1.msra.mxu0 0.0
    %1331 = vmatprep.subr.mxu0 0.0
    %1332 = vmatpush1.msra.mxu0 0.0
    %1333 = vmatprep.subr.mxu0 0.0
    %1334 = vmatpush1.msra.mxu0 0.0
    %1335 = vmatprep.subr.mxu0 0.0
    %1336 = vmatpush1.msra.mxu0 %v1213
    %1337 = vmatprep.subr.mxu0 0.0
    %1338 = vmatpush1.msra.mxu0 %v1212
    %1339 = vmatprep.subr.mxu0 0.0
    %1340 = vmatpush2.msra.mxu0 0.0
    %1341 = vmatprep.subr.mxu0 0.0
    %1342 = vmatpush2.msra.mxu0 0.0
    %1343 = vmatprep.subr.mxu0 0.0
    %1344 = vmatpush2.msra.mxu0 0.0
    %1345 = vmatprep.subr.mxu0 0.0
    %1346 = vmatpush2.msra.mxu0 0.0
    %1347 = vmatprep.subr.mxu0 0.0
    %1348 = vmatpush2.msra.mxu0 0.0
    %1349 = vmatprep.subr.mxu0 0.0
    %1350 = vmatpush2.msra.mxu0 0.0
    %1351 = vmatprep.subr.mxu0 0.0
    %1352 = vmatpush2.msra.mxu0 0.0
    %1353 = vmatprep.subr.mxu0 0.0
    %1354 = vmatpush2.msra.mxu0 0.0
    %1355 = vmatprep.subr.mxu0 0.0
    %1356 = vmatpush2.msra.mxu0 0.0
    %1357 = vmatprep.subr.mxu0 0.0
    %1358 = vmatpush2.msra.mxu0 0.0
    %1359 = vmatprep.subr.mxu0 0.0
    %1360 = vmatpush2.msra.mxu0 0.0
    %1361 = vmatprep.subr.mxu0 0.0
    %1362 = vmatpush2.msra.mxu0 0.0
    %1363 = vmatprep.subr.mxu0 0.0
    %1364 = vmatpush2.msra.mxu0 0.0
    %1365 = vmatprep.subr.mxu0 0.0
    %1366 = vmatpush2.msra.mxu0 0.0
    %1367 = vmatprep.subr.mxu0 0.0
    %1368 = vmatpush2.msra.mxu0 0.0
    %1369 = vmatprep.subr.mxu0 0.0
    %1370 = vmatpush2.msra.mxu0 0.0
    %1371 = vmatprep.mubr.f32.mxu0 0.0
    %1372 = vmatmul.mubr.f32.gmra.mxu0 %v1227
    %v1373 = vpop.f32.mrf.mxu0
    %v1374 = vadd.f32 0.0, %v1373
    %v1375 = vpop.f32.mrf.mxu0
    %1376 = vmatprep.mubr.f32.mxu0 0.0
    %1377 = vmatmul.mubr.f32.gmra.mxu0 %v1230
    %v1378 = vpop.f32.mrf.mxu0
    %v1379 = vadd.f32 0.0, %v1378
    %v1380 = vpop.f32.mrf.mxu0
    %1381 = vdwg.mxu0
    %1382 = vmatprep.subr.mxu0 0.0
    %1383 = vmatpush1.msra.mxu0 0.0
    %1384 = vmatprep.subr.mxu0 0.0
    %1385 = vmatpush1.msra.mxu0 0.0
    %1386 = vmatprep.subr.mxu0 0.0
    %1387 = vmatpush1.msra.mxu0 0.0
    %1388 = vmatprep.subr.mxu0 0.0
    %1389 = vmatpush1.msra.mxu0 0.0
    %1390 = vmatprep.subr.mxu0 0.0
    %1391 = vmatpush1.msra.mxu0 0.0
    %1392 = vmatprep.subr.mxu0 0.0
    %1393 = vmatpush1.msra.mxu0 0.0
    %1394 = vmatprep.subr.mxu0 0.0
    %1395 = vmatpush1.msra.mxu0 0.0
    %1396 = vmatprep.subr.mxu0 0.0
    %1397 = vmatpush1.msra.mxu0 0.0
    %1398 = vmatprep.subr.mxu0 0.0
    %1399 = vmatpush1.msra.mxu0 0.0
    %1400 = vmatprep.subr.mxu0 0.0
    %1401 = vmatpush1.msra.mxu0 0.0
    %1402 = vmatprep.subr.mxu0 0.0
    %1403 = vmatpush1.msra.mxu0 0.0
    %1404 = vmatprep.subr.mxu0 0.0
    %1405 = vmatpush1.msra.mxu0 0.0
    %1406 = vmatprep.subr.mxu0 0.0
    %1407 = vmatpush1.msra.mxu0 0.0
    %1408 = vmatprep.subr.mxu0 0.0
    %1409 = vmatpush1.msra.mxu0 0.0
    %1410 = vmatprep.subr.mxu0 0.0
    %1411 = vmatpush1.msra.mxu0 %v1215
    %1412 = vmatprep.subr.mxu0 0.0
    %1413 = vmatpush1.msra.mxu0 %v1214
    %1414 = vmatprep.subr.mxu0 0.0
    %1415 = vmatpush2.msra.mxu0 0.0
    %1416 = vmatprep.subr.mxu0 0.0
    %1417 = vmatpush2.msra.mxu0 0.0
    %1418 = vmatprep.subr.mxu0 0.0
    %1419 = vmatpush2.msra.mxu0 0.0
    %1420 = vmatprep.subr.mxu0 0.0
    %1421 = vmatpush2.msra.mxu0 0.0
    %1422 = vmatprep.subr.mxu0 0.0
    %1423 = vmatpush2.msra.mxu0 0.0
    %1424 = vmatprep.subr.mxu0 0.0
    %1425 = vmatpush2.msra.mxu0 0.0
    %1426 = vmatprep.subr.mxu0 0.0
    %1427 = vmatpush2.msra.mxu0 0.0
    %1428 = vmatprep.subr.mxu0 0.0
    %1429 = vmatpush2.msra.mxu0 0.0
    %1430 = vmatprep.subr.mxu0 0.0
    %1431 = vmatpush2.msra.mxu0 0.0
    %1432 = vmatprep.subr.mxu0 0.0
    %1433 = vmatpush2.msra.mxu0 0.0
    %1434 = vmatprep.subr.mxu0 0.0
    %1435 = vmatpush2.msra.mxu0 0.0
    %1436 = vmatprep.subr.mxu0 0.0
    %1437 = vmatpush2.msra.mxu0 0.0
    %1438 = vmatprep.subr.mxu0 0.0
    %1439 = vmatpush2.msra.mxu0 0.0
    %1440 = vmatprep.subr.mxu0 0.0
    %1441 = vmatpush2.msra.mxu0 0.0
    %1442 = vmatprep.subr.mxu0 0.0
    %1443 = vmatpush2.msra.mxu0 0.0
    %1444 = vmatprep.subr.mxu0 0.0
    %1445 = vmatpush2.msra.mxu0 0.0
    %1446 = vmatprep.mubr.f32.mxu0 0.0
    %1447 = vmatmul.mubr.f32.gmra.mxu0 %v1227
    %v1448 = vpop.f32.mrf.mxu0
    %v1449 = vadd.f32 0.0, %v1448
    %v1450 = vpop.f32.mrf.mxu0
    %1451 = vmatprep.mubr.f32.mxu0 0.0
    %1452 = vmatmul.mubr.f32.gmra.mxu0 %v1230
    %v1453 = vpop.f32.mrf.mxu0
    %v1454 = vadd.f32 0.0, %v1453
    %v1455 = vpop.f32.mrf.mxu0
    %1456 = vdwg.mxu0
    %1457 = vmatprep.subr.mxu0 0.0
    %1458 = vmatpush1.msra.mxu0 0.0
    %1459 = vmatprep.subr.mxu0 0.0
    %1460 = vmatpush1.msra.mxu0 0.0
    %1461 = vmatprep.subr.mxu0 0.0
    %1462 = vmatpush1.msra.mxu0 0.0
    %1463 = vmatprep.subr.mxu0 0.0
    %1464 = vmatpush1.msra.mxu0 0.0
    %1465 = vmatprep.subr.mxu0 0.0
    %1466 = vmatpush1.msra.mxu0 0.0
    %1467 = vmatprep.subr.mxu0 0.0
    %1468 = vmatpush1.msra.mxu0 0.0
    %1469 = vmatprep.subr.mxu0 0.0
    %1470 = vmatpush1.msra.mxu0 0.0
    %1471 = vmatprep.subr.mxu0 0.0
    %1472 = vmatpush1.msra.mxu0 0.0
    %1473 = vmatprep.subr.mxu0 0.0
    %1474 = vmatpush1.msra.mxu0 0.0
    %1475 = vmatprep.subr.mxu0 0.0
    %1476 = vmatpush1.msra.mxu0 0.0
    %1477 = vmatprep.subr.mxu0 0.0
    %1478 = vmatpush1.msra.mxu0 0.0
    %1479 = vmatprep.subr.mxu0 0.0
    %1480 = vmatpush1.msra.mxu0 0.0
    %1481 = vmatprep.subr.mxu0 0.0
    %1482 = vmatpush1.msra.mxu0 0.0
    %1483 = vmatprep.subr.mxu0 0.0
    %1484 = vmatpush1.msra.mxu0 0.0
    %1485 = vmatprep.subr.mxu0 0.0
    %1486 = vmatpush1.msra.mxu0 %v1217
    %1487 = vmatprep.subr.mxu0 0.0
    %1488 = vmatpush1.msra.mxu0 %v1216
    %1489 = vmatprep.subr.mxu0 0.0
    %1490 = vmatpush2.msra.mxu0 0.0
    %1491 = vmatprep.subr.mxu0 0.0
    %1492 = vmatpush2.msra.mxu0 0.0
    %1493 = vmatprep.subr.mxu0 0.0
    %1494 = vmatpush2.msra.mxu0 0.0
    %1495 = vmatprep.subr.mxu0 0.0
    %1496 = vmatpush2.msra.mxu0 0.0
    %1497 = vmatprep.subr.mxu0 0.0
    %1498 = vmatpush2.msra.mxu0 0.0
    %1499 = vmatprep.subr.mxu0 0.0
    %1500 = vmatpush2.msra.mxu0 0.0
    %1501 = vmatprep.subr.mxu0 0.0
    %1502 = vmatpush2.msra.mxu0 0.0
    %1503 = vmatprep.subr.mxu0 0.0
    %1504 = vmatpush2.msra.mxu0 0.0
    %1505 = vmatprep.subr.mxu0 0.0
    %1506 = vmatpush2.msra.mxu0 0.0
    %1507 = vmatprep.subr.mxu0 0.0
    %1508 = vmatpush2.msra.mxu0 0.0
    %1509 = vmatprep.subr.mxu0 0.0
    %1510 = vmatpush2.msra.mxu0 0.0
    %1511 = vmatprep.subr.mxu0 0.0
    %1512 = vmatpush2.msra.mxu0 0.0
    %1513 = vmatprep.subr.mxu0 0.0
    %1514 = vmatpush2.msra.mxu0 0.0
    %1515 = vmatprep.subr.mxu0 0.0
    %1516 = vmatpush2.msra.mxu0 0.0
    %1517 = vmatprep.subr.mxu0 0.0
    %1518 = vmatpush2.msra.mxu0 0.0
    %1519 = vmatprep.subr.mxu0 0.0
    %1520 = vmatpush2.msra.mxu0 0.0
    %1521 = vmatprep.mubr.f32.mxu0 0.0
    %1522 = vmatmul.mubr.f32.gmra.mxu0 %v1227
    %v1523 = vpop.f32.mrf.mxu0
    %v1524 = vadd.f32 0.0, %v1523
    %v1525 = vpop.f32.mrf.mxu0
    %1526 = vmatprep.mubr.f32.mxu0 0.0
    %1527 = vmatmul.mubr.f32.gmra.mxu0 %v1230
    %v1528 = vpop.f32.mrf.mxu0
    %v1529 = vadd.f32 0.0, %v1528
    %v1530 = vpop.f32.mrf.mxu0
    %1531 = vdwg.mxu0
    %1532 = vmatprep.subr.mxu0 0.0
    %1533 = vmatpush1.msra.mxu0 0.0
    %1534 = vmatprep.subr.mxu0 0.0
    %1535 = vmatpush1.msra.mxu0 0.0
    %1536 = vmatprep.subr.mxu0 0.0
    %1537 = vmatpush1.msra.mxu0 0.0
    %1538 = vmatprep.subr.mxu0 0.0
    %1539 = vmatpush1.msra.mxu0 0.0
    %1540 = vmatprep.subr.mxu0 0.0
    %1541 = vmatpush1.msra.mxu0 0.0
    %1542 = vmatprep.subr.mxu0 0.0
    %1543 = vmatpush1.msra.mxu0 0.0
    %1544 = vmatprep.subr.mxu0 0.0
    %1545 = vmatpush1.msra.mxu0 0.0
    %1546 = vmatprep.subr.mxu0 0.0
    %1547 = vmatpush1.msra.mxu0 0.0
    %1548 = vmatprep.subr.mxu0 0.0
    %1549 = vmatpush1.msra.mxu0 0.0
    %1550 = vmatprep.subr.mxu0 0.0
    %1551 = vmatpush1.msra.mxu0 0.0
    %1552 = vmatprep.subr.mxu0 0.0
    %1553 = vmatpush1.msra.mxu0 0.0
    %1554 = vmatprep.subr.mxu0 0.0
    %1555 = vmatpush1.msra.mxu0 0.0
    %1556 = vmatprep.subr.mxu0 0.0
    %1557 = vmatpush1.msra.mxu0 0.0
    %1558 = vmatprep.subr.mxu0 0.0
    %1559 = vmatpush1.msra.mxu0 0.0
    %1560 = vmatprep.subr.mxu0 0.0
    %1561 = vmatpush1.msra.mxu0 %v1219
    %1562 = vmatprep.subr.mxu0 0.0
    %1563 = vmatpush1.msra.mxu0 %v1218
    %1564 = vmatprep.subr.mxu0 0.0
    %1565 = vmatpush2.msra.mxu0 0.0
    %1566 = vmatprep.subr.mxu0 0.0
    %1567 = vmatpush2.msra.mxu0 0.0
    %1568 = vmatprep.subr.mxu0 0.0
    %1569 = vmatpush2.msra.mxu0 0.0
    %1570 = vmatprep.subr.mxu0 0.0
    %1571 = vmatpush2.msra.mxu0 0.0
    %1572 = vmatprep.subr.mxu0 0.0
    %1573 = vmatpush2.msra.mxu0 0.0
    %1574 = vmatprep.subr.mxu0 0.0
    %1575 = vmatpush2.msra.mxu0 0.0
    %1576 = vmatprep.subr.mxu0 0.0
    %1577 = vmatpush2.msra.mxu0 0.0
    %1578 = vmatprep.subr.mxu0 0.0
    %1579 = vmatpush2.msra.mxu0 0.0
    %1580 = vmatprep.subr.mxu0 0.0
    %1581 = vmatpush2.msra.mxu0 0.0
    %1582 = vmatprep.subr.mxu0 0.0
    %1583 = vmatpush2.msra.mxu0 0.0
    %1584 = vmatprep.subr.mxu0 0.0
    %1585 = vmatpush2.msra.mxu0 0.0
    %1586 = vmatprep.subr.mxu0 0.0
    %1587 = vmatpush2.msra.mxu0 0.0
    %1588 = vmatprep.subr.mxu0 0.0
    %1589 = vmatpush2.msra.mxu0 0.0
    %1590 = vmatprep.subr.mxu0 0.0
    %1591 = vmatpush2.msra.mxu0 0.0
    %1592 = vmatprep.subr.mxu0 0.0
    %1593 = vmatpush2.msra.mxu0 0.0
    %1594 = vmatprep.subr.mxu0 0.0
    %1595 = vmatpush2.msra.mxu0 0.0
    %1596 = vmatprep.mubr.f32.mxu0 0.0
    %1597 = vmatmul.mubr.f32.gmra.mxu0 %v1227
    %v1598 = vpop.f32.mrf.mxu0
    %v1599 = vadd.f32 0.0, %v1598
    %v1600 = vpop.f32.mrf.mxu0
    %1601 = vmatprep.mubr.f32.mxu0 0.0
    %1602 = vmatmul.mubr.f32.gmra.mxu0 %v1230
    %v1603 = vpop.f32.mrf.mxu0
    %v1604 = vadd.f32 0.0, %v1603
    %v1605 = vpop.f32.mrf.mxu0
    %1606 = vdwg.mxu0
    %1607 = vmatprep.subr.mxu0 0.0
    %1608 = vmatpush1.msra.mxu0 0.0
    %1609 = vmatprep.subr.mxu0 0.0
    %1610 = vmatpush1.msra.mxu0 0.0
    %1611 = vmatprep.subr.mxu0 0.0
    %1612 = vmatpush1.msra.mxu0 0.0
    %1613 = vmatprep.subr.mxu0 0.0
    %1614 = vmatpush1.msra.mxu0 0.0
    %1615 = vmatprep.subr.mxu0 0.0
    %1616 = vmatpush1.msra.mxu0 0.0
    %1617 = vmatprep.subr.mxu0 0.0
    %1618 = vmatpush1.msra.mxu0 0.0
    %1619 = vmatprep.subr.mxu0 0.0
    %1620 = vmatpush1.msra.mxu0 0.0
    %1621 = vmatprep.subr.mxu0 0.0
    %1622 = vmatpush1.msra.mxu0 0.0
    %1623 = vmatprep.subr.mxu0 0.0
    %1624 = vmatpush1.msra.mxu0 0.0
    %1625 = vmatprep.subr.mxu0 0.0
    %1626 = vmatpush1.msra.mxu0 0.0
    %1627 = vmatprep.subr.mxu0 0.0
    %1628 = vmatpush1.msra.mxu0 0.0
    %1629 = vmatprep.subr.mxu0 0.0
    %1630 = vmatpush1.msra.mxu0 0.0
    %1631 = vmatprep.subr.mxu0 0.0
    %1632 = vmatpush1.msra.mxu0 0.0
    %1633 = vmatprep.subr.mxu0 0.0
    %1634 = vmatpush1.msra.mxu0 0.0
    %1635 = vmatprep.subr.mxu0 0.0
    %1636 = vmatpush1.msra.mxu0 %v1221
    %1637 = vmatprep.subr.mxu0 0.0
    %1638 = vmatpush1.msra.mxu0 %v1220
    %1639 = vmatprep.subr.mxu0 0.0
    %1640 = vmatpush2.msra.mxu0 0.0
    %1641 = vmatprep.subr.mxu0 0.0
    %1642 = vmatpush2.msra.mxu0 0.0
    %1643 = vmatprep.subr.mxu0 0.0
    %1644 = vmatpush2.msra.mxu0 0.0
    %1645 = vmatprep.subr.mxu0 0.0
    %1646 = vmatpush2.msra.mxu0 0.0
    %1647 = vmatprep.subr.mxu0 0.0
    %1648 = vmatpush2.msra.mxu0 0.0
    %1649 = vmatprep.subr.mxu0 0.0
    %1650 = vmatpush2.msra.mxu0 0.0
    %1651 = vmatprep.subr.mxu0 0.0
    %1652 = vmatpush2.msra.mxu0 0.0
    %1653 = vmatprep.subr.mxu0 0.0
    %1654 = vmatpush2.msra.mxu0 0.0
    %1655 = vmatprep.subr.mxu0 0.0
    %1656 = vmatpush2.msra.mxu0 0.0
    %1657 = vmatprep.subr.mxu0 0.0
    %1658 = vmatpush2.msra.mxu0 0.0
    %1659 = vmatprep.subr.mxu0 0.0
    %1660 = vmatpush2.msra.mxu0 0.0
    %1661 = vmatprep.subr.mxu0 0.0
    %1662 = vmatpush2.msra.mxu0 0.0
    %1663 = vmatprep.subr.mxu0 0.0
    %1664 = vmatpush2.msra.mxu0 0.0
    %1665 = vmatprep.subr.mxu0 0.0
    %1666 = vmatpush2.msra.mxu0 0.0
    %1667 = vmatprep.subr.mxu0 0.0
    %1668 = vmatpush2.msra.mxu0 0.0
    %1669 = vmatprep.subr.mxu0 0.0
    %1670 = vmatpush2.msra.mxu0 0.0
    %1671 = vmatprep.mubr.f32.mxu0 0.0
    %1672 = vmatmul.mubr.f32.gmra.mxu0 %v1227
    %v1673 = vpop.f32.mrf.mxu0
    %v1674 = vadd.f32 0.0, %v1673
    %v1675 = vpop.f32.mrf.mxu0
    %1676 = vmatprep.mubr.f32.mxu0 0.0
    %1677 = vmatmul.mubr.f32.gmra.mxu0 %v1230
    %v1678 = vpop.f32.mrf.mxu0
    %v1679 = vadd.f32 0.0, %v1678
    %v1680 = vpop.f32.mrf.mxu0
    %1681 = vdwg.mxu0
    %1682 = vmatprep.subr.mxu0 0.0
    %1683 = vmatpush1.msra.mxu0 0.0
    %1684 = vmatprep.subr.mxu0 0.0
    %1685 = vmatpush1.msra.mxu0 0.0
    %1686 = vmatprep.subr.mxu0 0.0
    %1687 = vmatpush1.msra.mxu0 0.0
    %1688 = vmatprep.subr.mxu0 0.0
    %1689 = vmatpush1.msra.mxu0 0.0
    %1690 = vmatprep.subr.mxu0 0.0
    %1691 = vmatpush1.msra.mxu0 0.0
    %1692 = vmatprep.subr.mxu0 0.0
    %1693 = vmatpush1.msra.mxu0 0.0
    %1694 = vmatprep.subr.mxu0 0.0
    %1695 = vmatpush1.msra.mxu0 0.0
    %1696 = vmatprep.subr.mxu0 0.0
    %1697 = vmatpush1.msra.mxu0 0.0
    %1698 = vmatprep.subr.mxu0 0.0
    %1699 = vmatpush1.msra.mxu0 0.0
    %1700 = vmatprep.subr.mxu0 0.0
    %1701 = vmatpush1.msra.mxu0 0.0
    %1702 = vmatprep.subr.mxu0 0.0
    %1703 = vmatpush1.msra.mxu0 0.0
    %1704 = vmatprep.subr.mxu0 0.0
    %1705 = vmatpush1.msra.mxu0 0.0
    %1706 = vmatprep.subr.mxu0 0.0
    %1707 = vmatpush1.msra.mxu0 0.0
    %1708 = vmatprep.subr.mxu0 0.0
    %1709 = vmatpush1.msra.mxu0 0.0
    %1710 = vmatprep.subr.mxu0 0.0
    %1711 = vmatpush1.msra.mxu0 %v1223
    %1712 = vmatprep.subr.mxu0 0.0
    %1713 = vmatpush1.msra.mxu0 %v1222
    %1714 = vmatprep.subr.mxu0 0.0
    %1715 = vmatpush2.msra.mxu0 0.0
    %1716 = vmatprep.subr.mxu0 0.0
    %1717 = vmatpush2.msra.mxu0 0.0
    %1718 = vmatprep.subr.mxu0 0.0
    %1719 = vmatpush2.msra.mxu0 0.0
    %1720 = vmatprep.subr.mxu0 0.0
    %1721 = vmatpush2.msra.mxu0 0.0
    %1722 = vmatprep.subr.mxu0 0.0
    %1723 = vmatpush2.msra.mxu0 0.0
    %1724 = vmatprep.subr.mxu0 0.0
    %1725 = vmatpush2.msra.mxu0 0.0
    %1726 = vmatprep.subr.mxu0 0.0
    %1727 = vmatpush2.msra.mxu0 0.0
    %1728 = vmatprep.subr.mxu0 0.0
    %1729 = vmatpush2.msra.mxu0 0.0
    %1730 = vmatprep.subr.mxu0 0.0
    %1731 = vmatpush2.msra.mxu0 0.0
    %1732 = vmatprep.subr.mxu0 0.0
    %1733 = vmatpush2.msra.mxu0 0.0
    %1734 = vmatprep.subr.mxu0 0.0
    %1735 = vmatpush2.msra.mxu0 0.0
    %1736 = vmatprep.subr.mxu0 0.0
    %1737 = vmatpush2.msra.mxu0 0.0
    %1738 = vmatprep.subr.mxu0 0.0
    %1739 = vmatpush2.msra.mxu0 0.0
    %1740 = vmatprep.subr.mxu0 0.0
    %1741 = vmatpush2.msra.mxu0 0.0
    %1742 = vmatprep.subr.mxu0 0.0
    %1743 = vmatpush2.msra.mxu0 0.0
    %1744 = vmatprep.subr.mxu0 0.0
    %1745 = vmatpush2.msra.mxu0 0.0
    %1746 = vmatprep.mubr.f32.mxu0 0.0
    %1747 = vmatmul.mubr.f32.gmra.mxu0 %v1227
    %v1748 = vpop.f32.mrf.mxu0
    %v1749 = vadd.f32 0.0, %v1748
    %v1750 = vpop.f32.mrf.mxu0
    %1751 = vmatprep.mubr.f32.mxu0 0.0
    %1752 = vmatmul.mubr.f32.gmra.mxu0 %v1230
    %v1753 = vpop.f32.mrf.mxu0
    %v1754 = vadd.f32 0.0, %v1753
    %v1755 = vpop.f32.mrf.mxu0
    %1756 = vdwg.mxu0
    %1757 = vmatprep.subr.mxu0 0.0
    %1758 = vmatpush1.msra.mxu0 0.0
    %1759 = vmatprep.subr.mxu0 0.0
    %1760 = vmatpush1.msra.mxu0 0.0
    %1761 = vmatprep.subr.mxu0 0.0
    %1762 = vmatpush1.msra.mxu0 0.0
    %1763 = vmatprep.subr.mxu0 0.0
    %1764 = vmatpush1.msra.mxu0 0.0
    %1765 = vmatprep.subr.mxu0 0.0
    %1766 = vmatpush1.msra.mxu0 0.0
    %1767 = vmatprep.subr.mxu0 0.0
    %1768 = vmatpush1.msra.mxu0 0.0
    %1769 = vmatprep.subr.mxu0 0.0
    %1770 = vmatpush1.msra.mxu0 0.0
    %1771 = vmatprep.subr.mxu0 0.0
    %1772 = vmatpush1.msra.mxu0 0.0
    %1773 = vmatprep.subr.mxu0 0.0
    %1774 = vmatpush1.msra.mxu0 0.0
    %1775 = vmatprep.subr.mxu0 0.0
    %1776 = vmatpush1.msra.mxu0 0.0
    %1777 = vmatprep.subr.mxu0 0.0
    %1778 = vmatpush1.msra.mxu0 0.0
    %1779 = vmatprep.subr.mxu0 0.0
    %1780 = vmatpush1.msra.mxu0 0.0
    %1781 = vmatprep.subr.mxu0 0.0
    %1782 = vmatpush1.msra.mxu0 0.0
    %1783 = vmatprep.subr.mxu0 0.0
    %1784 = vmatpush1.msra.mxu0 0.0
    %1785 = vmatprep.subr.mxu0 0.0
    %1786 = vmatpush1.msra.mxu0 %v1225
    %1787 = vmatprep.subr.mxu0 0.0
    %1788 = vmatpush1.msra.mxu0 %v1224
    %1789 = vmatprep.subr.mxu0 0.0
    %1790 = vmatpush2.msra.mxu0 0.0
    %1791 = vmatprep.subr.mxu0 0.0
    %1792 = vmatpush2.msra.mxu0 0.0
    %1793 = vmatprep.subr.mxu0 0.0
    %1794 = vmatpush2.msra.mxu0 0.0
    %1795 = vmatprep.subr.mxu0 0.0
    %1796 = vmatpush2.msra.mxu0 0.0
    %1797 = vmatprep.subr.mxu0 0.0
    %1798 = vmatpush2.msra.mxu0 0.0
    %1799 = vmatprep.subr.mxu0 0.0
    %1800 = vmatpush2.msra.mxu0 0.0
    %1801 = vmatprep.subr.mxu0 0.0
    %1802 = vmatpush2.msra.mxu0 0.0
    %1803 = vmatprep.subr.mxu0 0.0
    %1804 = vmatpush2.msra.mxu0 0.0
    %1805 = vmatprep.subr.mxu0 0.0
    %1806 = vmatpush2.msra.mxu0 0.0
    %1807 = vmatprep.subr.mxu0 0.0
    %1808 = vmatpush2.msra.mxu0 0.0
    %1809 = vmatprep.subr.mxu0 0.0
    %1810 = vmatpush2.msra.mxu0 0.0
    %1811 = vmatprep.subr.mxu0 0.0
    %1812 = vmatpush2.msra.mxu0 0.0
    %1813 = vmatprep.subr.mxu0 0.0
    %1814 = vmatpush2.msra.mxu0 0.0
    %1815 = vmatprep.subr.mxu0 0.0
    %1816 = vmatpush2.msra.mxu0 0.0
    %1817 = vmatprep.subr.mxu0 0.0
    %1818 = vmatpush2.msra.mxu0 0.0
    %1819 = vmatprep.subr.mxu0 0.0
    %1820 = vmatpush2.msra.mxu0 0.0
    %1821 = vmatprep.mubr.f32.mxu0 0.0
    %1822 = vmatmul.mubr.f32.gmra.mxu0 %v1227
    %v1823 = vpop.f32.mrf.mxu0
    %v1824 = vadd.f32 0.0, %v1823
    %v1825 = vpop.f32.mrf.mxu0
    %1826 = vmatprep.mubr.f32.mxu0 0.0
    %1827 = vmatmul.mubr.f32.gmra.mxu0 %v1230
    %v1828 = vpop.f32.mrf.mxu0
    %v1829 = vadd.f32 0.0, %v1828
    %v1830 = vpop.f32.mrf.mxu0
    %1831 = vdwg.mxu0
    %v1832 = vmul.f32 %v1299, 0.25
    %v1833 = vmul.f32 %v1304, 0.25
    %v1834 = vmul.f32 %v1374, 0.25
    %v1835 = vmul.f32 %v1379, 0.25
    %v1836 = vmul.f32 %v1449, 0.25
    %v1837 = vmul.f32 %v1454, 0.25
    %v1838 = vmul.f32 %v1524, 0.25
    %v1839 = vmul.f32 %v1529, 0.25
    %v1840 = vmul.f32 %v1599, 0.25
    %v1841 = vmul.f32 %v1604, 0.25
    %v1842 = vmul.f32 %v1674, 0.25
    %v1843 = vmul.f32 %v1679, 0.25
    %v1844 = vmul.f32 %v1749, 0.25
    %v1845 = vmul.f32 %v1754, 0.25
    %v1846 = vmul.f32 %v1824, 0.25
    %v1847 = vmul.f32 %v1829, 0.25
    %v1849 = vsel %vm267, %v1832, 0
    %v1852 = vsel %vm267, %v1833, 0
    %1854 = vmatprep.subr.mxu0 0.0
    %1855 = vmatpush1.msra.mxu0 0.0
    %1856 = vmatprep.subr.mxu0 0.0
    %1857 = vmatpush1.msra.mxu0 0.0
    %1858 = vmatprep.subr.mxu0 0.0
    %1859 = vmatpush1.msra.mxu0 0.0
    %1860 = vmatprep.subr.mxu0 0.0
    %1861 = vmatpush1.msra.mxu0 0.0
    %1862 = vmatprep.subr.mxu0 0.0
    %1863 = vmatpush1.msra.mxu0 0.0
    %1864 = vmatprep.subr.mxu0 0.0
    %1865 = vmatpush1.msra.mxu0 0.0
    %1866 = vmatprep.subr.mxu0 0.0
    %1867 = vmatpush1.msra.mxu0 0.0
    %1868 = vmatprep.subr.mxu0 0.0
    %1869 = vmatpush1.msra.mxu0 0.0
    %1870 = vmatprep.subr.mxu0 0.0
    %1871 = vmatpush1.msra.mxu0 0.0
    %1872 = vmatprep.subr.mxu0 0.0
    %1873 = vmatpush1.msra.mxu0 0.0
    %1874 = vmatprep.subr.mxu0 0.0
    %1875 = vmatpush1.msra.mxu0 0.0
    %1876 = vmatprep.subr.mxu0 0.0
    %1877 = vmatpush1.msra.mxu0 0.0
    %1878 = vmatprep.subr.mxu0 0.0
    %1879 = vmatpush1.msra.mxu0 0.0
    %1880 = vmatprep.subr.mxu0 0.0
    %1881 = vmatpush1.msra.mxu0 0.0
    %1882 = vmatprep.subr.mxu0 0.0
    %1883 = vmatpush1.msra.mxu0 %v1057
    %1884 = vmatprep.subr.mxu0 0.0
    %1885 = vmatpush1.msra.mxu0 %v1052
    %1886 = vmatprep.subr.mxu0 0.0
    %1887 = vmatpush2.msra.mxu0 0.0
    %1888 = vmatprep.subr.mxu0 0.0
    %1889 = vmatpush2.msra.mxu0 0.0
    %1890 = vmatprep.subr.mxu0 0.0
    %1891 = vmatpush2.msra.mxu0 0.0
    %1892 = vmatprep.subr.mxu0 0.0
    %1893 = vmatpush2.msra.mxu0 0.0
    %1894 = vmatprep.subr.mxu0 0.0
    %1895 = vmatpush2.msra.mxu0 0.0
    %1896 = vmatprep.subr.mxu0 0.0
    %1897 = vmatpush2.msra.mxu0 0.0
    %1898 = vmatprep.subr.mxu0 0.0
    %1899 = vmatpush2.msra.mxu0 0.0
    %1900 = vmatprep.subr.mxu0 0.0
    %1901 = vmatpush2.msra.mxu0 0.0
    %1902 = vmatprep.subr.mxu0 0.0
    %1903 = vmatpush2.msra.mxu0 0.0
    %1904 = vmatprep.subr.mxu0 0.0
    %1905 = vmatpush2.msra.mxu0 0.0
    %1906 = vmatprep.subr.mxu0 0.0
    %1907 = vmatpush2.msra.mxu0 0.0
    %1908 = vmatprep.subr.mxu0 0.0
    %1909 = vmatpush2.msra.mxu0 0.0
    %1910 = vmatprep.subr.mxu0 0.0
    %1911 = vmatpush2.msra.mxu0 0.0
    %1912 = vmatprep.subr.mxu0 0.0
    %1913 = vmatpush2.msra.mxu0 0.0
    %1914 = vmatprep.subr.mxu0 0.0
    %1915 = vmatpush2.msra.mxu0 0.0
    %1916 = vmatprep.subr.mxu0 0.0
    %1917 = vmatpush2.msra.mxu0 0.0
    %1918 = vmatprep.mubr.f32.mxu0 0.0
    %1919 = vmatmul.mubr.f32.gmra.mxu0 %v1849
    %v1920 = vpop.f32.mrf.mxu0
    %v1921 = vadd.f32 0.0, %v1920
    %v1922 = vpop.f32.mrf.mxu0
    %1923 = vmatprep.mubr.f32.mxu0 0.0
    %1924 = vmatmul.mubr.f32.gmra.mxu0 %v1852
    %v1925 = vpop.f32.mrf.mxu0
    %v1926 = vadd.f32 0.0, %v1925
    %v1927 = vpop.f32.mrf.mxu0
    %1928 = vdwg.mxu0
    %v1930 = vsel %vm267, %v1834, 0
    %v1933 = vsel %vm267, %v1835, 0
    %1935 = vmatprep.subr.mxu0 0.0
    %1936 = vmatpush1.msra.mxu0 0.0
    %1937 = vmatprep.subr.mxu0 0.0
    %1938 = vmatpush1.msra.mxu0 0.0
    %1939 = vmatprep.subr.mxu0 0.0
    %1940 = vmatpush1.msra.mxu0 0.0
    %1941 = vmatprep.subr.mxu0 0.0
    %1942 = vmatpush1.msra.mxu0 0.0
    %1943 = vmatprep.subr.mxu0 0.0
    %1944 = vmatpush1.msra.mxu0 0.0
    %1945 = vmatprep.subr.mxu0 0.0
    %1946 = vmatpush1.msra.mxu0 0.0
    %1947 = vmatprep.subr.mxu0 0.0
    %1948 = vmatpush1.msra.mxu0 0.0
    %1949 = vmatprep.subr.mxu0 0.0
    %1950 = vmatpush1.msra.mxu0 0.0
    %1951 = vmatprep.subr.mxu0 0.0
    %1952 = vmatpush1.msra.mxu0 0.0
    %1953 = vmatprep.subr.mxu0 0.0
    %1954 = vmatpush1.msra.mxu0 0.0
    %1955 = vmatprep.subr.mxu0 0.0
    %1956 = vmatpush1.msra.mxu0 0.0
    %1957 = vmatprep.subr.mxu0 0.0
    %1958 = vmatpush1.msra.mxu0 0.0
    %1959 = vmatprep.subr.mxu0 0.0
    %1960 = vmatpush1.msra.mxu0 0.0
    %1961 = vmatprep.subr.mxu0 0.0
    %1962 = vmatpush1.msra.mxu0 0.0
    %1963 = vmatprep.subr.mxu0 0.0
    %1964 = vmatpush1.msra.mxu0 %v1067
    %1965 = vmatprep.subr.mxu0 0.0
    %1966 = vmatpush1.msra.mxu0 %v1062
    %1967 = vmatprep.subr.mxu0 0.0
    %1968 = vmatpush2.msra.mxu0 0.0
    %1969 = vmatprep.subr.mxu0 0.0
    %1970 = vmatpush2.msra.mxu0 0.0
    %1971 = vmatprep.subr.mxu0 0.0
    %1972 = vmatpush2.msra.mxu0 0.0
    %1973 = vmatprep.subr.mxu0 0.0
    %1974 = vmatpush2.msra.mxu0 0.0
    %1975 = vmatprep.subr.mxu0 0.0
    %1976 = vmatpush2.msra.mxu0 0.0
    %1977 = vmatprep.subr.mxu0 0.0
    %1978 = vmatpush2.msra.mxu0 0.0
    %1979 = vmatprep.subr.mxu0 0.0
    %1980 = vmatpush2.msra.mxu0 0.0
    %1981 = vmatprep.subr.mxu0 0.0
    %1982 = vmatpush2.msra.mxu0 0.0
    %1983 = vmatprep.subr.mxu0 0.0
    %1984 = vmatpush2.msra.mxu0 0.0
    %1985 = vmatprep.subr.mxu0 0.0
    %1986 = vmatpush2.msra.mxu0 0.0
    %1987 = vmatprep.subr.mxu0 0.0
    %1988 = vmatpush2.msra.mxu0 0.0
    %1989 = vmatprep.subr.mxu0 0.0
    %1990 = vmatpush2.msra.mxu0 0.0
    %1991 = vmatprep.subr.mxu0 0.0
    %1992 = vmatpush2.msra.mxu0 0.0
    %1993 = vmatprep.subr.mxu0 0.0
    %1994 = vmatpush2.msra.mxu0 0.0
    %1995 = vmatprep.subr.mxu0 0.0
    %1996 = vmatpush2.msra.mxu0 0.0
    %1997 = vmatprep.subr.mxu0 0.0
    %1998 = vmatpush2.msra.mxu0 0.0
    %1999 = vmatprep.mubr.f32.mxu0 0.0
    %2000 = vmatmul.mubr.f32.gmra.mxu0 %v1930
    %v2001 = vpop.f32.mrf.mxu0
    %v2002 = vadd.f32 0.0, %v2001
    %v2003 = vpop.f32.mrf.mxu0
    %2004 = vmatprep.mubr.f32.mxu0 0.0
    %2005 = vmatmul.mubr.f32.gmra.mxu0 %v1933
    %v2006 = vpop.f32.mrf.mxu0
    %v2007 = vadd.f32 0.0, %v2006
    %v2008 = vpop.f32.mrf.mxu0
    %2009 = vdwg.mxu0
    %v2011 = vsel %vm267, %v1836, 0
    %v2014 = vsel %vm267, %v1837, 0
    %2016 = vmatprep.subr.mxu0 0.0
    %2017 = vmatpush1.msra.mxu0 0.0
    %2018 = vmatprep.subr.mxu0 0.0
    %2019 = vmatpush1.msra.mxu0 0.0
    %2020 = vmatprep.subr.mxu0 0.0
    %2021 = vmatpush1.msra.mxu0 0.0
    %2022 = vmatprep.subr.mxu0 0.0
    %2023 = vmatpush1.msra.mxu0 0.0
    %2024 = vmatprep.subr.mxu0 0.0
    %2025 = vmatpush1.msra.mxu0 0.0
    %2026 = vmatprep.subr.mxu0 0.0
    %2027 = vmatpush1.msra.mxu0 0.0
    %2028 = vmatprep.subr.mxu0 0.0
    %2029 = vmatpush1.msra.mxu0 0.0
    %2030 = vmatprep.subr.mxu0 0.0
    %2031 = vmatpush1.msra.mxu0 0.0
    %2032 = vmatprep.subr.mxu0 0.0
    %2033 = vmatpush1.msra.mxu0 0.0
    %2034 = vmatprep.subr.mxu0 0.0
    %2035 = vmatpush1.msra.mxu0 0.0
    %2036 = vmatprep.subr.mxu0 0.0
    %2037 = vmatpush1.msra.mxu0 0.0
    %2038 = vmatprep.subr.mxu0 0.0
    %2039 = vmatpush1.msra.mxu0 0.0
    %2040 = vmatprep.subr.mxu0 0.0
    %2041 = vmatpush1.msra.mxu0 0.0
    %2042 = vmatprep.subr.mxu0 0.0
    %2043 = vmatpush1.msra.mxu0 0.0
    %2044 = vmatprep.subr.mxu0 0.0
    %2045 = vmatpush1.msra.mxu0 %v1077
    %2046 = vmatprep.subr.mxu0 0.0
    %2047 = vmatpush1.msra.mxu0 %v1072
    %2048 = vmatprep.subr.mxu0 0.0
    %2049 = vmatpush2.msra.mxu0 0.0
    %2050 = vmatprep.subr.mxu0 0.0
    %2051 = vmatpush2.msra.mxu0 0.0
    %2052 = vmatprep.subr.mxu0 0.0
    %2053 = vmatpush2.msra.mxu0 0.0
    %2054 = vmatprep.subr.mxu0 0.0
    %2055 = vmatpush2.msra.mxu0 0.0
    %2056 = vmatprep.subr.mxu0 0.0
    %2057 = vmatpush2.msra.mxu0 0.0
    %2058 = vmatprep.subr.mxu0 0.0
    %2059 = vmatpush2.msra.mxu0 0.0
    %2060 = vmatprep.subr.mxu0 0.0
    %2061 = vmatpush2.msra.mxu0 0.0
    %2062 = vmatprep.subr.mxu0 0.0
    %2063 = vmatpush2.msra.mxu0 0.0
    %2064 = vmatprep.subr.mxu0 0.0
    %2065 = vmatpush2.msra.mxu0 0.0
    %2066 = vmatprep.subr.mxu0 0.0
    %2067 = vmatpush2.msra.mxu0 0.0
    %2068 = vmatprep.subr.mxu0 0.0
    %2069 = vmatpush2.msra.mxu0 0.0
    %2070 = vmatprep.subr.mxu0 0.0
    %2071 = vmatpush2.msra.mxu0 0.0
    %2072 = vmatprep.subr.mxu0 0.0
    %2073 = vmatpush2.msra.mxu0 0.0
    %2074 = vmatprep.subr.mxu0 0.0
    %2075 = vmatpush2.msra.mxu0 0.0
    %2076 = vmatprep.subr.mxu0 0.0
    %2077 = vmatpush2.msra.mxu0 0.0
    %2078 = vmatprep.subr.mxu0 0.0
    %2079 = vmatpush2.msra.mxu0 0.0
    %2080 = vmatprep.mubr.f32.mxu0 0.0
    %2081 = vmatmul.mubr.f32.gmra.mxu0 %v2011
    %v2082 = vpop.f32.mrf.mxu0
    %v2083 = vadd.f32 0.0, %v2082
    %v2084 = vpop.f32.mrf.mxu0
    %2085 = vmatprep.mubr.f32.mxu0 0.0
    %2086 = vmatmul.mubr.f32.gmra.mxu0 %v2014
    %v2087 = vpop.f32.mrf.mxu0
    %v2088 = vadd.f32 0.0, %v2087
    %v2089 = vpop.f32.mrf.mxu0
    %2090 = vdwg.mxu0
    %v2092 = vsel %vm267, %v1838, 0
    %v2095 = vsel %vm267, %v1839, 0
    %2097 = vmatprep.subr.mxu0 0.0
    %2098 = vmatpush1.msra.mxu0 0.0
    %2099 = vmatprep.subr.mxu0 0.0
    %2100 = vmatpush1.msra.mxu0 0.0
    %2101 = vmatprep.subr.mxu0 0.0
    %2102 = vmatpush1.msra.mxu0 0.0
    %2103 = vmatprep.subr.mxu0 0.0
    %2104 = vmatpush1.msra.mxu0 0.0
    %2105 = vmatprep.subr.mxu0 0.0
    %2106 = vmatpush1.msra.mxu0 0.0
    %2107 = vmatprep.subr.mxu0 0.0
    %2108 = vmatpush1.msra.mxu0 0.0
    %2109 = vmatprep.subr.mxu0 0.0
    %2110 = vmatpush1.msra.mxu0 0.0
    %2111 = vmatprep.subr.mxu0 0.0
    %2112 = vmatpush1.msra.mxu0 0.0
    %2113 = vmatprep.subr.mxu0 0.0
    %2114 = vmatpush1.msra.mxu0 0.0
    %2115 = vmatprep.subr.mxu0 0.0
    %2116 = vmatpush1.msra.mxu0 0.0
    %2117 = vmatprep.subr.mxu0 0.0
    %2118 = vmatpush1.msra.mxu0 0.0
    %2119 = vmatprep.subr.mxu0 0.0
    %2120 = vmatpush1.msra.mxu0 0.0
    %2121 = vmatprep.subr.mxu0 0.0
    %2122 = vmatpush1.msra.mxu0 0.0
    %2123 = vmatprep.subr.mxu0 0.0
    %2124 = vmatpush1.msra.mxu0 0.0
    %2125 = vmatprep.subr.mxu0 0.0
    %2126 = vmatpush1.msra.mxu0 %v1087
    %2127 = vmatprep.subr.mxu0 0.0
    %2128 = vmatpush1.msra.mxu0 %v1082
    %2129 = vmatprep.subr.mxu0 0.0
    %2130 = vmatpush2.msra.mxu0 0.0
    %2131 = vmatprep.subr.mxu0 0.0
    %2132 = vmatpush2.msra.mxu0 0.0
    %2133 = vmatprep.subr.mxu0 0.0
    %2134 = vmatpush2.msra.mxu0 0.0
    %2135 = vmatprep.subr.mxu0 0.0
    %2136 = vmatpush2.msra.mxu0 0.0
    %2137 = vmatprep.subr.mxu0 0.0
    %2138 = vmatpush2.msra.mxu0 0.0
    %2139 = vmatprep.subr.mxu0 0.0
    %2140 = vmatpush2.msra.mxu0 0.0
    %2141 = vmatprep.subr.mxu0 0.0
    %2142 = vmatpush2.msra.mxu0 0.0
    %2143 = vmatprep.subr.mxu0 0.0
    %2144 = vmatpush2.msra.mxu0 0.0
    %2145 = vmatprep.subr.mxu0 0.0
    %2146 = vmatpush2.msra.mxu0 0.0
    %2147 = vmatprep.subr.mxu0 0.0
    %2148 = vmatpush2.msra.mxu0 0.0
    %2149 = vmatprep.subr.mxu0 0.0
    %2150 = vmatpush2.msra.mxu0 0.0
    %2151 = vmatprep.subr.mxu0 0.0
    %2152 = vmatpush2.msra.mxu0 0.0
    %2153 = vmatprep.subr.mxu0 0.0
    %2154 = vmatpush2.msra.mxu0 0.0
    %2155 = vmatprep.subr.mxu0 0.0
    %2156 = vmatpush2.msra.mxu0 0.0
    %2157 = vmatprep.subr.mxu0 0.0
    %2158 = vmatpush2.msra.mxu0 0.0
    %2159 = vmatprep.subr.mxu0 0.0
    %2160 = vmatpush2.msra.mxu0 0.0
    %2161 = vmatprep.mubr.f32.mxu0 0.0
    %2162 = vmatmul.mubr.f32.gmra.mxu0 %v2092
    %v2163 = vpop.f32.mrf.mxu0
    %v2164 = vadd.f32 0.0, %v2163
    %v2165 = vpop.f32.mrf.mxu0
    %2166 = vmatprep.mubr.f32.mxu0 0.0
    %2167 = vmatmul.mubr.f32.gmra.mxu0 %v2095
    %v2168 = vpop.f32.mrf.mxu0
    %v2169 = vadd.f32 0.0, %v2168
    %v2170 = vpop.f32.mrf.mxu0
    %2171 = vdwg.mxu0
    %v2173 = vsel %vm267, %v1840, 0
    %v2176 = vsel %vm267, %v1841, 0
    %2178 = vmatprep.subr.mxu0 0.0
    %2179 = vmatpush1.msra.mxu0 0.0
    %2180 = vmatprep.subr.mxu0 0.0
    %2181 = vmatpush1.msra.mxu0 0.0
    %2182 = vmatprep.subr.mxu0 0.0
    %2183 = vmatpush1.msra.mxu0 0.0
    %2184 = vmatprep.subr.mxu0 0.0
    %2185 = vmatpush1.msra.mxu0 0.0
    %2186 = vmatprep.subr.mxu0 0.0
    %2187 = vmatpush1.msra.mxu0 0.0
    %2188 = vmatprep.subr.mxu0 0.0
    %2189 = vmatpush1.msra.mxu0 0.0
    %2190 = vmatprep.subr.mxu0 0.0
    %2191 = vmatpush1.msra.mxu0 0.0
    %2192 = vmatprep.subr.mxu0 0.0
    %2193 = vmatpush1.msra.mxu0 0.0
    %2194 = vmatprep.subr.mxu0 0.0
    %2195 = vmatpush1.msra.mxu0 0.0
    %2196 = vmatprep.subr.mxu0 0.0
    %2197 = vmatpush1.msra.mxu0 0.0
    %2198 = vmatprep.subr.mxu0 0.0
    %2199 = vmatpush1.msra.mxu0 0.0
    %2200 = vmatprep.subr.mxu0 0.0
    %2201 = vmatpush1.msra.mxu0 0.0
    %2202 = vmatprep.subr.mxu0 0.0
    %2203 = vmatpush1.msra.mxu0 0.0
    %2204 = vmatprep.subr.mxu0 0.0
    %2205 = vmatpush1.msra.mxu0 0.0
    %2206 = vmatprep.subr.mxu0 0.0
    %2207 = vmatpush1.msra.mxu0 %v1097
    %2208 = vmatprep.subr.mxu0 0.0
    %2209 = vmatpush1.msra.mxu0 %v1092
    %2210 = vmatprep.subr.mxu0 0.0
    %2211 = vmatpush2.msra.mxu0 0.0
    %2212 = vmatprep.subr.mxu0 0.0
    %2213 = vmatpush2.msra.mxu0 0.0
    %2214 = vmatprep.subr.mxu0 0.0
    %2215 = vmatpush2.msra.mxu0 0.0
    %2216 = vmatprep.subr.mxu0 0.0
    %2217 = vmatpush2.msra.mxu0 0.0
    %2218 = vmatprep.subr.mxu0 0.0
    %2219 = vmatpush2.msra.mxu0 0.0
    %2220 = vmatprep.subr.mxu0 0.0
    %2221 = vmatpush2.msra.mxu0 0.0
    %2222 = vmatprep.subr.mxu0 0.0
    %2223 = vmatpush2.msra.mxu0 0.0
    %2224 = vmatprep.subr.mxu0 0.0
    %2225 = vmatpush2.msra.mxu0 0.0
    %2226 = vmatprep.subr.mxu0 0.0
    %2227 = vmatpush2.msra.mxu0 0.0
    %2228 = vmatprep.subr.mxu0 0.0
    %2229 = vmatpush2.msra.mxu0 0.0
    %2230 = vmatprep.subr.mxu0 0.0
    %2231 = vmatpush2.msra.mxu0 0.0
    %2232 = vmatprep.subr.mxu0 0.0
    %2233 = vmatpush2.msra.mxu0 0.0
    %2234 = vmatprep.subr.mxu0 0.0
    %2235 = vmatpush2.msra.mxu0 0.0
    %2236 = vmatprep.subr.mxu0 0.0
    %2237 = vmatpush2.msra.mxu0 0.0
    %2238 = vmatprep.subr.mxu0 0.0
    %2239 = vmatpush2.msra.mxu0 0.0
    %2240 = vmatprep.subr.mxu0 0.0
    %2241 = vmatpush2.msra.mxu0 0.0
    %2242 = vmatprep.mubr.f32.mxu0 0.0
    %2243 = vmatmul.mubr.f32.gmra.mxu0 %v2173
    %v2244 = vpop.f32.mrf.mxu0
    %v2245 = vadd.f32 0.0, %v2244
    %v2246 = vpop.f32.mrf.mxu0
    %2247 = vmatprep.mubr.f32.mxu0 0.0
    %2248 = vmatmul.mubr.f32.gmra.mxu0 %v2176
    %v2249 = vpop.f32.mrf.mxu0
    %v2250 = vadd.f32 0.0, %v2249
    %v2251 = vpop.f32.mrf.mxu0
    %2252 = vdwg.mxu0
    %v2254 = vsel %vm267, %v1842, 0
    %v2257 = vsel %vm267, %v1843, 0
    %2259 = vmatprep.subr.mxu0 0.0
    %2260 = vmatpush1.msra.mxu0 0.0
    %2261 = vmatprep.subr.mxu0 0.0
    %2262 = vmatpush1.msra.mxu0 0.0
    %2263 = vmatprep.subr.mxu0 0.0
    %2264 = vmatpush1.msra.mxu0 0.0
    %2265 = vmatprep.subr.mxu0 0.0
    %2266 = vmatpush1.msra.mxu0 0.0
    %2267 = vmatprep.subr.mxu0 0.0
    %2268 = vmatpush1.msra.mxu0 0.0
    %2269 = vmatprep.subr.mxu0 0.0
    %2270 = vmatpush1.msra.mxu0 0.0
    %2271 = vmatprep.subr.mxu0 0.0
    %2272 = vmatpush1.msra.mxu0 0.0
    %2273 = vmatprep.subr.mxu0 0.0
    %2274 = vmatpush1.msra.mxu0 0.0
    %2275 = vmatprep.subr.mxu0 0.0
    %2276 = vmatpush1.msra.mxu0 0.0
    %2277 = vmatprep.subr.mxu0 0.0
    %2278 = vmatpush1.msra.mxu0 0.0
    %2279 = vmatprep.subr.mxu0 0.0
    %2280 = vmatpush1.msra.mxu0 0.0
    %2281 = vmatprep.subr.mxu0 0.0
    %2282 = vmatpush1.msra.mxu0 0.0
    %2283 = vmatprep.subr.mxu0 0.0
    %2284 = vmatpush1.msra.mxu0 0.0
    %2285 = vmatprep.subr.mxu0 0.0
    %2286 = vmatpush1.msra.mxu0 0.0
    %2287 = vmatprep.subr.mxu0 0.0
    %2288 = vmatpush1.msra.mxu0 %v1107
    %2289 = vmatprep.subr.mxu0 0.0
    %2290 = vmatpush1.msra.mxu0 %v1102
    %2291 = vmatprep.subr.mxu0 0.0
    %2292 = vmatpush2.msra.mxu0 0.0
    %2293 = vmatprep.subr.mxu0 0.0
    %2294 = vmatpush2.msra.mxu0 0.0
    %2295 = vmatprep.subr.mxu0 0.0
    %2296 = vmatpush2.msra.mxu0 0.0
    %2297 = vmatprep.subr.mxu0 0.0
    %2298 = vmatpush2.msra.mxu0 0.0
    %2299 = vmatprep.subr.mxu0 0.0
    %2300 = vmatpush2.msra.mxu0 0.0
    %2301 = vmatprep.subr.mxu0 0.0
    %2302 = vmatpush2.msra.mxu0 0.0
    %2303 = vmatprep.subr.mxu0 0.0
    %2304 = vmatpush2.msra.mxu0 0.0
    %2305 = vmatprep.subr.mxu0 0.0
    %2306 = vmatpush2.msra.mxu0 0.0
    %2307 = vmatprep.subr.mxu0 0.0
    %2308 = vmatpush2.msra.mxu0 0.0
    %2309 = vmatprep.subr.mxu0 0.0
    %2310 = vmatpush2.msra.mxu0 0.0
    %2311 = vmatprep.subr.mxu0 0.0
    %2312 = vmatpush2.msra.mxu0 0.0
    %2313 = vmatprep.subr.mxu0 0.0
    %2314 = vmatpush2.msra.mxu0 0.0
    %2315 = vmatprep.subr.mxu0 0.0
    %2316 = vmatpush2.msra.mxu0 0.0
    %2317 = vmatprep.subr.mxu0 0.0
    %2318 = vmatpush2.msra.mxu0 0.0
    %2319 = vmatprep.subr.mxu0 0.0
    %2320 = vmatpush2.msra.mxu0 0.0
    %2321 = vmatprep.subr.mxu0 0.0
    %2322 = vmatpush2.msra.mxu0 0.0
    %2323 = vmatprep.mubr.f32.mxu0 0.0
    %2324 = vmatmul.mubr.f32.gmra.mxu0 %v2254
    %v2325 = vpop.f32.mrf.mxu0
    %v2326 = vadd.f32 0.0, %v2325
    %v2327 = vpop.f32.mrf.mxu0
    %2328 = vmatprep.mubr.f32.mxu0 0.0
    %2329 = vmatmul.mubr.f32.gmra.mxu0 %v2257
    %v2330 = vpop.f32.mrf.mxu0
    %v2331 = vadd.f32 0.0, %v2330
    %v2332 = vpop.f32.mrf.mxu0
    %2333 = vdwg.mxu0
    %v2335 = vsel %vm267, %v1844, 0
    %v2338 = vsel %vm267, %v1845, 0
    %2340 = vmatprep.subr.mxu0 0.0
    %2341 = vmatpush1.msra.mxu0 0.0
    %2342 = vmatprep.subr.mxu0 0.0
    %2343 = vmatpush1.msra.mxu0 0.0
    %2344 = vmatprep.subr.mxu0 0.0
    %2345 = vmatpush1.msra.mxu0 0.0
    %2346 = vmatprep.subr.mxu0 0.0
    %2347 = vmatpush1.msra.mxu0 0.0
    %2348 = vmatprep.subr.mxu0 0.0
    %2349 = vmatpush1.msra.mxu0 0.0
    %2350 = vmatprep.subr.mxu0 0.0
    %2351 = vmatpush1.msra.mxu0 0.0
    %2352 = vmatprep.subr.mxu0 0.0
    %2353 = vmatpush1.msra.mxu0 0.0
    %2354 = vmatprep.subr.mxu0 0.0
    %2355 = vmatpush1.msra.mxu0 0.0
    %2356 = vmatprep.subr.mxu0 0.0
    %2357 = vmatpush1.msra.mxu0 0.0
    %2358 = vmatprep.subr.mxu0 0.0
    %2359 = vmatpush1.msra.mxu0 0.0
    %2360 = vmatprep.subr.mxu0 0.0
    %2361 = vmatpush1.msra.mxu0 0.0
    %2362 = vmatprep.subr.mxu0 0.0
    %2363 = vmatpush1.msra.mxu0 0.0
    %2364 = vmatprep.subr.mxu0 0.0
    %2365 = vmatpush1.msra.mxu0 0.0
    %2366 = vmatprep.subr.mxu0 0.0
    %2367 = vmatpush1.msra.mxu0 0.0
    %2368 = vmatprep.subr.mxu0 0.0
    %2369 = vmatpush1.msra.mxu0 %v1117
    %2370 = vmatprep.subr.mxu0 0.0
    %2371 = vmatpush1.msra.mxu0 %v1112
    %2372 = vmatprep.subr.mxu0 0.0
    %2373 = vmatpush2.msra.mxu0 0.0
    %2374 = vmatprep.subr.mxu0 0.0
    %2375 = vmatpush2.msra.mxu0 0.0
    %2376 = vmatprep.subr.mxu0 0.0
    %2377 = vmatpush2.msra.mxu0 0.0
    %2378 = vmatprep.subr.mxu0 0.0
    %2379 = vmatpush2.msra.mxu0 0.0
    %2380 = vmatprep.subr.mxu0 0.0
    %2381 = vmatpush2.msra.mxu0 0.0
    %2382 = vmatprep.subr.mxu0 0.0
    %2383 = vmatpush2.msra.mxu0 0.0
    %2384 = vmatprep.subr.mxu0 0.0
    %2385 = vmatpush2.msra.mxu0 0.0
    %2386 = vmatprep.subr.mxu0 0.0
    %2387 = vmatpush2.msra.mxu0 0.0
    %2388 = vmatprep.subr.mxu0 0.0
    %2389 = vmatpush2.msra.mxu0 0.0
    %2390 = vmatprep.subr.mxu0 0.0
    %2391 = vmatpush2.msra.mxu0 0.0
    %2392 = vmatprep.subr.mxu0 0.0
    %2393 = vmatpush2.msra.mxu0 0.0
    %2394 = vmatprep.subr.mxu0 0.0
    %2395 = vmatpush2.msra.mxu0 0.0
    %2396 = vmatprep.subr.mxu0 0.0
    %2397 = vmatpush2.msra.mxu0 0.0
    %2398 = vmatprep.subr.mxu0 0.0
    %2399 = vmatpush2.msra.mxu0 0.0
    %2400 = vmatprep.subr.mxu0 0.0
    %2401 = vmatpush2.msra.mxu0 0.0
    %2402 = vmatprep.subr.mxu0 0.0
    %2403 = vmatpush2.msra.mxu0 0.0
    %2404 = vmatprep.mubr.f32.mxu0 0.0
    %2405 = vmatmul.mubr.f32.gmra.mxu0 %v2335
    %v2406 = vpop.f32.mrf.mxu0
    %v2407 = vadd.f32 0.0, %v2406
    %v2408 = vpop.f32.mrf.mxu0
    %2409 = vmatprep.mubr.f32.mxu0 0.0
    %2410 = vmatmul.mubr.f32.gmra.mxu0 %v2338
    %v2411 = vpop.f32.mrf.mxu0
    %v2412 = vadd.f32 0.0, %v2411
    %v2413 = vpop.f32.mrf.mxu0
    %2414 = vdwg.mxu0
    %v2416 = vsel %vm267, %v1846, 0
    %v2419 = vsel %vm267, %v1847, 0
    %2421 = vmatprep.subr.mxu0 0.0
    %2422 = vmatpush1.msra.mxu0 0.0
    %2423 = vmatprep.subr.mxu0 0.0
    %2424 = vmatpush1.msra.mxu0 0.0
    %2425 = vmatprep.subr.mxu0 0.0
    %2426 = vmatpush1.msra.mxu0 0.0
    %2427 = vmatprep.subr.mxu0 0.0
    %2428 = vmatpush1.msra.mxu0 0.0
    %2429 = vmatprep.subr.mxu0 0.0
    %2430 = vmatpush1.msra.mxu0 0.0
    %2431 = vmatprep.subr.mxu0 0.0
    %2432 = vmatpush1.msra.mxu0 0.0
    %2433 = vmatprep.subr.mxu0 0.0
    %2434 = vmatpush1.msra.mxu0 0.0
    %2435 = vmatprep.subr.mxu0 0.0
    %2436 = vmatpush1.msra.mxu0 0.0
    %2437 = vmatprep.subr.mxu0 0.0
    %2438 = vmatpush1.msra.mxu0 0.0
    %2439 = vmatprep.subr.mxu0 0.0
    %2440 = vmatpush1.msra.mxu0 0.0
    %2441 = vmatprep.subr.mxu0 0.0
    %2442 = vmatpush1.msra.mxu0 0.0
    %2443 = vmatprep.subr.mxu0 0.0
    %2444 = vmatpush1.msra.mxu0 0.0
    %2445 = vmatprep.subr.mxu0 0.0
    %2446 = vmatpush1.msra.mxu0 0.0
    %2447 = vmatprep.subr.mxu0 0.0
    %2448 = vmatpush1.msra.mxu0 0.0
    %2449 = vmatprep.subr.mxu0 0.0
    %2450 = vmatpush1.msra.mxu0 %v1127
    %2451 = vmatprep.subr.mxu0 0.0
    %2452 = vmatpush1.msra.mxu0 %v1122
    %2453 = vmatprep.subr.mxu0 0.0
    %2454 = vmatpush2.msra.mxu0 0.0
    %2455 = vmatprep.subr.mxu0 0.0
    %2456 = vmatpush2.msra.mxu0 0.0
    %2457 = vmatprep.subr.mxu0 0.0
    %2458 = vmatpush2.msra.mxu0 0.0
    %2459 = vmatprep.subr.mxu0 0.0
    %2460 = vmatpush2.msra.mxu0 0.0
    %2461 = vmatprep.subr.mxu0 0.0
    %2462 = vmatpush2.msra.mxu0 0.0
    %2463 = vmatprep.subr.mxu0 0.0
    %2464 = vmatpush2.msra.mxu0 0.0
    %2465 = vmatprep.subr.mxu0 0.0
    %2466 = vmatpush2.msra.mxu0 0.0
    %2467 = vmatprep.subr.mxu0 0.0
    %2468 = vmatpush2.msra.mxu0 0.0
    %2469 = vmatprep.subr.mxu0 0.0
    %2470 = vmatpush2.msra.mxu0 0.0
    %2471 = vmatprep.subr.mxu0 0.0
    %2472 = vmatpush2.msra.mxu0 0.0
    %2473 = vmatprep.subr.mxu0 0.0
    %2474 = vmatpush2.msra.mxu0 0.0
    %2475 = vmatprep.subr.mxu0 0.0
    %2476 = vmatpush2.msra.mxu0 0.0
    %2477 = vmatprep.subr.mxu0 0.0
    %2478 = vmatpush2.msra.mxu0 0.0
    %2479 = vmatprep.subr.mxu0 0.0
    %2480 = vmatpush2.msra.mxu0 0.0
    %2481 = vmatprep.subr.mxu0 0.0
    %2482 = vmatpush2.msra.mxu0 0.0
    %2483 = vmatprep.subr.mxu0 0.0
    %2484 = vmatpush2.msra.mxu0 0.0
    %2485 = vmatprep.mubr.f32.mxu0 0.0
    %2486 = vmatmul.mubr.f32.gmra.mxu0 %v2416
    %v2487 = vpop.f32.mrf.mxu0
    %v2488 = vadd.f32 0.0, %v2487
    %v2489 = vpop.f32.mrf.mxu0
    %2490 = vmatprep.mubr.f32.mxu0 0.0
    %2491 = vmatmul.mubr.f32.gmra.mxu0 %v2419
    %v2492 = vpop.f32.mrf.mxu0
    %v2493 = vadd.f32 0.0, %v2492
    %v2494 = vpop.f32.mrf.mxu0
    %2495 = vdwg.mxu0
    %v2496 = vsel %vm267, %v1921, -inf
    %2497 = vmax.xlane.f32.xlu0 %v2496
    %v2498 = vpop.xlane.xlu0 %2497
    %v2499 = vsel %vm267, %v1926, -inf
    %2500 = vmax.xlane.f32.xlu0 %v2499
    %v2501 = vpop.xlane.xlu0 %2500
    %v2502 = vsel %vm267, %v2002, -inf
    %2503 = vmax.xlane.f32.xlu0 %v2502
    %v2504 = vpop.xlane.xlu0 %2503
    %v2505 = vsel %vm267, %v2007, -inf
    %2506 = vmax.xlane.f32.xlu0 %v2505
    %v2507 = vpop.xlane.xlu0 %2506
    %v2508 = vsel %vm267, %v2083, -inf
    %2509 = vmax.xlane.f32.xlu0 %v2508
    %v2510 = vpop.xlane.xlu0 %2509
    %v2511 = vsel %vm267, %v2088, -inf
    %2512 = vmax.xlane.f32.xlu0 %v2511
    %v2513 = vpop.xlane.xlu0 %2512
    %v2514 = vsel %vm267, %v2164, -inf
    %2515 = vmax.xlane.f32.xlu0 %v2514
    %v2516 = vpop.xlane.xlu0 %2515
    %v2517 = vsel %vm267, %v2169, -inf
    %2518 = vmax.xlane.f32.xlu0 %v2517
    %v2519 = vpop.xlane.xlu0 %2518
    %v2520 = vsel %vm267, %v2245, -inf
    %2521 = vmax.xlane.f32.xlu0 %v2520
    %v2522 = vpop.xlane.xlu0 %2521
    %v2523 = vsel %vm267, %v2250, -inf
    %2524 = vmax.xlane.f32.xlu0 %v2523
    %v2525 = vpop.xlane.xlu0 %2524
    %v2526 = vsel %vm267, %v2326, -inf
    %2527 = vmax.xlane.f32.xlu0 %v2526
    %v2528 = vpop.xlane.xlu0 %2527
    %v2529 = vsel %vm267, %v2331, -inf
    %2530 = vmax.xlane.f32.xlu0 %v2529
    %v2531 = vpop.xlane.xlu0 %2530
    %v2532 = vsel %vm267, %v2407, -inf
    %2533 = vmax.xlane.f32.xlu0 %v2532
    %v2534 = vpop.xlane.xlu0 %2533
    %v2535 = vsel %vm267, %v2412, -inf
    %2536 = vmax.xlane.f32.xlu0 %v2535
    %v2537 = vpop.xlane.xlu0 %2536
    %v2538 = vsel %vm267, %v2488, -inf
    %2539 = vmax.xlane.f32.xlu0 %v2538
    %v2540 = vpop.xlane.xlu0 %2539
    %v2541 = vsel %vm267, %v2493, -inf
    %2542 = vmax.xlane.f32.xlu0 %v2541
    %v2543 = vpop.xlane.xlu0 %2542
    %v2544 = vsub.f32 %v1921, %v2498
    %v2545 = vsub.f32 %v1926, %v2501
    %v2546 = vsub.f32 %v2002, %v2504
    %v2547 = vsub.f32 %v2007, %v2507
    %v2548 = vsub.f32 %v2083, %v2510
    %v2549 = vsub.f32 %v2088, %v2513
    %v2550 = vsub.f32 %v2164, %v2516
    %v2551 = vsub.f32 %v2169, %v2519
    %v2552 = vsub.f32 %v2245, %v2522
    %v2553 = vsub.f32 %v2250, %v2525
    %v2554 = vsub.f32 %v2326, %v2528
    %v2555 = vsub.f32 %v2331, %v2531
    %v2556 = vsub.f32 %v2407, %v2534
    %v2557 = vsub.f32 %v2412, %v2537
    %v2558 = vsub.f32 %v2488, %v2540
    %v2559 = vsub.f32 %v2493, %v2543
    %v2560 = vmul.f32 %v2544, 1.442695
    %v2561 = vpow.pop %v2560
    %v2562 = vmul.f32 %v2545, 1.442695
    %v2563 = vpow.pop %v2562
    %v2564 = vmul.f32 %v2546, 1.442695
    %v2565 = vpow.pop %v2564
    %v2566 = vmul.f32 %v2547, 1.442695
    %v2567 = vpow.pop %v2566
    %v2568 = vmul.f32 %v2548, 1.442695
    %v2569 = vpow.pop %v2568
    %v2570 = vmul.f32 %v2549, 1.442695
    %v2571 = vpow.pop %v2570
    %v2572 = vmul.f32 %v2550, 1.442695
    %v2573 = vpow.pop %v2572
    %v2574 = vmul.f32 %v2551, 1.442695
    %v2575 = vpow.pop %v2574
    %v2576 = vmul.f32 %v2552, 1.442695
    %v2577 = vpow.pop %v2576
    %v2578 = vmul.f32 %v2553, 1.442695
    %v2579 = vpow.pop %v2578
    %v2580 = vmul.f32 %v2554, 1.442695
    %v2581 = vpow.pop %v2580
    %v2582 = vmul.f32 %v2555, 1.442695
    %v2583 = vpow.pop %v2582
    %v2584 = vmul.f32 %v2556, 1.442695
    %v2585 = vpow.pop %v2584
    %v2586 = vmul.f32 %v2557, 1.442695
    %v2587 = vpow.pop %v2586
    %v2588 = vmul.f32 %v2558, 1.442695
    %v2589 = vpow.pop %v2588
    %v2590 = vmul.f32 %v2559, 1.442695
    %v2591 = vpow.pop %v2590
    %v2592 = vsel %vm267, %v2561, 0.0
    %2593 = vadd.xlane.f32.xlu0 %v2592
    %v2594 = vpop.xlane.xlu0 %2593
    %v2595 = vsel %vm267, %v2563, 0.0
    %2596 = vadd.xlane.f32.xlu0 %v2595
    %v2597 = vpop.xlane.xlu0 %2596
    %v2598 = vsel %vm267, %v2565, 0.0
    %2599 = vadd.xlane.f32.xlu0 %v2598
    %v2600 = vpop.xlane.xlu0 %2599
    %v2601 = vsel %vm267, %v2567, 0.0
    %2602 = vadd.xlane.f32.xlu0 %v2601
    %v2603 = vpop.xlane.xlu0 %2602
    %v2604 = vsel %vm267, %v2569, 0.0
    %2605 = vadd.xlane.f32.xlu0 %v2604
    %v2606 = vpop.xlane.xlu0 %2605
    %v2607 = vsel %vm267, %v2571, 0.0
    %2608 = vadd.xlane.f32.xlu0 %v2607
    %v2609 = vpop.xlane.xlu0 %2608
    %v2610 = vsel %vm267, %v2573, 0.0
    %2611 = vadd.xlane.f32.xlu0 %v2610
    %v2612 = vpop.xlane.xlu0 %2611
    %v2613 = vsel %vm267, %v2575, 0.0
    %2614 = vadd.xlane.f32.xlu0 %v2613
    %v2615 = vpop.xlane.xlu0 %2614
    %v2616 = vsel %vm267, %v2577, 0.0
    %2617 = vadd.xlane.f32.xlu0 %v2616
    %v2618 = vpop.xlane.xlu0 %2617
    %v2619 = vsel %vm267, %v2579, 0.0
    %2620 = vadd.xlane.f32.xlu0 %v2619
    %v2621 = vpop.xlane.xlu0 %2620
    %v2622 = vsel %vm267, %v2581, 0.0
    %2623 = vadd.xlane.f32.xlu0 %v2622
    %v2624 = vpop.xlane.xlu0 %2623
    %v2625 = vsel %vm267, %v2583, 0.0
    %2626 = vadd.xlane.f32.xlu0 %v2625
    %v2627 = vpop.xlane.xlu0 %2626
    %v2628 = vsel %vm267, %v2585, 0.0
    %2629 = vadd.xlane.f32.xlu0 %v2628
    %v2630 = vpop.xlane.xlu0 %2629
    %v2631 = vsel %vm267, %v2587, 0.0
    %2632 = vadd.xlane.f32.xlu0 %v2631
    %v2633 = vpop.xlane.xlu0 %2632
    %v2634 = vsel %vm267, %v2589, 0.0
    %2635 = vadd.xlane.f32.xlu0 %v2634
    %v2636 = vpop.xlane.xlu0 %2635
    %v2637 = vsel %vm267, %v2591, 0.0
    %2638 = vadd.xlane.f32.xlu0 %v2637
    %v2639 = vpop.xlane.xlu0 %2638
    %v2640 = vrcp.pop %v2594
    %v2641 = vrcp.pop %v2597
    %v2642 = vrcp.pop %v2600
    %v2643 = vrcp.pop %v2603
    %v2644 = vrcp.pop %v2606
    %v2645 = vrcp.pop %v2609
    %v2646 = vrcp.pop %v2612
    %v2647 = vrcp.pop %v2615
    %v2648 = vrcp.pop %v2618
    %v2649 = vrcp.pop %v2621
    %v2650 = vrcp.pop %v2624
    %v2651 = vrcp.pop %v2627
    %v2652 = vrcp.pop %v2630
    %v2653 = vrcp.pop %v2633
    %v2654 = vrcp.pop %v2636
    %v2655 = vrcp.pop %v2639
    %v2656 = vmul.f32 %v2561, %v2640
    %v2657 = vmul.f32 %v2563, %v2641
    %v2658 = vmul.f32 %v2565, %v2642
    %v2659 = vmul.f32 %v2567, %v2643
    %v2660 = vmul.f32 %v2569, %v2644
    %v2661 = vmul.f32 %v2571, %v2645
    %v2662 = vmul.f32 %v2573, %v2646
    %v2663 = vmul.f32 %v2575, %v2647
    %v2664 = vmul.f32 %v2577, %v2648
    %v2665 = vmul.f32 %v2579, %v2649
    %v2666 = vmul.f32 %v2581, %v2650
    %v2667 = vmul.f32 %v2583, %v2651
    %v2668 = vmul.f32 %v2585, %v2652
    %v2669 = vmul.f32 %v2587, %v2653
    %v2670 = vmul.f32 %v2589, %v2654
    %v2671 = vmul.f32 %v2591, %v2655
    %v2673 = vsel %vm267, %v2656, 0
    %v2676 = vsel %vm267, %v2657, 0
    %v2679 = vsel %vm267, %v1132, 0
    %v2682 = vsel %vm267, %v1137, 0
    %2684 = vmatprep.subr.mxu0 0.0
    %2685 = vmatpush1.xpose.msra.mxu0 0.0
    %2686 = vmatprep.subr.mxu0 0.0
    %2687 = vmatpush1.xpose.msra.mxu0 0.0
    %2688 = vmatprep.subr.mxu0 0.0
    %2689 = vmatpush1.xpose.msra.mxu0 0.0
    %2690 = vmatprep.subr.mxu0 0.0
    %2691 = vmatpush1.xpose.msra.mxu0 0.0
    %2692 = vmatprep.subr.mxu0 0.0
    %2693 = vmatpush1.xpose.msra.mxu0 0.0
    %2694 = vmatprep.subr.mxu0 0.0
    %2695 = vmatpush1.xpose.msra.mxu0 0.0
    %2696 = vmatprep.subr.mxu0 0.0
    %2697 = vmatpush1.xpose.msra.mxu0 0.0
    %2698 = vmatprep.subr.mxu0 0.0
    %2699 = vmatpush1.xpose.msra.mxu0 0.0
    %2700 = vmatprep.subr.mxu0 0.0
    %2701 = vmatpush1.xpose.msra.mxu0 0.0
    %2702 = vmatprep.subr.mxu0 0.0
    %2703 = vmatpush1.xpose.msra.mxu0 0.0
    %2704 = vmatprep.subr.mxu0 0.0
    %2705 = vmatpush1.xpose.msra.mxu0 0.0
    %2706 = vmatprep.subr.mxu0 0.0
    %2707 = vmatpush1.xpose.msra.mxu0 0.0
    %2708 = vmatprep.subr.mxu0 0.0
    %2709 = vmatpush1.xpose.msra.mxu0 0.0
    %2710 = vmatprep.subr.mxu0 0.0
    %2711 = vmatpush1.xpose.msra.mxu0 0.0
    %2712 = vmatprep.subr.mxu0 0.0
    %2713 = vmatpush1.xpose.msra.mxu0 %v2682
    %2714 = vmatprep.subr.mxu0 0.0
    %2715 = vmatpush1.xpose.msra.mxu0 %v2679
    %2716 = vmatprep.subr.mxu0 0.0
    %2717 = vmatpush2.xpose.msra.mxu0 0.0
    %2718 = vmatprep.subr.mxu0 0.0
    %2719 = vmatpush2.xpose.msra.mxu0 0.0
    %2720 = vmatprep.subr.mxu0 0.0
    %2721 = vmatpush2.xpose.msra.mxu0 0.0
    %2722 = vmatprep.subr.mxu0 0.0
    %2723 = vmatpush2.xpose.msra.mxu0 0.0
    %2724 = vmatprep.subr.mxu0 0.0
    %2725 = vmatpush2.xpose.msra.mxu0 0.0
    %2726 = vmatprep.subr.mxu0 0.0
    %2727 = vmatpush2.xpose.msra.mxu0 0.0
    %2728 = vmatprep.subr.mxu0 0.0
    %2729 = vmatpush2.xpose.msra.mxu0 0.0
    %2730 = vmatprep.subr.mxu0 0.0
    %2731 = vmatpush2.xpose.msra.mxu0 0.0
    %2732 = vmatprep.subr.mxu0 0.0
    %2733 = vmatpush2.xpose.msra.mxu0 0.0
    %2734 = vmatprep.subr.mxu0 0.0
    %2735 = vmatpush2.xpose.msra.mxu0 0.0
    %2736 = vmatprep.subr.mxu0 0.0
    %2737 = vmatpush2.xpose.msra.mxu0 0.0
    %2738 = vmatprep.subr.mxu0 0.0
    %2739 = vmatpush2.xpose.msra.mxu0 0.0
    %2740 = vmatprep.subr.mxu0 0.0
    %2741 = vmatpush2.xpose.msra.mxu0 0.0
    %2742 = vmatprep.subr.mxu0 0.0
    %2743 = vmatpush2.xpose.msra.mxu0 0.0
    %2744 = vmatprep.subr.mxu0 0.0
    %2745 = vmatpush2.xpose.msra.mxu0 0.0
    %2746 = vmatprep.subr.mxu0 0.0
    %2747 = vmatpush2.xpose.msra.mxu0 0.0
    %2748 = vmatprep.mubr.f32.mxu0 0.0
    %2749 = vmatmul.mubr.f32.gmra.mxu0 %v2673
    %v2750 = vpop.f32.mrf.mxu0
    %v2751 = vadd.f32 0.0, %v2750
    %v2752 = vpop.f32.mrf.mxu0
    %2753 = vmatprep.mubr.f32.mxu0 0.0
    %2754 = vmatmul.mubr.f32.gmra.mxu0 %v2676
    %v2755 = vpop.f32.mrf.mxu0
    %v2756 = vadd.f32 0.0, %v2755
    %v2757 = vpop.f32.mrf.mxu0
    %2758 = vdwg.mxu0
    %v2760 = vsel %vm267, %v2658, 0
    %v2763 = vsel %vm267, %v2659, 0
    %v2766 = vsel %vm267, %v1142, 0
    %v2769 = vsel %vm267, %v1147, 0
    %2771 = vmatprep.subr.mxu0 0.0
    %2772 = vmatpush1.xpose.msra.mxu0 0.0
    %2773 = vmatprep.subr.mxu0 0.0
    %2774 = vmatpush1.xpose.msra.mxu0 0.0
    %2775 = vmatprep.subr.mxu0 0.0
    %2776 = vmatpush1.xpose.msra.mxu0 0.0
    %2777 = vmatprep.subr.mxu0 0.0
    %2778 = vmatpush1.xpose.msra.mxu0 0.0
    %2779 = vmatprep.subr.mxu0 0.0
    %2780 = vmatpush1.xpose.msra.mxu0 0.0
    %2781 = vmatprep.subr.mxu0 0.0
    %2782 = vmatpush1.xpose.msra.mxu0 0.0
    %2783 = vmatprep.subr.mxu0 0.0
    %2784 = vmatpush1.xpose.msra.mxu0 0.0
    %2785 = vmatprep.subr.mxu0 0.0
    %2786 = vmatpush1.xpose.msra.mxu0 0.0
    %2787 = vmatprep.subr.mxu0 0.0
    %2788 = vmatpush1.xpose.msra.mxu0 0.0
    %2789 = vmatprep.subr.mxu0 0.0
    %2790 = vmatpush1.xpose.msra.mxu0 0.0
    %2791 = vmatprep.subr.mxu0 0.0
    %2792 = vmatpush1.xpose.msra.mxu0 0.0
    %2793 = vmatprep.subr.mxu0 0.0
    %2794 = vmatpush1.xpose.msra.mxu0 0.0
    %2795 = vmatprep.subr.mxu0 0.0
    %2796 = vmatpush1.xpose.msra.mxu0 0.0
    %2797 = vmatprep.subr.mxu0 0.0
    %2798 = vmatpush1.xpose.msra.mxu0 0.0
    %2799 = vmatprep.subr.mxu0 0.0
    %2800 = vmatpush1.xpose.msra.mxu0 %v2769
    %2801 = vmatprep.subr.mxu0 0.0
    %2802 = vmatpush1.xpose.msra.mxu0 %v2766
    %2803 = vmatprep.subr.mxu0 0.0
    %2804 = vmatpush2.xpose.msra.mxu0 0.0
    %2805 = vmatprep.subr.mxu0 0.0
    %2806 = vmatpush2.xpose.msra.mxu0 0.0
    %2807 = vmatprep.subr.mxu0 0.0
    %2808 = vmatpush2.xpose.msra.mxu0 0.0
    %2809 = vmatprep.subr.mxu0 0.0
    %2810 = vmatpush2.xpose.msra.mxu0 0.0
    %2811 = vmatprep.subr.mxu0 0.0
    %2812 = vmatpush2.xpose.msra.mxu0 0.0
    %2813 = vmatprep.subr.mxu0 0.0
    %2814 = vmatpush2.xpose.msra.mxu0 0.0
    %2815 = vmatprep.subr.mxu0 0.0
    %2816 = vmatpush2.xpose.msra.mxu0 0.0
    %2817 = vmatprep.subr.mxu0 0.0
    %2818 = vmatpush2.xpose.msra.mxu0 0.0
    %2819 = vmatprep.subr.mxu0 0.0
    %2820 = vmatpush2.xpose.msra.mxu0 0.0
    %2821 = vmatprep.subr.mxu0 0.0
    %2822 = vmatpush2.xpose.msra.mxu0 0.0
    %2823 = vmatprep.subr.mxu0 0.0
    %2824 = vmatpush2.xpose.msra.mxu0 0.0
    %2825 = vmatprep.subr.mxu0 0.0
    %2826 = vmatpush2.xpose.msra.mxu0 0.0
    %2827 = vmatprep.subr.mxu0 0.0
    %2828 = vmatpush2.xpose.msra.mxu0 0.0
    %2829 = vmatprep.subr.mxu0 0.0
    %2830 = vmatpush2.xpose.msra.mxu0 0.0
    %2831 = vmatprep.subr.mxu0 0.0
    %2832 = vmatpush2.xpose.msra.mxu0 0.0
    %2833 = vmatprep.subr.mxu0 0.0
    %2834 = vmatpush2.xpose.msra.mxu0 0.0
    %2835 = vmatprep.mubr.f32.mxu0 0.0
    %2836 = vmatmul.mubr.f32.gmra.mxu0 %v2760
    %v2837 = vpop.f32.mrf.mxu0
    %v2838 = vadd.f32 0.0, %v2837
    %v2839 = vpop.f32.mrf.mxu0
    %2840 = vmatprep.mubr.f32.mxu0 0.0
    %2841 = vmatmul.mubr.f32.gmra.mxu0 %v2763
    %v2842 = vpop.f32.mrf.mxu0
    %v2843 = vadd.f32 0.0, %v2842
    %v2844 = vpop.f32.mrf.mxu0
    %2845 = vdwg.mxu0
    %v2847 = vsel %vm267, %v2660, 0
    %v2850 = vsel %vm267, %v2661, 0
    %v2853 = vsel %vm267, %v1152, 0
    %v2856 = vsel %vm267, %v1157, 0
    %2858 = vmatprep.subr.mxu0 0.0
    %2859 = vmatpush1.xpose.msra.mxu0 0.0
    %2860 = vmatprep.subr.mxu0 0.0
    %2861 = vmatpush1.xpose.msra.mxu0 0.0
    %2862 = vmatprep.subr.mxu0 0.0
    %2863 = vmatpush1.xpose.msra.mxu0 0.0
    %2864 = vmatprep.subr.mxu0 0.0
    %2865 = vmatpush1.xpose.msra.mxu0 0.0
    %2866 = vmatprep.subr.mxu0 0.0
    %2867 = vmatpush1.xpose.msra.mxu0 0.0
    %2868 = vmatprep.subr.mxu0 0.0
    %2869 = vmatpush1.xpose.msra.mxu0 0.0
    %2870 = vmatprep.subr.mxu0 0.0
    %2871 = vmatpush1.xpose.msra.mxu0 0.0
    %2872 = vmatprep.subr.mxu0 0.0
    %2873 = vmatpush1.xpose.msra.mxu0 0.0
    %2874 = vmatprep.subr.mxu0 0.0
    %2875 = vmatpush1.xpose.msra.mxu0 0.0
    %2876 = vmatprep.subr.mxu0 0.0
    %2877 = vmatpush1.xpose.msra.mxu0 0.0
    %2878 = vmatprep.subr.mxu0 0.0
    %2879 = vmatpush1.xpose.msra.mxu0 0.0
    %2880 = vmatprep.subr.mxu0 0.0
    %2881 = vmatpush1.xpose.msra.mxu0 0.0
    %2882 = vmatprep.subr.mxu0 0.0
    %2883 = vmatpush1.xpose.msra.mxu0 0.0
    %2884 = vmatprep.subr.mxu0 0.0
    %2885 = vmatpush1.xpose.msra.mxu0 0.0
    %2886 = vmatprep.subr.mxu0 0.0
    %2887 = vmatpush1.xpose.msra.mxu0 %v2856
    %2888 = vmatprep.subr.mxu0 0.0
    %2889 = vmatpush1.xpose.msra.mxu0 %v2853
    %2890 = vmatprep.subr.mxu0 0.0
    %2891 = vmatpush2.xpose.msra.mxu0 0.0
    %2892 = vmatprep.subr.mxu0 0.0
    %2893 = vmatpush2.xpose.msra.mxu0 0.0
    %2894 = vmatprep.subr.mxu0 0.0
    %2895 = vmatpush2.xpose.msra.mxu0 0.0
    %2896 = vmatprep.subr.mxu0 0.0
    %2897 = vmatpush2.xpose.msra.mxu0 0.0
    %2898 = vmatprep.subr.mxu0 0.0
    %2899 = vmatpush2.xpose.msra.mxu0 0.0
    %2900 = vmatprep.subr.mxu0 0.0
    %2901 = vmatpush2.xpose.msra.mxu0 0.0
    %2902 = vmatprep.subr.mxu0 0.0
    %2903 = vmatpush2.xpose.msra.mxu0 0.0
    %2904 = vmatprep.subr.mxu0 0.0
    %2905 = vmatpush2.xpose.msra.mxu0 0.0
    %2906 = vmatprep.subr.mxu0 0.0
    %2907 = vmatpush2.xpose.msra.mxu0 0.0
    %2908 = vmatprep.subr.mxu0 0.0
    %2909 = vmatpush2.xpose.msra.mxu0 0.0
    %2910 = vmatprep.subr.mxu0 0.0
    %2911 = vmatpush2.xpose.msra.mxu0 0.0
    %2912 = vmatprep.subr.mxu0 0.0
    %2913 = vmatpush2.xpose.msra.mxu0 0.0
    %2914 = vmatprep.subr.mxu0 0.0
    %2915 = vmatpush2.xpose.msra.mxu0 0.0
    %2916 = vmatprep.subr.mxu0 0.0
    %2917 = vmatpush2.xpose.msra.mxu0 0.0
    %2918 = vmatprep.subr.mxu0 0.0
    %2919 = vmatpush2.xpose.msra.mxu0 0.0
    %2920 = vmatprep.subr.mxu0 0.0
    %2921 = vmatpush2.xpose.msra.mxu0 0.0
    %2922 = vmatprep.mubr.f32.mxu0 0.0
    %2923 = vmatmul.mubr.f32.gmra.mxu0 %v2847
    %v2924 = vpop.f32.mrf.mxu0
    %v2925 = vadd.f32 0.0, %v2924
    %v2926 = vpop.f32.mrf.mxu0
    %2927 = vmatprep.mubr.f32.mxu0 0.0
    %2928 = vmatmul.mubr.f32.gmra.mxu0 %v2850
    %v2929 = vpop.f32.mrf.mxu0
    %v2930 = vadd.f32 0.0, %v2929
    %v2931 = vpop.f32.mrf.mxu0
    %2932 = vdwg.mxu0
    %v2934 = vsel %vm267, %v2662, 0
    %v2937 = vsel %vm267, %v2663, 0
    %v2940 = vsel %vm267, %v1162, 0
    %v2943 = vsel %vm267, %v1167, 0
    %2945 = vmatprep.subr.mxu0 0.0
    %2946 = vmatpush1.xpose.msra.mxu0 0.0
    %2947 = vmatprep.subr.mxu0 0.0
    %2948 = vmatpush1.xpose.msra.mxu0 0.0
    %2949 = vmatprep.subr.mxu0 0.0
    %2950 = vmatpush1.xpose.msra.mxu0 0.0
    %2951 = vmatprep.subr.mxu0 0.0
    %2952 = vmatpush1.xpose.msra.mxu0 0.0
    %2953 = vmatprep.subr.mxu0 0.0
    %2954 = vmatpush1.xpose.msra.mxu0 0.0
    %2955 = vmatprep.subr.mxu0 0.0
    %2956 = vmatpush1.xpose.msra.mxu0 0.0
    %2957 = vmatprep.subr.mxu0 0.0
    %2958 = vmatpush1.xpose.msra.mxu0 0.0
    %2959 = vmatprep.subr.mxu0 0.0
    %2960 = vmatpush1.xpose.msra.mxu0 0.0
    %2961 = vmatprep.subr.mxu0 0.0
    %2962 = vmatpush1.xpose.msra.mxu0 0.0
    %2963 = vmatprep.subr.mxu0 0.0
    %2964 = vmatpush1.xpose.msra.mxu0 0.0
    %2965 = vmatprep.subr.mxu0 0.0
    %2966 = vmatpush1.xpose.msra.mxu0 0.0
    %2967 = vmatprep.subr.mxu0 0.0
    %2968 = vmatpush1.xpose.msra.mxu0 0.0
    %2969 = vmatprep.subr.mxu0 0.0
    %2970 = vmatpush1.xpose.msra.mxu0 0.0
    %2971 = vmatprep.subr.mxu0 0.0
    %2972 = vmatpush1.xpose.msra.mxu0 0.0
    %2973 = vmatprep.subr.mxu0 0.0
    %2974 = vmatpush1.xpose.msra.mxu0 %v2943
    %2975 = vmatprep.subr.mxu0 0.0
    %2976 = vmatpush1.xpose.msra.mxu0 %v2940
    %2977 = vmatprep.subr.mxu0 0.0
    %2978 = vmatpush2.xpose.msra.mxu0 0.0
    %2979 = vmatprep.subr.mxu0 0.0
    %2980 = vmatpush2.xpose.msra.mxu0 0.0
    %2981 = vmatprep.subr.mxu0 0.0
    %2982 = vmatpush2.xpose.msra.mxu0 0.0
    %2983 = vmatprep.subr.mxu0 0.0
    %2984 = vmatpush2.xpose.msra.mxu0 0.0
    %2985 = vmatprep.subr.mxu0 0.0
    %2986 = vmatpush2.xpose.msra.mxu0 0.0
    %2987 = vmatprep.subr.mxu0 0.0
    %2988 = vmatpush2.xpose.msra.mxu0 0.0
    %2989 = vmatprep.subr.mxu0 0.0
    %2990 = vmatpush2.xpose.msra.mxu0 0.0
    %2991 = vmatprep.subr.mxu0 0.0
    %2992 = vmatpush2.xpose.msra.mxu0 0.0
    %2993 = vmatprep.subr.mxu0 0.0
    %2994 = vmatpush2.xpose.msra.mxu0 0.0
    %2995 = vmatprep.subr.mxu0 0.0
    %2996 = vmatpush2.xpose.msra.mxu0 0.0
    %2997 = vmatprep.subr.mxu0 0.0
    %2998 = vmatpush2.xpose.msra.mxu0 0.0
    %2999 = vmatprep.subr.mxu0 0.0
    %3000 = vmatpush2.xpose.msra.mxu0 0.0
    %3001 = vmatprep.subr.mxu0 0.0
    %3002 = vmatpush2.xpose.msra.mxu0 0.0
    %3003 = vmatprep.subr.mxu0 0.0
    %3004 = vmatpush2.xpose.msra.mxu0 0.0
    %3005 = vmatprep.subr.mxu0 0.0
    %3006 = vmatpush2.xpose.msra.mxu0 0.0
    %3007 = vmatprep.subr.mxu0 0.0
    %3008 = vmatpush2.xpose.msra.mxu0 0.0
    %3009 = vmatprep.mubr.f32.mxu0 0.0
    %3010 = vmatmul.mubr.f32.gmra.mxu0 %v2934
    %v3011 = vpop.f32.mrf.mxu0
    %v3012 = vadd.f32 0.0, %v3011
    %v3013 = vpop.f32.mrf.mxu0
    %3014 = vmatprep.mubr.f32.mxu0 0.0
    %3015 = vmatmul.mubr.f32.gmra.mxu0 %v2937
    %v3016 = vpop.f32.mrf.mxu0
    %v3017 = vadd.f32 0.0, %v3016
    %v3018 = vpop.f32.mrf.mxu0
    %3019 = vdwg.mxu0
    %v3021 = vsel %vm267, %v2664, 0
    %v3024 = vsel %vm267, %v2665, 0
    %v3027 = vsel %vm267, %v1172, 0
    %v3030 = vsel %vm267, %v1177, 0
    %3032 = vmatprep.subr.mxu0 0.0
    %3033 = vmatpush1.xpose.msra.mxu0 0.0
    %3034 = vmatprep.subr.mxu0 0.0
    %3035 = vmatpush1.xpose.msra.mxu0 0.0
    %3036 = vmatprep.subr.mxu0 0.0
    %3037 = vmatpush1.xpose.msra.mxu0 0.0
    %3038 = vmatprep.subr.mxu0 0.0
    %3039 = vmatpush1.xpose.msra.mxu0 0.0
    %3040 = vmatprep.subr.mxu0 0.0
    %3041 = vmatpush1.xpose.msra.mxu0 0.0
    %3042 = vmatprep.subr.mxu0 0.0
    %3043 = vmatpush1.xpose.msra.mxu0 0.0
    %3044 = vmatprep.subr.mxu0 0.0
    %3045 = vmatpush1.xpose.msra.mxu0 0.0
    %3046 = vmatprep.subr.mxu0 0.0
    %3047 = vmatpush1.xpose.msra.mxu0 0.0
    %3048 = vmatprep.subr.mxu0 0.0
    %3049 = vmatpush1.xpose.msra.mxu0 0.0
    %3050 = vmatprep.subr.mxu0 0.0
    %3051 = vmatpush1.xpose.msra.mxu0 0.0
    %3052 = vmatprep.subr.mxu0 0.0
    %3053 = vmatpush1.xpose.msra.mxu0 0.0
    %3054 = vmatprep.subr.mxu0 0.0
    %3055 = vmatpush1.xpose.msra.mxu0 0.0
    %3056 = vmatprep.subr.mxu0 0.0
    %3057 = vmatpush1.xpose.msra.mxu0 0.0
    %3058 = vmatprep.subr.mxu0 0.0
    %3059 = vmatpush1.xpose.msra.mxu0 0.0
    %3060 = vmatprep.subr.mxu0 0.0
    %3061 = vmatpush1.xpose.msra.mxu0 %v3030
    %3062 = vmatprep.subr.mxu0 0.0
    %3063 = vmatpush1.xpose.msra.mxu0 %v3027
    %3064 = vmatprep.subr.mxu0 0.0
    %3065 = vmatpush2.xpose.msra.mxu0 0.0
    %3066 = vmatprep.subr.mxu0 0.0
    %3067 = vmatpush2.xpose.msra.mxu0 0.0
    %3068 = vmatprep.subr.mxu0 0.0
    %3069 = vmatpush2.xpose.msra.mxu0 0.0
    %3070 = vmatprep.subr.mxu0 0.0
    %3071 = vmatpush2.xpose.msra.mxu0 0.0
    %3072 = vmatprep.subr.mxu0 0.0
    %3073 = vmatpush2.xpose.msra.mxu0 0.0
    %3074 = vmatprep.subr.mxu0 0.0
    %3075 = vmatpush2.xpose.msra.mxu0 0.0
    %3076 = vmatprep.subr.mxu0 0.0
    %3077 = vmatpush2.xpose.msra.mxu0 0.0
    %3078 = vmatprep.subr.mxu0 0.0
    %3079 = vmatpush2.xpose.msra.mxu0 0.0
    %3080 = vmatprep.subr.mxu0 0.0
    %3081 = vmatpush2.xpose.msra.mxu0 0.0
    %3082 = vmatprep.subr.mxu0 0.0
    %3083 = vmatpush2.xpose.msra.mxu0 0.0
    %3084 = vmatprep.subr.mxu0 0.0
    %3085 = vmatpush2.xpose.msra.mxu0 0.0
    %3086 = vmatprep.subr.mxu0 0.0
    %3087 = vmatpush2.xpose.msra.mxu0 0.0
    %3088 = vmatprep.subr.mxu0 0.0
    %3089 = vmatpush2.xpose.msra.mxu0 0.0
    %3090 = vmatprep.subr.mxu0 0.0
    %3091 = vmatpush2.xpose.msra.mxu0 0.0
    %3092 = vmatprep.subr.mxu0 0.0
    %3093 = vmatpush2.xpose.msra.mxu0 0.0
    %3094 = vmatprep.subr.mxu0 0.0
    %3095 = vmatpush2.xpose.msra.mxu0 0.0
    %3096 = vmatprep.mubr.f32.mxu0 0.0
    %3097 = vmatmul.mubr.f32.gmra.mxu0 %v3021
    %v3098 = vpop.f32.mrf.mxu0
    %v3099 = vadd.f32 0.0, %v3098
    %v3100 = vpop.f32.mrf.mxu0
    %3101 = vmatprep.mubr.f32.mxu0 0.0
    %3102 = vmatmul.mubr.f32.gmra.mxu0 %v3024
    %v3103 = vpop.f32.mrf.mxu0
    %v3104 = vadd.f32 0.0, %v3103
    %v3105 = vpop.f32.mrf.mxu0
    %3106 = vdwg.mxu0
    %v3108 = vsel %vm267, %v2666, 0
    %v3111 = vsel %vm267, %v2667, 0
    %v3114 = vsel %vm267, %v1182, 0
    %v3117 = vsel %vm267, %v1187, 0
    %3119 = vmatprep.subr.mxu0 0.0
    %3120 = vmatpush1.xpose.msra.mxu0 0.0
    %3121 = vmatprep.subr.mxu0 0.0
    %3122 = vmatpush1.xpose.msra.mxu0 0.0
    %3123 = vmatprep.subr.mxu0 0.0
    %3124 = vmatpush1.xpose.msra.mxu0 0.0
    %3125 = vmatprep.subr.mxu0 0.0
    %3126 = vmatpush1.xpose.msra.mxu0 0.0
    %3127 = vmatprep.subr.mxu0 0.0
    %3128 = vmatpush1.xpose.msra.mxu0 0.0
    %3129 = vmatprep.subr.mxu0 0.0
    %3130 = vmatpush1.xpose.msra.mxu0 0.0
    %3131 = vmatprep.subr.mxu0 0.0
    %3132 = vmatpush1.xpose.msra.mxu0 0.0
    %3133 = vmatprep.subr.mxu0 0.0
    %3134 = vmatpush1.xpose.msra.mxu0 0.0
    %3135 = vmatprep.subr.mxu0 0.0
    %3136 = vmatpush1.xpose.msra.mxu0 0.0
    %3137 = vmatprep.subr.mxu0 0.0
    %3138 = vmatpush1.xpose.msra.mxu0 0.0
    %3139 = vmatprep.subr.mxu0 0.0
    %3140 = vmatpush1.xpose.msra.mxu0 0.0
    %3141 = vmatprep.subr.mxu0 0.0
    %3142 = vmatpush1.xpose.msra.mxu0 0.0
    %3143 = vmatprep.subr.mxu0 0.0
    %3144 = vmatpush1.xpose.msra.mxu0 0.0
    %3145 = vmatprep.subr.mxu0 0.0
    %3146 = vmatpush1.xpose.msra.mxu0 0.0
    %3147 = vmatprep.subr.mxu0 0.0
    %3148 = vmatpush1.xpose.msra.mxu0 %v3117
    %3149 = vmatprep.subr.mxu0 0.0
    %3150 = vmatpush1.xpose.msra.mxu0 %v3114
    %3151 = vmatprep.subr.mxu0 0.0
    %3152 = vmatpush2.xpose.msra.mxu0 0.0
    %3153 = vmatprep.subr.mxu0 0.0
    %3154 = vmatpush2.xpose.msra.mxu0 0.0
    %3155 = vmatprep.subr.mxu0 0.0
    %3156 = vmatpush2.xpose.msra.mxu0 0.0
    %3157 = vmatprep.subr.mxu0 0.0
    %3158 = vmatpush2.xpose.msra.mxu0 0.0
    %3159 = vmatprep.subr.mxu0 0.0
    %3160 = vmatpush2.xpose.msra.mxu0 0.0
    %3161 = vmatprep.subr.mxu0 0.0
    %3162 = vmatpush2.xpose.msra.mxu0 0.0
    %3163 = vmatprep.subr.mxu0 0.0
    %3164 = vmatpush2.xpose.msra.mxu0 0.0
    %3165 = vmatprep.subr.mxu0 0.0
    %3166 = vmatpush2.xpose.msra.mxu0 0.0
    %3167 = vmatprep.subr.mxu0 0.0
    %3168 = vmatpush2.xpose.msra.mxu0 0.0
    %3169 = vmatprep.subr.mxu0 0.0
    %3170 = vmatpush2.xpose.msra.mxu0 0.0
    %3171 = vmatprep.subr.mxu0 0.0
    %3172 = vmatpush2.xpose.msra.mxu0 0.0
    %3173 = vmatprep.subr.mxu0 0.0
    %3174 = vmatpush2.xpose.msra.mxu0 0.0
    %3175 = vmatprep.subr.mxu0 0.0
    %3176 = vmatpush2.xpose.msra.mxu0 0.0
    %3177 = vmatprep.subr.mxu0 0.0
    %3178 = vmatpush2.xpose.msra.mxu0 0.0
    %3179 = vmatprep.subr.mxu0 0.0
    %3180 = vmatpush2.xpose.msra.mxu0 0.0
    %3181 = vmatprep.subr.mxu0 0.0
    %3182 = vmatpush2.xpose.msra.mxu0 0.0
    %3183 = vmatprep.mubr.f32.mxu0 0.0
    %3184 = vmatmul.mubr.f32.gmra.mxu0 %v3108
    %v3185 = vpop.f32.mrf.mxu0
    %v3186 = vadd.f32 0.0, %v3185
    %v3187 = vpop.f32.mrf.mxu0
    %3188 = vmatprep.mubr.f32.mxu0 0.0
    %3189 = vmatmul.mubr.f32.gmra.mxu0 %v3111
    %v3190 = vpop.f32.mrf.mxu0
    %v3191 = vadd.f32 0.0, %v3190
    %v3192 = vpop.f32.mrf.mxu0
    %3193 = vdwg.mxu0
    %v3195 = vsel %vm267, %v2668, 0
    %v3198 = vsel %vm267, %v2669, 0
    %v3201 = vsel %vm267, %v1192, 0
    %v3204 = vsel %vm267, %v1197, 0
    %3206 = vmatprep.subr.mxu0 0.0
    %3207 = vmatpush1.xpose.msra.mxu0 0.0
    %3208 = vmatprep.subr.mxu0 0.0
    %3209 = vmatpush1.xpose.msra.mxu0 0.0
    %3210 = vmatprep.subr.mxu0 0.0
    %3211 = vmatpush1.xpose.msra.mxu0 0.0
    %3212 = vmatprep.subr.mxu0 0.0
    %3213 = vmatpush1.xpose.msra.mxu0 0.0
    %3214 = vmatprep.subr.mxu0 0.0
    %3215 = vmatpush1.xpose.msra.mxu0 0.0
    %3216 = vmatprep.subr.mxu0 0.0
    %3217 = vmatpush1.xpose.msra.mxu0 0.0
    %3218 = vmatprep.subr.mxu0 0.0
    %3219 = vmatpush1.xpose.msra.mxu0 0.0
    %3220 = vmatprep.subr.mxu0 0.0
    %3221 = vmatpush1.xpose.msra.mxu0 0.0
    %3222 = vmatprep.subr.mxu0 0.0
    %3223 = vmatpush1.xpose.msra.mxu0 0.0
    %3224 = vmatprep.subr.mxu0 0.0
    %3225 = vmatpush1.xpose.msra.mxu0 0.0
    %3226 = vmatprep.subr.mxu0 0.0
    %3227 = vmatpush1.xpose.msra.mxu0 0.0
    %3228 = vmatprep.subr.mxu0 0.0
    %3229 = vmatpush1.xpose.msra.mxu0 0.0
    %3230 = vmatprep.subr.mxu0 0.0
    %3231 = vmatpush1.xpose.msra.mxu0 0.0
    %3232 = vmatprep.subr.mxu0 0.0
    %3233 = vmatpush1.xpose.msra.mxu0 0.0
    %3234 = vmatprep.subr.mxu0 0.0
    %3235 = vmatpush1.xpose.msra.mxu0 %v3204
    %3236 = vmatprep.subr.mxu0 0.0
    %3237 = vmatpush1.xpose.msra.mxu0 %v3201
    %3238 = vmatprep.subr.mxu0 0.0
    %3239 = vmatpush2.xpose.msra.mxu0 0.0
    %3240 = vmatprep.subr.mxu0 0.0
    %3241 = vmatpush2.xpose.msra.mxu0 0.0
    %3242 = vmatprep.subr.mxu0 0.0
    %3243 = vmatpush2.xpose.msra.mxu0 0.0
    %3244 = vmatprep.subr.mxu0 0.0
    %3245 = vmatpush2.xpose.msra.mxu0 0.0
    %3246 = vmatprep.subr.mxu0 0.0
    %3247 = vmatpush2.xpose.msra.mxu0 0.0
    %3248 = vmatprep.subr.mxu0 0.0
    %3249 = vmatpush2.xpose.msra.mxu0 0.0
    %3250 = vmatprep.subr.mxu0 0.0
    %3251 = vmatpush2.xpose.msra.mxu0 0.0
    %3252 = vmatprep.subr.mxu0 0.0
    %3253 = vmatpush2.xpose.msra.mxu0 0.0
    %3254 = vmatprep.subr.mxu0 0.0
    %3255 = vmatpush2.xpose.msra.mxu0 0.0
    %3256 = vmatprep.subr.mxu0 0.0
    %3257 = vmatpush2.xpose.msra.mxu0 0.0
    %3258 = vmatprep.subr.mxu0 0.0
    %3259 = vmatpush2.xpose.msra.mxu0 0.0
    %3260 = vmatprep.subr.mxu0 0.0
    %3261 = vmatpush2.xpose.msra.mxu0 0.0
    %3262 = vmatprep.subr.mxu0 0.0
    %3263 = vmatpush2.xpose.msra.mxu0 0.0
    %3264 = vmatprep.subr.mxu0 0.0
    %3265 = vmatpush2.xpose.msra.mxu0 0.0
    %3266 = vmatprep.subr.mxu0 0.0
    %3267 = vmatpush2.xpose.msra.mxu0 0.0
    %3268 = vmatprep.subr.mxu0 0.0
    %3269 = vmatpush2.xpose.msra.mxu0 0.0
    %3270 = vmatprep.mubr.f32.mxu0 0.0
    %3271 = vmatmul.mubr.f32.gmra.mxu0 %v3195
    %v3272 = vpop.f32.mrf.mxu0
    %v3273 = vadd.f32 0.0, %v3272
    %v3274 = vpop.f32.mrf.mxu0
    %3275 = vmatprep.mubr.f32.mxu0 0.0
    %3276 = vmatmul.mubr.f32.gmra.mxu0 %v3198
    %v3277 = vpop.f32.mrf.mxu0
    %v3278 = vadd.f32 0.0, %v3277
    %v3279 = vpop.f32.mrf.mxu0
    %3280 = vdwg.mxu0
    %v3282 = vsel %vm267, %v2670, 0
    %v3285 = vsel %vm267, %v2671, 0
    %v3288 = vsel %vm267, %v1202, 0
    %v3291 = vsel %vm267, %v1207, 0
    %3293 = vmatprep.subr.mxu0 0.0
    %3294 = vmatpush1.xpose.msra.mxu0 0.0
    %3295 = vmatprep.subr.mxu0 0.0
    %3296 = vmatpush1.xpose.msra.mxu0 0.0
    %3297 = vmatprep.subr.mxu0 0.0
    %3298 = vmatpush1.xpose.msra.mxu0 0.0
    %3299 = vmatprep.subr.mxu0 0.0
    %3300 = vmatpush1.xpose.msra.mxu0 0.0
    %3301 = vmatprep.subr.mxu0 0.0
    %3302 = vmatpush1.xpose.msra.mxu0 0.0
    %3303 = vmatprep.subr.mxu0 0.0
    %3304 = vmatpush1.xpose.msra.mxu0 0.0
    %3305 = vmatprep.subr.mxu0 0.0
    %3306 = vmatpush1.xpose.msra.mxu0 0.0
    %3307 = vmatprep.subr.mxu0 0.0
    %3308 = vmatpush1.xpose.msra.mxu0 0.0
    %3309 = vmatprep.subr.mxu0 0.0
    %3310 = vmatpush1.xpose.msra.mxu0 0.0
    %3311 = vmatprep.subr.mxu0 0.0
    %3312 = vmatpush1.xpose.msra.mxu0 0.0
    %3313 = vmatprep.subr.mxu0 0.0
    %3314 = vmatpush1.xpose.msra.mxu0 0.0
    %3315 = vmatprep.subr.mxu0 0.0
    %3316 = vmatpush1.xpose.msra.mxu0 0.0
    %3317 = vmatprep.subr.mxu0 0.0
    %3318 = vmatpush1.xpose.msra.mxu0 0.0
    %3319 = vmatprep.subr.mxu0 0.0
    %3320 = vmatpush1.xpose.msra.mxu0 0.0
    %3321 = vmatprep.subr.mxu0 0.0
    %3322 = vmatpush1.xpose.msra.mxu0 %v3291
    %3323 = vmatprep.subr.mxu0 0.0
    %3324 = vmatpush1.xpose.msra.mxu0 %v3288
    %3325 = vmatprep.subr.mxu0 0.0
    %3326 = vmatpush2.xpose.msra.mxu0 0.0
    %3327 = vmatprep.subr.mxu0 0.0
    %3328 = vmatpush2.xpose.msra.mxu0 0.0
    %3329 = vmatprep.subr.mxu0 0.0
    %3330 = vmatpush2.xpose.msra.mxu0 0.0
    %3331 = vmatprep.subr.mxu0 0.0
    %3332 = vmatpush2.xpose.msra.mxu0 0.0
    %3333 = vmatprep.subr.mxu0 0.0
    %3334 = vmatpush2.xpose.msra.mxu0 0.0
    %3335 = vmatprep.subr.mxu0 0.0
    %3336 = vmatpush2.xpose.msra.mxu0 0.0
    %3337 = vmatprep.subr.mxu0 0.0
    %3338 = vmatpush2.xpose.msra.mxu0 0.0
    %3339 = vmatprep.subr.mxu0 0.0
    %3340 = vmatpush2.xpose.msra.mxu0 0.0
    %3341 = vmatprep.subr.mxu0 0.0
    %3342 = vmatpush2.xpose.msra.mxu0 0.0
    %3343 = vmatprep.subr.mxu0 0.0
    %3344 = vmatpush2.xpose.msra.mxu0 0.0
    %3345 = vmatprep.subr.mxu0 0.0
    %3346 = vmatpush2.xpose.msra.mxu0 0.0
    %3347 = vmatprep.subr.mxu0 0.0
    %3348 = vmatpush2.xpose.msra.mxu0 0.0
    %3349 = vmatprep.subr.mxu0 0.0
    %3350 = vmatpush2.xpose.msra.mxu0 0.0
    %3351 = vmatprep.subr.mxu0 0.0
    %3352 = vmatpush2.xpose.msra.mxu0 0.0
    %3353 = vmatprep.subr.mxu0 0.0
    %3354 = vmatpush2.xpose.msra.mxu0 0.0
    %3355 = vmatprep.subr.mxu0 0.0
    %3356 = vmatpush2.xpose.msra.mxu0 0.0
    %3357 = vmatprep.mubr.f32.mxu0 0.0
    %3358 = vmatmul.mubr.f32.gmra.mxu0 %v3282
    %v3359 = vpop.f32.mrf.mxu0
    %v3360 = vadd.f32 0.0, %v3359
    %v3361 = vpop.f32.mrf.mxu0
    %3362 = vmatprep.mubr.f32.mxu0 0.0
    %3363 = vmatmul.mubr.f32.gmra.mxu0 %v3285
    %v3364 = vpop.f32.mrf.mxu0
    %v3365 = vadd.f32 0.0, %v3364
    %v3366 = vpop.f32.mrf.mxu0
    %3367 = vdwg.mxu0
    %v3368 = vld [vmem:[%s13] sm:$0xff]
    %v3369 = vld [vmem:[%s13 + $0x8] sm:$0xff]
    %v3370 = vld [vmem:[%s13 + $0x10] sm:$0xff]
    %v3371 = vld [vmem:[%s13 + $0x18] sm:$0xff]
    %v3372 = vld [vmem:[%s13 + $0x20] sm:$0xff]
    %v3373 = vld [vmem:[%s13 + $0x28] sm:$0xff]
    %v3374 = vld [vmem:[%s13 + $0x30] sm:$0xff]
    %v3375 = vld [vmem:[%s13 + $0x38] sm:$0xff]
    %v3376 = vld [vmem:[%s13 + $0x40] sm:$0xff]
    %v3377 = vld [vmem:[%s13 + $0x48] sm:$0xff]
    %v3378 = vld [vmem:[%s13 + $0x50] sm:$0xff]
    %v3379 = vld [vmem:[%s13 + $0x58] sm:$0xff]
    %v3380 = vld [vmem:[%s13 + $0x60] sm:$0xff]
    %v3381 = vld [vmem:[%s13 + $0x68] sm:$0xff]
    %v3382 = vld [vmem:[%s13 + $0x70] sm:$0xff]
    %v3383 = vld [vmem:[%s13 + $0x78] sm:$0xff]
    %v3385 = vsel %vm267, %v2751, 0
    %v3388 = vsel %vm267, %v2756, 0
    %3390 = vmatprep.subr.mxu0 0.0
    %3391 = vmatpush1.msra.mxu0 0.0
    %3392 = vmatprep.subr.mxu0 0.0
    %3393 = vmatpush1.msra.mxu0 0.0
    %3394 = vmatprep.subr.mxu0 0.0
    %3395 = vmatpush1.msra.mxu0 0.0
    %3396 = vmatprep.subr.mxu0 0.0
    %3397 = vmatpush1.msra.mxu0 0.0
    %3398 = vmatprep.subr.mxu0 0.0
    %3399 = vmatpush1.msra.mxu0 0.0
    %3400 = vmatprep.subr.mxu0 0.0
    %3401 = vmatpush1.msra.mxu0 0.0
    %3402 = vmatprep.subr.mxu0 0.0
    %3403 = vmatpush1.msra.mxu0 0.0
    %3404 = vmatprep.subr.mxu0 0.0
    %3405 = vmatpush1.msra.mxu0 0.0
    %3406 = vmatprep.subr.mxu0 0.0
    %3407 = vmatpush1.msra.mxu0 0.0
    %3408 = vmatprep.subr.mxu0 0.0
    %3409 = vmatpush1.msra.mxu0 0.0
    %3410 = vmatprep.subr.mxu0 0.0
    %3411 = vmatpush1.msra.mxu0 0.0
    %3412 = vmatprep.subr.mxu0 0.0
    %3413 = vmatpush1.msra.mxu0 0.0
    %3414 = vmatprep.subr.mxu0 0.0
    %3415 = vmatpush1.msra.mxu0 0.0
    %3416 = vmatprep.subr.mxu0 0.0
    %3417 = vmatpush1.msra.mxu0 0.0
    %3418 = vmatprep.subr.mxu0 0.0
    %3419 = vmatpush1.msra.mxu0 %v3369
    %3420 = vmatprep.subr.mxu0 0.0
    %3421 = vmatpush1.msra.mxu0 %v3368
    %3422 = vmatprep.subr.mxu0 0.0
    %3423 = vmatpush2.msra.mxu0 0.0
    %3424 = vmatprep.subr.mxu0 0.0
    %3425 = vmatpush2.msra.mxu0 0.0
    %3426 = vmatprep.subr.mxu0 0.0
    %3427 = vmatpush2.msra.mxu0 0.0
    %3428 = vmatprep.subr.mxu0 0.0
    %3429 = vmatpush2.msra.mxu0 0.0
    %3430 = vmatprep.subr.mxu0 0.0
    %3431 = vmatpush2.msra.mxu0 0.0
    %3432 = vmatprep.subr.mxu0 0.0
    %3433 = vmatpush2.msra.mxu0 0.0
    %3434 = vmatprep.subr.mxu0 0.0
    %3435 = vmatpush2.msra.mxu0 0.0
    %3436 = vmatprep.subr.mxu0 0.0
    %3437 = vmatpush2.msra.mxu0 0.0
    %3438 = vmatprep.subr.mxu0 0.0
    %3439 = vmatpush2.msra.mxu0 0.0
    %3440 = vmatprep.subr.mxu0 0.0
    %3441 = vmatpush2.msra.mxu0 0.0
    %3442 = vmatprep.subr.mxu0 0.0
    %3443 = vmatpush2.msra.mxu0 0.0
    %3444 = vmatprep.subr.mxu0 0.0
    %3445 = vmatpush2.msra.mxu0 0.0
    %3446 = vmatprep.subr.mxu0 0.0
    %3447 = vmatpush2.msra.mxu0 0.0
    %3448 = vmatprep.subr.mxu0 0.0
    %3449 = vmatpush2.msra.mxu0 0.0
    %3450 = vmatprep.subr.mxu0 0.0
    %3451 = vmatpush2.msra.mxu0 0.0
    %3452 = vmatprep.subr.mxu0 0.0
    %3453 = vmatpush2.msra.mxu0 0.0
    %3454 = vmatprep.mubr.f32.mxu0 0.0
    %3455 = vmatmul.mubr.f32.gmra.mxu0 %v3385
    %v3456 = vpop.f32.mrf.mxu0
    %v3457 = vadd.f32 0.0, %v3456
    %v3458 = vpop.f32.mrf.mxu0
    %3459 = vmatprep.mubr.f32.mxu0 0.0
    %3460 = vmatmul.mubr.f32.gmra.mxu0 %v3388
    %v3461 = vpop.f32.mrf.mxu0
    %v3462 = vadd.f32 0.0, %v3461
    %v3463 = vpop.f32.mrf.mxu0
    %3464 = vdwg.mxu0
    %v3466 = vsel %vm267, %v2838, 0
    %v3469 = vsel %vm267, %v2843, 0
    %3471 = vmatprep.subr.mxu0 0.0
    %3472 = vmatpush1.msra.mxu0 0.0
    %3473 = vmatprep.subr.mxu0 0.0
    %3474 = vmatpush1.msra.mxu0 0.0
    %3475 = vmatprep.subr.mxu0 0.0
    %3476 = vmatpush1.msra.mxu0 0.0
    %3477 = vmatprep.subr.mxu0 0.0
    %3478 = vmatpush1.msra.mxu0 0.0
    %3479 = vmatprep.subr.mxu0 0.0
    %3480 = vmatpush1.msra.mxu0 0.0
    %3481 = vmatprep.subr.mxu0 0.0
    %3482 = vmatpush1.msra.mxu0 0.0
    %3483 = vmatprep.subr.mxu0 0.0
    %3484 = vmatpush1.msra.mxu0 0.0
    %3485 = vmatprep.subr.mxu0 0.0
    %3486 = vmatpush1.msra.mxu0 0.0
    %3487 = vmatprep.subr.mxu0 0.0
    %3488 = vmatpush1.msra.mxu0 0.0
    %3489 = vmatprep.subr.mxu0 0.0
    %3490 = vmatpush1.msra.mxu0 0.0
    %3491 = vmatprep.subr.mxu0 0.0
    %3492 = vmatpush1.msra.mxu0 0.0
    %3493 = vmatprep.subr.mxu0 0.0
    %3494 = vmatpush1.msra.mxu0 0.0
    %3495 = vmatprep.subr.mxu0 0.0
    %3496 = vmatpush1.msra.mxu0 0.0
    %3497 = vmatprep.subr.mxu0 0.0
    %3498 = vmatpush1.msra.mxu0 0.0
    %3499 = vmatprep.subr.mxu0 0.0
    %3500 = vmatpush1.msra.mxu0 %v3371
    %3501 = vmatprep.subr.mxu0 0.0
    %3502 = vmatpush1.msra.mxu0 %v3370
    %3503 = vmatprep.subr.mxu0 0.0
    %3504 = vmatpush2.msra.mxu0 0.0
    %3505 = vmatprep.subr.mxu0 0.0
    %3506 = vmatpush2.msra.mxu0 0.0
    %3507 = vmatprep.subr.mxu0 0.0
    %3508 = vmatpush2.msra.mxu0 0.0
    %3509 = vmatprep.subr.mxu0 0.0
    %3510 = vmatpush2.msra.mxu0 0.0
    %3511 = vmatprep.subr.mxu0 0.0
    %3512 = vmatpush2.msra.mxu0 0.0
    %3513 = vmatprep.subr.mxu0 0.0
    %3514 = vmatpush2.msra.mxu0 0.0
    %3515 = vmatprep.subr.mxu0 0.0
    %3516 = vmatpush2.msra.mxu0 0.0
    %3517 = vmatprep.subr.mxu0 0.0
    %3518 = vmatpush2.msra.mxu0 0.0
    %3519 = vmatprep.subr.mxu0 0.0
    %3520 = vmatpush2.msra.mxu0 0.0
    %3521 = vmatprep.subr.mxu0 0.0
    %3522 = vmatpush2.msra.mxu0 0.0
    %3523 = vmatprep.subr.mxu0 0.0
    %3524 = vmatpush2.msra.mxu0 0.0
    %3525 = vmatprep.subr.mxu0 0.0
    %3526 = vmatpush2.msra.mxu0 0.0
    %3527 = vmatprep.subr.mxu0 0.0
    %3528 = vmatpush2.msra.mxu0 0.0
    %3529 = vmatprep.subr.mxu0 0.0
    %3530 = vmatpush2.msra.mxu0 0.0
    %3531 = vmatprep.subr.mxu0 0.0
    %3532 = vmatpush2.msra.mxu0 0.0
    %3533 = vmatprep.subr.mxu0 0.0
    %3534 = vmatpush2.msra.mxu0 0.0
    %3535 = vmatprep.mubr.f32.mxu0 0.0
    %3536 = vmatmul.mubr.f32.gmra.mxu0 %v3466
    %v3537 = vpop.f32.mrf.mxu0
    %v3538 = vadd.f32 0.0, %v3537
    %v3539 = vpop.f32.mrf.mxu0
    %3540 = vmatprep.mubr.f32.mxu0 0.0
    %3541 = vmatmul.mubr.f32.gmra.mxu0 %v3469
    %v3542 = vpop.f32.mrf.mxu0
    %v3543 = vadd.f32 0.0, %v3542
    %v3544 = vpop.f32.mrf.mxu0
    %3545 = vdwg.mxu0
    %v3547 = vsel %vm267, %v2925, 0
    %v3550 = vsel %vm267, %v2930, 0
    %3552 = vmatprep.subr.mxu0 0.0
    %3553 = vmatpush1.msra.mxu0 0.0
    %3554 = vmatprep.subr.mxu0 0.0
    %3555 = vmatpush1.msra.mxu0 0.0
    %3556 = vmatprep.subr.mxu0 0.0
    %3557 = vmatpush1.msra.mxu0 0.0
    %3558 = vmatprep.subr.mxu0 0.0
    %3559 = vmatpush1.msra.mxu0 0.0
    %3560 = vmatprep.subr.mxu0 0.0
    %3561 = vmatpush1.msra.mxu0 0.0
    %3562 = vmatprep.subr.mxu0 0.0
    %3563 = vmatpush1.msra.mxu0 0.0
    %3564 = vmatprep.subr.mxu0 0.0
    %3565 = vmatpush1.msra.mxu0 0.0
    %3566 = vmatprep.subr.mxu0 0.0
    %3567 = vmatpush1.msra.mxu0 0.0
    %3568 = vmatprep.subr.mxu0 0.0
    %3569 = vmatpush1.msra.mxu0 0.0
    %3570 = vmatprep.subr.mxu0 0.0
    %3571 = vmatpush1.msra.mxu0 0.0
    %3572 = vmatprep.subr.mxu0 0.0
    %3573 = vmatpush1.msra.mxu0 0.0
    %3574 = vmatprep.subr.mxu0 0.0
    %3575 = vmatpush1.msra.mxu0 0.0
    %3576 = vmatprep.subr.mxu0 0.0
    %3577 = vmatpush1.msra.mxu0 0.0
    %3578 = vmatprep.subr.mxu0 0.0
    %3579 = vmatpush1.msra.mxu0 0.0
    %3580 = vmatprep.subr.mxu0 0.0
    %3581 = vmatpush1.msra.mxu0 %v3373
    %3582 = vmatprep.subr.mxu0 0.0
    %3583 = vmatpush1.msra.mxu0 %v3372
    %3584 = vmatprep.subr.mxu0 0.0
    %3585 = vmatpush2.msra.mxu0 0.0
    %3586 = vmatprep.subr.mxu0 0.0
    %3587 = vmatpush2.msra.mxu0 0.0
    %3588 = vmatprep.subr.mxu0 0.0
    %3589 = vmatpush2.msra.mxu0 0.0
    %3590 = vmatprep.subr.mxu0 0.0
    %3591 = vmatpush2.msra.mxu0 0.0
    %3592 = vmatprep.subr.mxu0 0.0
    %3593 = vmatpush2.msra.mxu0 0.0
    %3594 = vmatprep.subr.mxu0 0.0
    %3595 = vmatpush2.msra.mxu0 0.0
    %3596 = vmatprep.subr.mxu0 0.0
    %3597 = vmatpush2.msra.mxu0 0.0
    %3598 = vmatprep.subr.mxu0 0.0
    %3599 = vmatpush2.msra.mxu0 0.0
    %3600 = vmatprep.subr.mxu0 0.0
    %3601 = vmatpush2.msra.mxu0 0.0
    %3602 = vmatprep.subr.mxu0 0.0
    %3603 = vmatpush2.msra.mxu0 0.0
    %3604 = vmatprep.subr.mxu0 0.0
    %3605 = vmatpush2.msra.mxu0 0.0
    %3606 = vmatprep.subr.mxu0 0.0
    %3607 = vmatpush2.msra.mxu0 0.0
    %3608 = vmatprep.subr.mxu0 0.0
    %3609 = vmatpush2.msra.mxu0 0.0
    %3610 = vmatprep.subr.mxu0 0.0
    %3611 = vmatpush2.msra.mxu0 0.0
    %3612 = vmatprep.subr.mxu0 0.0
    %3613 = vmatpush2.msra.mxu0 0.0
    %3614 = vmatprep.subr.mxu0 0.0
    %3615 = vmatpush2.msra.mxu0 0.0
    %3616 = vmatprep.mubr.f32.mxu0 0.0
    %3617 = vmatmul.mubr.f32.gmra.mxu0 %v3547
    %v3618 = vpop.f32.mrf.mxu0
    %v3619 = vadd.f32 0.0, %v3618
    %v3620 = vpop.f32.mrf.mxu0
    %3621 = vmatprep.mubr.f32.mxu0 0.0
    %3622 = vmatmul.mubr.f32.gmra.mxu0 %v3550
    %v3623 = vpop.f32.mrf.mxu0
    %v3624 = vadd.f32 0.0, %v3623
    %v3625 = vpop.f32.mrf.mxu0
    %3626 = vdwg.mxu0
    %v3628 = vsel %vm267, %v3012, 0
    %v3631 = vsel %vm267, %v3017, 0
    %3633 = vmatprep.subr.mxu0 0.0
    %3634 = vmatpush1.msra.mxu0 0.0
    %3635 = vmatprep.subr.mxu0 0.0
    %3636 = vmatpush1.msra.mxu0 0.0
    %3637 = vmatprep.subr.mxu0 0.0
    %3638 = vmatpush1.msra.mxu0 0.0
    %3639 = vmatprep.subr.mxu0 0.0
    %3640 = vmatpush1.msra.mxu0 0.0
    %3641 = vmatprep.subr.mxu0 0.0
    %3642 = vmatpush1.msra.mxu0 0.0
    %3643 = vmatprep.subr.mxu0 0.0
    %3644 = vmatpush1.msra.mxu0 0.0
    %3645 = vmatprep.subr.mxu0 0.0
    %3646 = vmatpush1.msra.mxu0 0.0
    %3647 = vmatprep.subr.mxu0 0.0
    %3648 = vmatpush1.msra.mxu0 0.0
    %3649 = vmatprep.subr.mxu0 0.0
    %3650 = vmatpush1.msra.mxu0 0.0
    %3651 = vmatprep.subr.mxu0 0.0
    %3652 = vmatpush1.msra.mxu0 0.0
    %3653 = vmatprep.subr.mxu0 0.0
    %3654 = vmatpush1.msra.mxu0 0.0
    %3655 = vmatprep.subr.mxu0 0.0
    %3656 = vmatpush1.msra.mxu0 0.0
    %3657 = vmatprep.subr.mxu0 0.0
    %3658 = vmatpush1.msra.mxu0 0.0
    %3659 = vmatprep.subr.mxu0 0.0
    %3660 = vmatpush1.msra.mxu0 0.0
    %3661 = vmatprep.subr.mxu0 0.0
    %3662 = vmatpush1.msra.mxu0 %v3375
    %3663 = vmatprep.subr.mxu0 0.0
    %3664 = vmatpush1.msra.mxu0 %v3374
    %3665 = vmatprep.subr.mxu0 0.0
    %3666 = vmatpush2.msra.mxu0 0.0
    %3667 = vmatprep.subr.mxu0 0.0
    %3668 = vmatpush2.msra.mxu0 0.0
    %3669 = vmatprep.subr.mxu0 0.0
    %3670 = vmatpush2.msra.mxu0 0.0
    %3671 = vmatprep.subr.mxu0 0.0
    %3672 = vmatpush2.msra.mxu0 0.0
    %3673 = vmatprep.subr.mxu0 0.0
    %3674 = vmatpush2.msra.mxu0 0.0
    %3675 = vmatprep.subr.mxu0 0.0
    %3676 = vmatpush2.msra.mxu0 0.0
    %3677 = vmatprep.subr.mxu0 0.0
    %3678 = vmatpush2.msra.mxu0 0.0
    %3679 = vmatprep.subr.mxu0 0.0
    %3680 = vmatpush2.msra.mxu0 0.0
    %3681 = vmatprep.subr.mxu0 0.0
    %3682 = vmatpush2.msra.mxu0 0.0
    %3683 = vmatprep.subr.mxu0 0.0
    %3684 = vmatpush2.msra.mxu0 0.0
    %3685 = vmatprep.subr.mxu0 0.0
    %3686 = vmatpush2.msra.mxu0 0.0
    %3687 = vmatprep.subr.mxu0 0.0
    %3688 = vmatpush2.msra.mxu0 0.0
    %3689 = vmatprep.subr.mxu0 0.0
    %3690 = vmatpush2.msra.mxu0 0.0
    %3691 = vmatprep.subr.mxu0 0.0
    %3692 = vmatpush2.msra.mxu0 0.0
    %3693 = vmatprep.subr.mxu0 0.0
    %3694 = vmatpush2.msra.mxu0 0.0
    %3695 = vmatprep.subr.mxu0 0.0
    %3696 = vmatpush2.msra.mxu0 0.0
    %3697 = vmatprep.mubr.f32.mxu0 0.0
    %3698 = vmatmul.mubr.f32.gmra.mxu0 %v3628
    %v3699 = vpop.f32.mrf.mxu0
    %v3700 = vadd.f32 0.0, %v3699
    %v3701 = vpop.f32.mrf.mxu0
    %3702 = vmatprep.mubr.f32.mxu0 0.0
    %3703 = vmatmul.mubr.f32.gmra.mxu0 %v3631
    %v3704 = vpop.f32.mrf.mxu0
    %v3705 = vadd.f32 0.0, %v3704
    %v3706 = vpop.f32.mrf.mxu0
    %3707 = vdwg.mxu0
    %v3709 = vsel %vm267, %v3099, 0
    %v3712 = vsel %vm267, %v3104, 0
    %3714 = vmatprep.subr.mxu0 0.0
    %3715 = vmatpush1.msra.mxu0 0.0
    %3716 = vmatprep.subr.mxu0 0.0
    %3717 = vmatpush1.msra.mxu0 0.0
    %3718 = vmatprep.subr.mxu0 0.0
    %3719 = vmatpush1.msra.mxu0 0.0
    %3720 = vmatprep.subr.mxu0 0.0
    %3721 = vmatpush1.msra.mxu0 0.0
    %3722 = vmatprep.subr.mxu0 0.0
    %3723 = vmatpush1.msra.mxu0 0.0
    %3724 = vmatprep.subr.mxu0 0.0
    %3725 = vmatpush1.msra.mxu0 0.0
    %3726 = vmatprep.subr.mxu0 0.0
    %3727 = vmatpush1.msra.mxu0 0.0
    %3728 = vmatprep.subr.mxu0 0.0
    %3729 = vmatpush1.msra.mxu0 0.0
    %3730 = vmatprep.subr.mxu0 0.0
    %3731 = vmatpush1.msra.mxu0 0.0
    %3732 = vmatprep.subr.mxu0 0.0
    %3733 = vmatpush1.msra.mxu0 0.0
    %3734 = vmatprep.subr.mxu0 0.0
    %3735 = vmatpush1.msra.mxu0 0.0
    %3736 = vmatprep.subr.mxu0 0.0
    %3737 = vmatpush1.msra.mxu0 0.0
    %3738 = vmatprep.subr.mxu0 0.0
    %3739 = vmatpush1.msra.mxu0 0.0
    %3740 = vmatprep.subr.mxu0 0.0
    %3741 = vmatpush1.msra.mxu0 0.0
    %3742 = vmatprep.subr.mxu0 0.0
    %3743 = vmatpush1.msra.mxu0 %v3377
    %3744 = vmatprep.subr.mxu0 0.0
    %3745 = vmatpush1.msra.mxu0 %v3376
    %3746 = vmatprep.subr.mxu0 0.0
    %3747 = vmatpush2.msra.mxu0 0.0
    %3748 = vmatprep.subr.mxu0 0.0
    %3749 = vmatpush2.msra.mxu0 0.0
    %3750 = vmatprep.subr.mxu0 0.0
    %3751 = vmatpush2.msra.mxu0 0.0
    %3752 = vmatprep.subr.mxu0 0.0
    %3753 = vmatpush2.msra.mxu0 0.0
    %3754 = vmatprep.subr.mxu0 0.0
    %3755 = vmatpush2.msra.mxu0 0.0
    %3756 = vmatprep.subr.mxu0 0.0
    %3757 = vmatpush2.msra.mxu0 0.0
    %3758 = vmatprep.subr.mxu0 0.0
    %3759 = vmatpush2.msra.mxu0 0.0
    %3760 = vmatprep.subr.mxu0 0.0
    %3761 = vmatpush2.msra.mxu0 0.0
    %3762 = vmatprep.subr.mxu0 0.0
    %3763 = vmatpush2.msra.mxu0 0.0
    %3764 = vmatprep.subr.mxu0 0.0
    %3765 = vmatpush2.msra.mxu0 0.0
    %3766 = vmatprep.subr.mxu0 0.0
    %3767 = vmatpush2.msra.mxu0 0.0
    %3768 = vmatprep.subr.mxu0 0.0
    %3769 = vmatpush2.msra.mxu0 0.0
    %3770 = vmatprep.subr.mxu0 0.0
    %3771 = vmatpush2.msra.mxu0 0.0
    %3772 = vmatprep.subr.mxu0 0.0
    %3773 = vmatpush2.msra.mxu0 0.0
    %3774 = vmatprep.subr.mxu0 0.0
    %3775 = vmatpush2.msra.mxu0 0.0
    %3776 = vmatprep.subr.mxu0 0.0
    %3777 = vmatpush2.msra.mxu0 0.0
    %3778 = vmatprep.mubr.f32.mxu0 0.0
    %3779 = vmatmul.mubr.f32.gmra.mxu0 %v3709
    %v3780 = vpop.f32.mrf.mxu0
    %v3781 = vadd.f32 0.0, %v3780
    %v3782 = vpop.f32.mrf.mxu0
    %3783 = vmatprep.mubr.f32.mxu0 0.0
    %3784 = vmatmul.mubr.f32.gmra.mxu0 %v3712
    %v3785 = vpop.f32.mrf.mxu0
    %v3786 = vadd.f32 0.0, %v3785
    %v3787 = vpop.f32.mrf.mxu0
    %3788 = vdwg.mxu0
    %v3790 = vsel %vm267, %v3186, 0
    %v3793 = vsel %vm267, %v3191, 0
    %3795 = vmatprep.subr.mxu0 0.0
    %3796 = vmatpush1.msra.mxu0 0.0
    %3797 = vmatprep.subr.mxu0 0.0
    %3798 = vmatpush1.msra.mxu0 0.0
    %3799 = vmatprep.subr.mxu0 0.0
    %3800 = vmatpush1.msra.mxu0 0.0
    %3801 = vmatprep.subr.mxu0 0.0
    %3802 = vmatpush1.msra.mxu0 0.0
    %3803 = vmatprep.subr.mxu0 0.0
    %3804 = vmatpush1.msra.mxu0 0.0
    %3805 = vmatprep.subr.mxu0 0.0
    %3806 = vmatpush1.msra.mxu0 0.0
    %3807 = vmatprep.subr.mxu0 0.0
    %3808 = vmatpush1.msra.mxu0 0.0
    %3809 = vmatprep.subr.mxu0 0.0
    %3810 = vmatpush1.msra.mxu0 0.0
    %3811 = vmatprep.subr.mxu0 0.0
    %3812 = vmatpush1.msra.mxu0 0.0
    %3813 = vmatprep.subr.mxu0 0.0
    %3814 = vmatpush1.msra.mxu0 0.0
    %3815 = vmatprep.subr.mxu0 0.0
    %3816 = vmatpush1.msra.mxu0 0.0
    %3817 = vmatprep.subr.mxu0 0.0
    %3818 = vmatpush1.msra.mxu0 0.0
    %3819 = vmatprep.subr.mxu0 0.0
    %3820 = vmatpush1.msra.mxu0 0.0
    %3821 = vmatprep.subr.mxu0 0.0
    %3822 = vmatpush1.msra.mxu0 0.0
    %3823 = vmatprep.subr.mxu0 0.0
    %3824 = vmatpush1.msra.mxu0 %v3379
    %3825 = vmatprep.subr.mxu0 0.0
    %3826 = vmatpush1.msra.mxu0 %v3378
    %3827 = vmatprep.subr.mxu0 0.0
    %3828 = vmatpush2.msra.mxu0 0.0
    %3829 = vmatprep.subr.mxu0 0.0
    %3830 = vmatpush2.msra.mxu0 0.0
    %3831 = vmatprep.subr.mxu0 0.0
    %3832 = vmatpush2.msra.mxu0 0.0
    %3833 = vmatprep.subr.mxu0 0.0
    %3834 = vmatpush2.msra.mxu0 0.0
    %3835 = vmatprep.subr.mxu0 0.0
    %3836 = vmatpush2.msra.mxu0 0.0
    %3837 = vmatprep.subr.mxu0 0.0
    %3838 = vmatpush2.msra.mxu0 0.0
    %3839 = vmatprep.subr.mxu0 0.0
    %3840 = vmatpush2.msra.mxu0 0.0
    %3841 = vmatprep.subr.mxu0 0.0
    %3842 = vmatpush2.msra.mxu0 0.0
    %3843 = vmatprep.subr.mxu0 0.0
    %3844 = vmatpush2.msra.mxu0 0.0
    %3845 = vmatprep.subr.mxu0 0.0
    %3846 = vmatpush2.msra.mxu0 0.0
    %3847 = vmatprep.subr.mxu0 0.0
    %3848 = vmatpush2.msra.mxu0 0.0
    %3849 = vmatprep.subr.mxu0 0.0
    %3850 = vmatpush2.msra.mxu0 0.0
    %3851 = vmatprep.subr.mxu0 0.0
    %3852 = vmatpush2.msra.mxu0 0.0
    %3853 = vmatprep.subr.mxu0 0.0
    %3854 = vmatpush2.msra.mxu0 0.0
    %3855 = vmatprep.subr.mxu0 0.0
    %3856 = vmatpush2.msra.mxu0 0.0
    %3857 = vmatprep.subr.mxu0 0.0
    %3858 = vmatpush2.msra.mxu0 0.0
    %3859 = vmatprep.mubr.f32.mxu0 0.0
    %3860 = vmatmul.mubr.f32.gmra.mxu0 %v3790
    %v3861 = vpop.f32.mrf.mxu0
    %v3862 = vadd.f32 0.0, %v3861
    %v3863 = vpop.f32.mrf.mxu0
    %3864 = vmatprep.mubr.f32.mxu0 0.0
    %3865 = vmatmul.mubr.f32.gmra.mxu0 %v3793
    %v3866 = vpop.f32.mrf.mxu0
    %v3867 = vadd.f32 0.0, %v3866
    %v3868 = vpop.f32.mrf.mxu0
    %3869 = vdwg.mxu0
    %v3871 = vsel %vm267, %v3273, 0
    %v3874 = vsel %vm267, %v3278, 0
    %3876 = vmatprep.subr.mxu0 0.0
    %3877 = vmatpush1.msra.mxu0 0.0
    %3878 = vmatprep.subr.mxu0 0.0
    %3879 = vmatpush1.msra.mxu0 0.0
    %3880 = vmatprep.subr.mxu0 0.0
    %3881 = vmatpush1.msra.mxu0 0.0
    %3882 = vmatprep.subr.mxu0 0.0
    %3883 = vmatpush1.msra.mxu0 0.0
    %3884 = vmatprep.subr.mxu0 0.0
    %3885 = vmatpush1.msra.mxu0 0.0
    %3886 = vmatprep.subr.mxu0 0.0
    %3887 = vmatpush1.msra.mxu0 0.0
    %3888 = vmatprep.subr.mxu0 0.0
    %3889 = vmatpush1.msra.mxu0 0.0
    %3890 = vmatprep.subr.mxu0 0.0
    %3891 = vmatpush1.msra.mxu0 0.0
    %3892 = vmatprep.subr.mxu0 0.0
    %3893 = vmatpush1.msra.mxu0 0.0
    %3894 = vmatprep.subr.mxu0 0.0
    %3895 = vmatpush1.msra.mxu0 0.0
    %3896 = vmatprep.subr.mxu0 0.0
    %3897 = vmatpush1.msra.mxu0 0.0
    %3898 = vmatprep.subr.mxu0 0.0
    %3899 = vmatpush1.msra.mxu0 0.0
    %3900 = vmatprep.subr.mxu0 0.0
    %3901 = vmatpush1.msra.mxu0 0.0
    %3902 = vmatprep.subr.mxu0 0.0
    %3903 = vmatpush1.msra.mxu0 0.0
    %3904 = vmatprep.subr.mxu0 0.0
    %3905 = vmatpush1.msra.mxu0 %v3381
    %3906 = vmatprep.subr.mxu0 0.0
    %3907 = vmatpush1.msra.mxu0 %v3380
    %3908 = vmatprep.subr.mxu0 0.0
    %3909 = vmatpush2.msra.mxu0 0.0
    %3910 = vmatprep.subr.mxu0 0.0
    %3911 = vmatpush2.msra.mxu0 0.0
    %3912 = vmatprep.subr.mxu0 0.0
    %3913 = vmatpush2.msra.mxu0 0.0
    %3914 = vmatprep.subr.mxu0 0.0
    %3915 = vmatpush2.msra.mxu0 0.0
    %3916 = vmatprep.subr.mxu0 0.0
    %3917 = vmatpush2.msra.mxu0 0.0
    %3918 = vmatprep.subr.mxu0 0.0
    %3919 = vmatpush2.msra.mxu0 0.0
    %3920 = vmatprep.subr.mxu0 0.0
    %3921 = vmatpush2.msra.mxu0 0.0
    %3922 = vmatprep.subr.mxu0 0.0
    %3923 = vmatpush2.msra.mxu0 0.0
    %3924 = vmatprep.subr.mxu0 0.0
    %3925 = vmatpush2.msra.mxu0 0.0
    %3926 = vmatprep.subr.mxu0 0.0
    %3927 = vmatpush2.msra.mxu0 0.0
    %3928 = vmatprep.subr.mxu0 0.0
    %3929 = vmatpush2.msra.mxu0 0.0
    %3930 = vmatprep.subr.mxu0 0.0
    %3931 = vmatpush2.msra.mxu0 0.0
    %3932 = vmatprep.subr.mxu0 0.0
    %3933 = vmatpush2.msra.mxu0 0.0
    %3934 = vmatprep.subr.mxu0 0.0
    %3935 = vmatpush2.msra.mxu0 0.0
    %3936 = vmatprep.subr.mxu0 0.0
    %3937 = vmatpush2.msra.mxu0 0.0
    %3938 = vmatprep.subr.mxu0 0.0
    %3939 = vmatpush2.msra.mxu0 0.0
    %3940 = vmatprep.mubr.f32.mxu0 0.0
    %3941 = vmatmul.mubr.f32.gmra.mxu0 %v3871
    %v3942 = vpop.f32.mrf.mxu0
    %v3943 = vadd.f32 0.0, %v3942
    %v3944 = vpop.f32.mrf.mxu0
    %3945 = vmatprep.mubr.f32.mxu0 0.0
    %3946 = vmatmul.mubr.f32.gmra.mxu0 %v3874
    %v3947 = vpop.f32.mrf.mxu0
    %v3948 = vadd.f32 0.0, %v3947
    %v3949 = vpop.f32.mrf.mxu0
    %3950 = vdwg.mxu0
    %v3952 = vsel %vm267, %v3360, 0
    %v3955 = vsel %vm267, %v3365, 0
    %3957 = vmatprep.subr.mxu0 0.0
    %3958 = vmatpush1.msra.mxu0 0.0
    %3959 = vmatprep.subr.mxu0 0.0
    %3960 = vmatpush1.msra.mxu0 0.0
    %3961 = vmatprep.subr.mxu0 0.0
    %3962 = vmatpush1.msra.mxu0 0.0
    %3963 = vmatprep.subr.mxu0 0.0
    %3964 = vmatpush1.msra.mxu0 0.0
    %3965 = vmatprep.subr.mxu0 0.0
    %3966 = vmatpush1.msra.mxu0 0.0
    %3967 = vmatprep.subr.mxu0 0.0
    %3968 = vmatpush1.msra.mxu0 0.0
    %3969 = vmatprep.subr.mxu0 0.0
    %3970 = vmatpush1.msra.mxu0 0.0
    %3971 = vmatprep.subr.mxu0 0.0
    %3972 = vmatpush1.msra.mxu0 0.0
    %3973 = vmatprep.subr.mxu0 0.0
    %3974 = vmatpush1.msra.mxu0 0.0
    %3975 = vmatprep.subr.mxu0 0.0
    %3976 = vmatpush1.msra.mxu0 0.0
    %3977 = vmatprep.subr.mxu0 0.0
    %3978 = vmatpush1.msra.mxu0 0.0
    %3979 = vmatprep.subr.mxu0 0.0
    %3980 = vmatpush1.msra.mxu0 0.0
    %3981 = vmatprep.subr.mxu0 0.0
    %3982 = vmatpush1.msra.mxu0 0.0
    %3983 = vmatprep.subr.mxu0 0.0
    %3984 = vmatpush1.msra.mxu0 0.0
    %3985 = vmatprep.subr.mxu0 0.0
    %3986 = vmatpush1.msra.mxu0 %v3383
    %3987 = vmatprep.subr.mxu0 0.0
    %3988 = vmatpush1.msra.mxu0 %v3382
    %3989 = vmatprep.subr.mxu0 0.0
    %3990 = vmatpush2.msra.mxu0 0.0
    %3991 = vmatprep.subr.mxu0 0.0
    %3992 = vmatpush2.msra.mxu0 0.0
    %3993 = vmatprep.subr.mxu0 0.0
    %3994 = vmatpush2.msra.mxu0 0.0
    %3995 = vmatprep.subr.mxu0 0.0
    %3996 = vmatpush2.msra.mxu0 0.0
    %3997 = vmatprep.subr.mxu0 0.0
    %3998 = vmatpush2.msra.mxu0 0.0
    %3999 = vmatprep.subr.mxu0 0.0
    %4000 = vmatpush2.msra.mxu0 0.0
    %4001 = vmatprep.subr.mxu0 0.0
    %4002 = vmatpush2.msra.mxu0 0.0
    %4003 = vmatprep.subr.mxu0 0.0
    %4004 = vmatpush2.msra.mxu0 0.0
    %4005 = vmatprep.subr.mxu0 0.0
    %4006 = vmatpush2.msra.mxu0 0.0
    %4007 = vmatprep.subr.mxu0 0.0
    %4008 = vmatpush2.msra.mxu0 0.0
    %4009 = vmatprep.subr.mxu0 0.0
    %4010 = vmatpush2.msra.mxu0 0.0
    %4011 = vmatprep.subr.mxu0 0.0
    %4012 = vmatpush2.msra.mxu0 0.0
    %4013 = vmatprep.subr.mxu0 0.0
    %4014 = vmatpush2.msra.mxu0 0.0
    %4015 = vmatprep.subr.mxu0 0.0
    %4016 = vmatpush2.msra.mxu0 0.0
    %4017 = vmatprep.subr.mxu0 0.0
    %4018 = vmatpush2.msra.mxu0 0.0
    %4019 = vmatprep.subr.mxu0 0.0
    %4020 = vmatpush2.msra.mxu0 0.0
    %4021 = vmatprep.mubr.f32.mxu0 0.0
    %4022 = vmatmul.mubr.f32.gmra.mxu0 %v3952
    %v4023 = vpop.f32.mrf.mxu0
    %v4024 = vadd.f32 0.0, %v4023
    %v4025 = vpop.f32.mrf.mxu0
    %4026 = vmatprep.mubr.f32.mxu0 0.0
    %4027 = vmatmul.mubr.f32.gmra.mxu0 %v3955
    %v4028 = vpop.f32.mrf.mxu0
    %v4029 = vadd.f32 0.0, %v4028
    %v4030 = vpop.f32.mrf.mxu0
    %4031 = vdwg.mxu0
    %v4032 = vsel %vm267, %v3457, 0.0
    %v4033 = vsel %vm267, %v3538, 0.0
    %v4034 = vadd.f32 %v4032, %v4033
    %v4035 = vsel %vm267, %v3619, 0.0
    %v4036 = vadd.f32 %v4034, %v4035
    %v4037 = vsel %vm267, %v3700, 0.0
    %v4038 = vadd.f32 %v4036, %v4037
    %v4039 = vsel %vm267, %v3781, 0.0
    %v4040 = vadd.f32 %v4038, %v4039
    %v4041 = vsel %vm267, %v3862, 0.0
    %v4042 = vadd.f32 %v4040, %v4041
    %v4043 = vsel %vm267, %v3943, 0.0
    %v4044 = vadd.f32 %v4042, %v4043
    %v4045 = vsel %vm267, %v4024, 0.0
    %v4046 = vadd.f32 %v4044, %v4045
    %v4047 = vsel %vm267, %v3462, 0.0
    %v4048 = vsel %vm267, %v3543, 0.0
    %v4049 = vadd.f32 %v4047, %v4048
    %v4050 = vsel %vm267, %v3624, 0.0
    %v4051 = vadd.f32 %v4049, %v4050
    %v4052 = vsel %vm267, %v3705, 0.0
    %v4053 = vadd.f32 %v4051, %v4052
    %v4054 = vsel %vm267, %v3786, 0.0
    %v4055 = vadd.f32 %v4053, %v4054
    %v4056 = vsel %vm267, %v3867, 0.0
    %v4057 = vadd.f32 %v4055, %v4056
    %v4058 = vsel %vm267, %v3948, 0.0
    %v4059 = vadd.f32 %v4057, %v4058
    %v4060 = vsel %vm267, %v4029, 0.0
    %v4061 = vadd.f32 %v4059, %v4060
    %v4062 = vld [vmem:[%s14] sm:$0x1]
    %v4064 = vlaneseq
    %v4065 = vshrl.u32 %v4064, 7
    %v4066 = vsub.s32 0, %v4065
    %v4067 = vrot.slane %v4062, %v4066
    %v4069 = vadd.f32 %v4046, %v4067
    %v4070 = vadd.f32 %v4061, %v4067
    %v4071 = vadd.f32 %v4069, %v505
    %v4072 = vadd.f32 %v4070, %v510
    %4073 = vst.msk [vmem:[%s19] sm:$0xff] %vm267, %v505
    %4074 = vst.msk [vmem:[%s19 + $0x8] sm:$0xff] %vm267, %v510
    %4075 = vst.msk [vmem:[%s19 + $0x10] sm:$0xff] %vm267, %v843
    %4076 = vst.msk [vmem:[%s19 + $0x18] sm:$0xff] %vm267, %v848
    %4077 = vst.msk [vmem:[%s19 + $0x20] sm:$0xff] %vm267, %v4071
    %4078 = vst.msk [vmem:[%s19 + $0x28] sm:$0xff] %vm267, %v4072
    %v4079 = vld [vmem:[%s19] sm:$0xff]
    %v4080 = vld [vmem:[%s19 + $0x8] sm:$0xff]
    %v4081 = vld [vmem:[%s19 + $0x10] sm:$0xff]
    %v4082 = vld [vmem:[%s19 + $0x18] sm:$0xff]
    %v4083 = vld [vmem:[%s19 + $0x20] sm:$0xff]
    %v4084 = vld [vmem:[%s19 + $0x28] sm:$0xff]
    %v4085 = vld [vmem:[#allocation13] sm:$0xff]
    %v4086 = vld [vmem:[#allocation13 + $0x8] sm:$0xff]
    %v4087 = vld [vmem:[%s16] sm:$0x1]
    %v4089 = vlaneseq
    %v4090 = vshrl.u32 %v4089, 7
    %v4091 = vsub.s32 0, %v4090
    %v4092 = vrot.slane %v4087, %v4091
    %v4095 = vsel %vm267, %v4079, 0
    %v4098 = vsel %vm267, %v4080, 0
    %v4101 = vsel %vm267, %v4081, 0
    %v4104 = vsel %vm267, %v4082, 0
    %v4107 = vsel %vm267, %v4083, 0
    %v4110 = vsel %vm267, %v4084, 0
    %4112 = vmatprep.subr.mxu0 0.0
    %4113 = vmatpush1.msra.mxu0 0.0
    %4114 = vmatprep.subr.mxu0 0.0
    %4115 = vmatpush1.msra.mxu0 0.0
    %4116 = vmatprep.subr.mxu0 0.0
    %4117 = vmatpush1.msra.mxu0 0.0
    %4118 = vmatprep.subr.mxu0 0.0
    %4119 = vmatpush1.msra.mxu0 0.0
    %4120 = vmatprep.subr.mxu0 0.0
    %4121 = vmatpush1.msra.mxu0 0.0
    %4122 = vmatprep.subr.mxu0 0.0
    %4123 = vmatpush1.msra.mxu0 0.0
    %4124 = vmatprep.subr.mxu0 0.0
    %4125 = vmatpush1.msra.mxu0 0.0
    %4126 = vmatprep.subr.mxu0 0.0
    %4127 = vmatpush1.msra.mxu0 0.0
    %4128 = vmatprep.subr.mxu0 0.0
    %4129 = vmatpush1.msra.mxu0 0.0
    %4130 = vmatprep.subr.mxu0 0.0
    %4131 = vmatpush1.msra.mxu0 0.0
    %4132 = vmatprep.subr.mxu0 0.0
    %4133 = vmatpush1.msra.mxu0 0.0
    %4134 = vmatprep.subr.mxu0 0.0
    %4135 = vmatpush1.msra.mxu0 0.0
    %4136 = vmatprep.subr.mxu0 0.0
    %4137 = vmatpush1.msra.mxu0 0.0
    %4138 = vmatprep.subr.mxu0 0.0
    %4139 = vmatpush1.msra.mxu0 0.0
    %4140 = vmatprep.subr.mxu0 0.0
    %4141 = vmatpush1.msra.mxu0 %v4086
    %4142 = vmatprep.subr.mxu0 0.0
    %4143 = vmatpush1.msra.mxu0 %v4085
    %4144 = vmatprep.subr.mxu0 0.0
    %4145 = vmatpush2.msra.mxu0 0.0
    %4146 = vmatprep.subr.mxu0 0.0
    %4147 = vmatpush2.msra.mxu0 0.0
    %4148 = vmatprep.subr.mxu0 0.0
    %4149 = vmatpush2.msra.mxu0 0.0
    %4150 = vmatprep.subr.mxu0 0.0
    %4151 = vmatpush2.msra.mxu0 0.0
    %4152 = vmatprep.subr.mxu0 0.0
    %4153 = vmatpush2.msra.mxu0 0.0
    %4154 = vmatprep.subr.mxu0 0.0
    %4155 = vmatpush2.msra.mxu0 0.0
    %4156 = vmatprep.subr.mxu0 0.0
    %4157 = vmatpush2.msra.mxu0 0.0
    %4158 = vmatprep.subr.mxu0 0.0
    %4159 = vmatpush2.msra.mxu0 0.0
    %4160 = vmatprep.subr.mxu0 0.0
    %4161 = vmatpush2.msra.mxu0 0.0
    %4162 = vmatprep.subr.mxu0 0.0
    %4163 = vmatpush2.msra.mxu0 0.0
    %4164 = vmatprep.subr.mxu0 0.0
    %4165 = vmatpush2.msra.mxu0 0.0
    %4166 = vmatprep.subr.mxu0 0.0
    %4167 = vmatpush2.msra.mxu0 0.0
    %4168 = vmatprep.subr.mxu0 0.0
    %4169 = vmatpush2.msra.mxu0 0.0
    %4170 = vmatprep.subr.mxu0 0.0
    %4171 = vmatpush2.msra.mxu0 0.0
    %4172 = vmatprep.subr.mxu0 0.0
    %4173 = vmatpush2.msra.mxu0 0.0
    %4174 = vmatprep.subr.mxu0 0.0
    %4175 = vmatpush2.msra.mxu0 0.0
    %4176 = vmatprep.mubr.f32.mxu0 0.0
    %4177 = vmatmul.mubr.f32.gmra.mxu0 %v4095
    %v4178 = vpop.f32.mrf.mxu0
    %v4179 = vadd.f32 %v4092, %v4178
    %v4180 = vpop.f32.mrf.mxu0
    %4181 = vmatprep.mubr.f32.mxu0 0.0
    %4182 = vmatmul.mubr.f32.gmra.mxu0 %v4098
    %v4183 = vpop.f32.mrf.mxu0
    %v4184 = vadd.f32 %v4092, %v4183
    %v4185 = vpop.f32.mrf.mxu0
    %4186 = vmatprep.mubr.f32.mxu0 0.0
    %4187 = vmatmul.mubr.f32.gmra.mxu0 %v4101
    %v4188 = vpop.f32.mrf.mxu0
    %v4189 = vadd.f32 %v4092, %v4188
    %v4190 = vpop.f32.mrf.mxu0
    %4191 = vmatprep.mubr.f32.mxu0 0.0
    %4192 = vmatmul.mubr.f32.gmra.mxu0 %v4104
    %v4193 = vpop.f32.mrf.mxu0
    %v4194 = vadd.f32 %v4092, %v4193
    %v4195 = vpop.f32.mrf.mxu0
    %4196 = vmatprep.mubr.f32.mxu0 0.0
    %4197 = vmatmul.mubr.f32.gmra.mxu0 %v4107
    %v4198 = vpop.f32.mrf.mxu0
    %v4199 = vadd.f32 %v4092, %v4198
    %v4200 = vpop.f32.mrf.mxu0
    %4201 = vmatprep.mubr.f32.mxu0 0.0
    %4202 = vmatmul.mubr.f32.gmra.mxu0 %v4110
    %v4203 = vpop.f32.mrf.mxu0
    %v4204 = vadd.f32 %v4092, %v4203
    %v4205 = vpop.f32.mrf.mxu0
    %4206 = vdwg.mxu0
    %v4207 = vmax.f32 %v4179, 0.0
    %v4208 = vmax.f32 %v4184, 0.0
    %v4209 = vmax.f32 %v4189, 0.0
    %v4210 = vmax.f32 %v4194, 0.0
    %v4211 = vmax.f32 %v4199, 0.0
    %v4212 = vmax.f32 %v4204, 0.0
    %v4213 = vld [vmem:[%s17] sm:$0xff]
    %v4214 = vld [vmem:[%s17 + $0x8] sm:$0xff]
    %v4215 = vld [vmem:[%s17 + $0x10] sm:$0xff]
    %v4216 = vld [vmem:[%s17 + $0x18] sm:$0xff]
    %v4217 = vld [vmem:[%s18] sm:$0x1]
    %v4219 = vlaneseq
    %v4220 = vshrl.u32 %v4219, 7
    %v4221 = vsub.s32 0, %v4220
    %v4222 = vrot.slane %v4217, %v4221
    %v4225 = vsel %vm179, %v4207, 0
    %v4228 = vsel %vm179, %v4208, 0
    %v4231 = vsel %vm179, %v4209, 0
    %v4234 = vsel %vm179, %v4210, 0
    %v4237 = vsel %vm179, %v4211, 0
    %v4240 = vsel %vm179, %v4212, 0
    %4242 = vmatprep.subr.mxu0 0.0
    %4243 = vmatpush1.msra.mxu0 0.0
    %4244 = vmatprep.subr.mxu0 0.0
    %4245 = vmatpush1.msra.mxu0 0.0
    %4246 = vmatprep.subr.mxu0 0.0
    %4247 = vmatpush1.msra.mxu0 0.0
    %4248 = vmatprep.subr.mxu0 0.0
    %4249 = vmatpush1.msra.mxu0 0.0
    %4250 = vmatprep.subr.mxu0 0.0
    %4251 = vmatpush1.msra.mxu0 0.0
    %4252 = vmatprep.subr.mxu0 0.0
    %4253 = vmatpush1.msra.mxu0 0.0
    %4254 = vmatprep.subr.mxu0 0.0
    %4255 = vmatpush1.msra.mxu0 0.0
    %4256 = vmatprep.subr.mxu0 0.0
    %4257 = vmatpush1.msra.mxu0 0.0
    %4258 = vmatprep.subr.mxu0 0.0
    %4259 = vmatpush1.msra.mxu0 0.0
    %4260 = vmatprep.subr.mxu0 0.0
    %4261 = vmatpush1.msra.mxu0 0.0
    %4262 = vmatprep.subr.mxu0 0.0
    %4263 = vmatpush1.msra.mxu0 0.0
    %4264 = vmatprep.subr.mxu0 0.0
    %4265 = vmatpush1.msra.mxu0 0.0
    %4266 = vmatprep.subr.mxu0 0.0
    %4267 = vmatpush1.msra.mxu0 %v4216
    %4268 = vmatprep.subr.mxu0 0.0
    %4269 = vmatpush1.msra.mxu0 %v4215
    %4270 = vmatprep.subr.mxu0 0.0
    %4271 = vmatpush1.msra.mxu0 %v4214
    %4272 = vmatprep.subr.mxu0 0.0
    %4273 = vmatpush1.msra.mxu0 %v4213
    %4274 = vmatprep.subr.mxu0 0.0
    %4275 = vmatpush2.msra.mxu0 0.0
    %4276 = vmatprep.subr.mxu0 0.0
    %4277 = vmatpush2.msra.mxu0 0.0
    %4278 = vmatprep.subr.mxu0 0.0
    %4279 = vmatpush2.msra.mxu0 0.0
    %4280 = vmatprep.subr.mxu0 0.0
    %4281 = vmatpush2.msra.mxu0 0.0
    %4282 = vmatprep.subr.mxu0 0.0
    %4283 = vmatpush2.msra.mxu0 0.0
    %4284 = vmatprep.subr.mxu0 0.0
    %4285 = vmatpush2.msra.mxu0 0.0
    %4286 = vmatprep.subr.mxu0 0.0
    %4287 = vmatpush2.msra.mxu0 0.0
    %4288 = vmatprep.subr.mxu0 0.0
    %4289 = vmatpush2.msra.mxu0 0.0
    %4290 = vmatprep.subr.mxu0 0.0
    %4291 = vmatpush2.msra.mxu0 0.0
    %4292 = vmatprep.subr.mxu0 0.0
    %4293 = vmatpush2.msra.mxu0 0.0
    %4294 = vmatprep.subr.mxu0 0.0
    %4295 = vmatpush2.msra.mxu0 0.0
    %4296 = vmatprep.subr.mxu0 0.0
    %4297 = vmatpush2.msra.mxu0 0.0
    %4298 = vmatprep.subr.mxu0 0.0
    %4299 = vmatpush2.msra.mxu0 0.0
    %4300 = vmatprep.subr.mxu0 0.0
    %4301 = vmatpush2.msra.mxu0 0.0
    %4302 = vmatprep.subr.mxu0 0.0
    %4303 = vmatpush2.msra.mxu0 0.0
    %4304 = vmatprep.subr.mxu0 0.0
    %4305 = vmatpush2.msra.mxu0 0.0
    %4306 = vmatprep.mubr.f32.mxu0 0.0
    %4307 = vmatmul.mubr.f32.gmra.mxu0 %v4225
    %v4308 = vpop.f32.mrf.mxu0
    %v4309 = vadd.f32 %v4222, %v4308
    %v4310 = vpop.f32.mrf.mxu0
    %4311 = vmatprep.mubr.f32.mxu0 0.0
    %4312 = vmatmul.mubr.f32.gmra.mxu0 %v4228
    %v4313 = vpop.f32.mrf.mxu0
    %v4314 = vadd.f32 %v4222, %v4313
    %v4315 = vpop.f32.mrf.mxu0
    %4316 = vmatprep.mubr.f32.mxu0 0.0
    %4317 = vmatmul.mubr.f32.gmra.mxu0 %v4231
    %v4318 = vpop.f32.mrf.mxu0
    %v4319 = vadd.f32 %v4222, %v4318
    %v4320 = vpop.f32.mrf.mxu0
    %4321 = vmatprep.mubr.f32.mxu0 0.0
    %4322 = vmatmul.mubr.f32.gmra.mxu0 %v4234
    %v4323 = vpop.f32.mrf.mxu0
    %v4324 = vadd.f32 %v4222, %v4323
    %v4325 = vpop.f32.mrf.mxu0
    %4326 = vmatprep.mubr.f32.mxu0 0.0
    %4327 = vmatmul.mubr.f32.gmra.mxu0 %v4237
    %v4328 = vpop.f32.mrf.mxu0
    %v4329 = vadd.f32 %v4222, %v4328
    %v4330 = vpop.f32.mrf.mxu0
    %4331 = vmatprep.mubr.f32.mxu0 0.0
    %4332 = vmatmul.mubr.f32.gmra.mxu0 %v4240
    %v4333 = vpop.f32.mrf.mxu0
    %v4334 = vadd.f32 %v4222, %v4333
    %v4335 = vpop.f32.mrf.mxu0
    %4336 = vdwg.mxu0
    %v4337 = vmax.f32 %v4309, 0.0
    %v4338 = vmax.f32 %v4314, 0.0
    %v4339 = vmax.f32 %v4319, 0.0
    %v4340 = vmax.f32 %v4324, 0.0
    %v4341 = vmax.f32 %v4329, 0.0
    %v4342 = vmax.f32 %v4334, 0.0
    %4343 = vst.msk [vmem:[%s20] sm:$0xff] %vm179, %v4337
    %4344 = vst.msk [vmem:[%s20 + $0x8] sm:$0xff] %vm179, %v4338
    %4345 = vst.msk [vmem:[%s20 + $0x10] sm:$0xff] %vm179, %v4339
    %4346 = vst.msk [vmem:[%s20 + $0x18] sm:$0xff] %vm179, %v4340
    %4347 = vst.msk [vmem:[%s20 + $0x20] sm:$0xff] %vm179, %v4341
    %4348 = vst.msk [vmem:[%s20 + $0x28] sm:$0xff] %vm179, %v4342
    // Predicated region
    $region110: #{tpu_custom_call.1} parent=1 // pred_check
      _
    $region111: #{tpu_custom_call.1} parent=1 // pred_check_branch
      %4350 = sbr.rel (0) target = $region113
    $region112: #{tpu_custom_call.1} parent=1 // pred_region
      _
    $region113: #{tpu_custom_call.1} parent=1 // pred_fallthru
      _
    // Predicated region
    $region114: #{tpu_custom_call.1} parent=1 // pred_check
      _
    $region115: #{tpu_custom_call.1} parent=1 // pred_check_branch
      %4352 = sbr.rel (0) target = $region117
    $region116: #{tpu_custom_call.1} parent=1 // pred_region
      _
    $region117: #{tpu_custom_call.1} parent=1 // pred_fallthru
      _
    // Predicated region
    $region118: #{tpu_custom_call.1} parent=1 // pred_check
      _
    $region119: #{tpu_custom_call.1} parent=1 // pred_check_branch
      %4354 = sbr.rel (0) target = $region121
    $region120: #{tpu_custom_call.1} parent=1 // pred_region
      _
    $region121: #{tpu_custom_call.1} parent=1 // pred_fallthru
      _
    // Predicated region
    $region122: #{tpu_custom_call.1} parent=1 // pred_check
      _
    $region123: #{tpu_custom_call.1} parent=1 // pred_check_branch
      %4356 = sbr.rel (0) target = $region125
    $region124: #{tpu_custom_call.1} parent=1 // pred_region
      _
    $region125: #{tpu_custom_call.1} parent=1 // pred_fallthru
      _
    %4357 = vsyncpa [#allocation3], 1
    %4358 = vsyncpa [#allocation5], 1
    %4359 = vsyncpa [#allocation8], 1
    %4360 = vsyncpa [#allocation11], 1
    %4361 = vsyncpa [#allocation14], 1

</llo_original>
